<compile_context>
chip_gen: v5e
topology: v5e:2x2
jax: 0.10.0
libtpu: 0.0.40
codegen_flags: <defaults>
</compile_context>

<pallas_src>
import jax
import jax.numpy as jnp
from jax import lax
from jax.experimental import pallas as pl
from jax.experimental.pallas import tpu as pltpu

H = 10               # hidden_features of the PyTorch module
LANES = 128          # pixels per lane row of the slab
CH = 16              # rows per inner chunk -> 2 f32 vregs per hidden channel
MAX_ROW_TILE = 2048  # max rows (of 128 pixels) per grid step (256K px, ~1 MiB)

# Flat layout of the packed parameter vector (all f32, lives in SMEM).
_W0, _B0 = 0, 10                      # Linear(1 -> 10)
_W1, _B1 = 20, 120                    # Linear(10 -> 10)
_W2, _B2 = 130, 230                   # Linear(10 -> 10)
_W3, _B3 = 240, 340                   # Linear(10 -> 10)
_W4, _B4 = 350, 360                   # Linear(10 -> 1)
N_PARAMS = 361


def _round_up(x, m):
    return (x + m - 1) // m * m


def _elu(x):
    # ELU, alpha=1 (torch.nn.ELU default). Positive branch of the where
    # discards the (possibly inf) exp result, so no clamp is needed.
    return jnp.where(x > 0.0, x, jnp.exp(x) - 1.0)


def mean_transform_kernel(p_ref, x_ref, o_ref):
    # Hoist all 361 scalar parameters out of the row loop (loop-invariant SMEM
    # reads; with CH=16 each scalar use feeds 2 vregs of FMAs, halving the
    # sld/splat pressure per pixel relative to the VALU work).
    w0 = [p_ref[_W0 + j] for j in range(H)]
    b0 = [p_ref[_B0 + j] for j in range(H)]
    w_hid, b_hid = [], []
    for wb, bb in ((_W1, _B1), (_W2, _B2), (_W3, _B3)):
        w_hid.append([[p_ref[wb + j * H + k] for k in range(H)] for j in range(H)])
        b_hid.append([p_ref[bb + k] for k in range(H)])
    w4 = [p_ref[_W4 + j] for j in range(H)]
    b4 = p_ref[_B4]

    n_chunks = x_ref.shape[0] // CH  # static

    def body(c, carry):
        r0 = pl.multiple_of(c * CH, CH)
        x = x_ref[pl.ds(r0, CH), :]                       # (CH, 128) pixels

        # layer 0: Linear(1 -> 10) as scalar-broadcast FMA per channel.
        h = [x * w0[j] + b0[j] for j in range(H)]

        # hidden layers: ELU -> Linear(10, 10) as 100 scalar-operand FMAs.
        for layer in range(3):
            a = [_elu(h[j]) for j in range(H)]
            w = w_hid[layer]
            b = b_hid[layer]
            h_new = []
            for k in range(H):
                acc = a[0] * w[0][k] + b[k]
                for j in range(1, H):
                    acc = acc + a[j] * w[j][k]
                h_new.append(acc)
            h = h_new

        # final layer: ELU -> Linear(10 -> 1).
        a = [_elu(h[j]) for j in range(H)]
        out = a[0] * w4[0] + b4
        for j in range(1, H):
            out = out + a[j] * w4[j]

        o_ref[pl.ds(r0, CH), :] = out
        return carry

    lax.fori_loop(0, n_chunks, body, 0, unroll=False)


def _choose_tiling(rows):
    """Pick (r_tile, rows_padded).

    Forces >= 2 (and an even number of) grid steps whenever there is more than
    one CH-row chunk of real work so v7x shards the parallel row axis across
    both TensorCores; tiles are multiples of CH and capped at MAX_ROW_TILE.
    """
    if rows <= CH:                       # a single chunk of real work
        r_tile = CH
        return r_tile, _round_up(rows, r_tile)
    n_steps = max(2, pl.cdiv(rows, MAX_ROW_TILE))
    if n_steps % 2:                      # even split -> balanced on v7x 2-TC
        n_steps += 1
    r_tile = min(MAX_ROW_TILE, _round_up(pl.cdiv(rows, n_steps), CH))
    return r_tile, _round_up(rows, r_tile)


def init_params(key):
    """Deterministic synthetic init mimicking nn.Linear's U(-1/sqrt(fan_in), ..)."""
    dims = [(1, H), (H, H), (H, H), (H, H), (H, 1)]
    ws, bs = [], []
    for fi, fo in dims:
        key, k1, k2 = jax.random.split(key, 3)
        bound = float(fi) ** -0.5
        ws.append(jax.random.uniform(k1, (fi, fo), jnp.float32, -bound, bound))
        bs.append(jax.random.uniform(k2, (fo,), jnp.float32, -bound, bound))
    return ws, bs


def pack_params(ws, bs):
    """Pack all weights/biases into one flat f32 vector (SMEM layout)."""
    p = jnp.zeros((N_PARAMS,), jnp.float32)
    p = p.at[_W0:_W0 + H].set(ws[0].reshape(-1))          # (1,10)  -> (10,)
    p = p.at[_B0:_B0 + H].set(bs[0])
    p = p.at[_W1:_W1 + H * H].set(ws[1].reshape(-1))      # (in,out) row-major: j*H+k
    p = p.at[_B1:_B1 + H].set(bs[1])
    p = p.at[_W2:_W2 + H * H].set(ws[2].reshape(-1))
    p = p.at[_B2:_B2 + H].set(bs[2])
    p = p.at[_W3:_W3 + H * H].set(ws[3].reshape(-1))
    p = p.at[_B3:_B3 + H].set(bs[3])
    p = p.at[_W4:_W4 + H].set(ws[4].reshape(-1))          # (10,1) -> (10,)
    p = p.at[_B4].set(bs[4][0])
    return p


@jax.jit
def mean_transform(x, params):
    b, n = x.shape
    m = b * n
    if m == 0:                              # degenerate input guard
        return jnp.zeros((b, n), jnp.float32)

    rows = pl.cdiv(m, LANES)
    r_tile, rows_p = _choose_tiling(rows)
    total_p = rows_p * LANES

    # Lane-dense slab: flat pixels -> (rows_p, 128); skip the pad when the
    # flattened size is already aligned (reshape only, no extra HBM copy).
    xf = x.reshape(-1).astype(jnp.float32)
    if total_p != m:
        xf = jnp.pad(xf, (0, total_p - m))
    xf = xf.reshape(rows_p, LANES)

    out = pl.pallas_call(
        mean_transform_kernel,
        out_shape=jax.ShapeDtypeStruct((rows_p, LANES), jnp.float32),
        grid_spec=pltpu.PrefetchScalarGridSpec(
            num_scalar_prefetch=0,
            grid=(rows_p // r_tile,),
            in_specs=[
                pl.BlockSpec(memory_space=pltpu.MemorySpace.SMEM),  # packed params
                pl.BlockSpec((r_tile, LANES), lambda i: (i, 0)),    # x slab tile
            ],
            out_specs=pl.BlockSpec((r_tile, LANES), lambda i: (i, 0)),
        ),
        compiler_params=pltpu.CompilerParams(
            dimension_semantics=("parallel",)),
    )(params, xf)

    return out.reshape(-1)[:m].reshape(b, n)


def ref_forward(x, ws, bs):
    """Pure-JAX reference of the PyTorch forward (for verification)."""
    h = x.reshape(-1, 1).astype(jnp.float32)
    h = h @ ws[0] + bs[0]
    for i in range(1, 5):
        h = jnp.where(h > 0, h, jnp.expm1(h))      # ELU
        h = h @ ws[i] + bs[i]
    return h.reshape(x.shape)


if __name__ == "__main__":
    key = jax.random.PRNGKey(0)
    kx1, kx2, kx3, kp = jax.random.split(key, 4)

    ws, bs = init_params(kp)
    params = pack_params(ws, bs)

    # Small shape required by the module's forward: x is (batch, neurons).
    x1 = jax.random.normal(kx1, (2, 16), jnp.float32)
    y1 = jax.block_until_ready(mean_transform(x1, params))
    y1_ref = ref_forward(x1, ws, bs)
    assert y1.shape == (2, 16)
    assert jnp.allclose(y1, y1_ref, atol=1e-5, rtol=1e-5), (
        f"max err {jnp.max(jnp.abs(y1 - y1_ref))}")

    # Ragged / multi-step case: exercises the padded tail, the 2-step parallel
    # grid (v7x dual-TC path) and the inner CH-row loop.
    x2 = jax.random.normal(kx2, (8, 600), jnp.float32)
    y2 = jax.block_until_ready(mean_transform(x2, params))
    y2_ref = ref_forward(x2, ws, bs)
    assert y2.shape == (8, 600)
    assert jnp.allclose(y2, y2_ref, atol=1e-5, rtol=1e-5), (
        f"max err {jnp.max(jnp.abs(y2 - y2_ref))}")

    # Exactly-aligned case: exercises the no-pad wrapper path.
    x3 = jax.random.normal(kx3, (2, 1024), jnp.float32)
    y3 = jax.block_until_ready(mean_transform(x3, params))
    y3_ref = ref_forward(x3, ws, bs)
    assert y3.shape == (2, 1024)
    assert jnp.allclose(y3, y3_ref, atol=1e-5, rtol=1e-5), (
        f"max err {jnp.max(jnp.abs(y3 - y3_ref))}")

    print("KERNEL_OK")
</pallas_src>

<mosaic_0001>
module attributes {stable_mosaic.version = 11 : i64} {
  func.func @mean_transform_kernel(%arg0: i32, %arg1: memref<361xf32, #tpu.memory_space<smem>>, %arg2: memref<16x128xf32, #tpu.memory_space<vmem>>, %arg3: memref<16x128xf32, #tpu.memory_space<vmem>>) attributes {dimension_semantics = [#tpu.dimension_semantics<parallel>], iteration_bounds = array<i64: 1>, scalar_prefetch = 0 : i64, scratch_operands = 0 : i64, tpu.core_type = #tpu.core_type<tc>, window_params = [{transform_indices = @transform_0, window_bounds = array<i64: 361>}, {transform_indices = @transform_1, window_bounds = array<i64: 16, 128>}, {transform_indices = @transform_2, window_bounds = array<i64: 16, 128>}]} {
    %c0 = arith.constant 0 : index
    %0 = memref.load %arg1[%c0] : memref<361xf32, #tpu.memory_space<smem>>
    %c1 = arith.constant 1 : index
    %1 = memref.load %arg1[%c1] : memref<361xf32, #tpu.memory_space<smem>>
    %c2 = arith.constant 2 : index
    %2 = memref.load %arg1[%c2] : memref<361xf32, #tpu.memory_space<smem>>
    %c3 = arith.constant 3 : index
    %3 = memref.load %arg1[%c3] : memref<361xf32, #tpu.memory_space<smem>>
    %c4 = arith.constant 4 : index
    %4 = memref.load %arg1[%c4] : memref<361xf32, #tpu.memory_space<smem>>
    %c5 = arith.constant 5 : index
    %5 = memref.load %arg1[%c5] : memref<361xf32, #tpu.memory_space<smem>>
    %c6 = arith.constant 6 : index
    %6 = memref.load %arg1[%c6] : memref<361xf32, #tpu.memory_space<smem>>
    %c7 = arith.constant 7 : index
    %7 = memref.load %arg1[%c7] : memref<361xf32, #tpu.memory_space<smem>>
    %c8 = arith.constant 8 : index
    %8 = memref.load %arg1[%c8] : memref<361xf32, #tpu.memory_space<smem>>
    %c9 = arith.constant 9 : index
    %9 = memref.load %arg1[%c9] : memref<361xf32, #tpu.memory_space<smem>>
    %c10 = arith.constant 10 : index
    %10 = memref.load %arg1[%c10] : memref<361xf32, #tpu.memory_space<smem>>
    %c11 = arith.constant 11 : index
    %11 = memref.load %arg1[%c11] : memref<361xf32, #tpu.memory_space<smem>>
    %c12 = arith.constant 12 : index
    %12 = memref.load %arg1[%c12] : memref<361xf32, #tpu.memory_space<smem>>
    %c13 = arith.constant 13 : index
    %13 = memref.load %arg1[%c13] : memref<361xf32, #tpu.memory_space<smem>>
    %c14 = arith.constant 14 : index
    %14 = memref.load %arg1[%c14] : memref<361xf32, #tpu.memory_space<smem>>
    %c15 = arith.constant 15 : index
    %15 = memref.load %arg1[%c15] : memref<361xf32, #tpu.memory_space<smem>>
    %c16 = arith.constant 16 : index
    %16 = memref.load %arg1[%c16] : memref<361xf32, #tpu.memory_space<smem>>
    %c17 = arith.constant 17 : index
    %17 = memref.load %arg1[%c17] : memref<361xf32, #tpu.memory_space<smem>>
    %c18 = arith.constant 18 : index
    %18 = memref.load %arg1[%c18] : memref<361xf32, #tpu.memory_space<smem>>
    %c19 = arith.constant 19 : index
    %19 = memref.load %arg1[%c19] : memref<361xf32, #tpu.memory_space<smem>>
    %c20 = arith.constant 20 : index
    %20 = memref.load %arg1[%c20] : memref<361xf32, #tpu.memory_space<smem>>
    %c21 = arith.constant 21 : index
    %21 = memref.load %arg1[%c21] : memref<361xf32, #tpu.memory_space<smem>>
    %c22 = arith.constant 22 : index
    %22 = memref.load %arg1[%c22] : memref<361xf32, #tpu.memory_space<smem>>
    %c23 = arith.constant 23 : index
    %23 = memref.load %arg1[%c23] : memref<361xf32, #tpu.memory_space<smem>>
    %c24 = arith.constant 24 : index
    %24 = memref.load %arg1[%c24] : memref<361xf32, #tpu.memory_space<smem>>
    %c25 = arith.constant 25 : index
    %25 = memref.load %arg1[%c25] : memref<361xf32, #tpu.memory_space<smem>>
    %c26 = arith.constant 26 : index
    %26 = memref.load %arg1[%c26] : memref<361xf32, #tpu.memory_space<smem>>
    %c27 = arith.constant 27 : index
    %27 = memref.load %arg1[%c27] : memref<361xf32, #tpu.memory_space<smem>>
    %c28 = arith.constant 28 : index
    %28 = memref.load %arg1[%c28] : memref<361xf32, #tpu.memory_space<smem>>
    %c29 = arith.constant 29 : index
    %29 = memref.load %arg1[%c29] : memref<361xf32, #tpu.memory_space<smem>>
    %c30 = arith.constant 30 : index
    %30 = memref.load %arg1[%c30] : memref<361xf32, #tpu.memory_space<smem>>
    %c31 = arith.constant 31 : index
    %31 = memref.load %arg1[%c31] : memref<361xf32, #tpu.memory_space<smem>>
    %c32 = arith.constant 32 : index
    %32 = memref.load %arg1[%c32] : memref<361xf32, #tpu.memory_space<smem>>
    %c33 = arith.constant 33 : index
    %33 = memref.load %arg1[%c33] : memref<361xf32, #tpu.memory_space<smem>>
    %c34 = arith.constant 34 : index
    %34 = memref.load %arg1[%c34] : memref<361xf32, #tpu.memory_space<smem>>
    %c35 = arith.constant 35 : index
    %35 = memref.load %arg1[%c35] : memref<361xf32, #tpu.memory_space<smem>>
    %c36 = arith.constant 36 : index
    %36 = memref.load %arg1[%c36] : memref<361xf32, #tpu.memory_space<smem>>
    %c37 = arith.constant 37 : index
    %37 = memref.load %arg1[%c37] : memref<361xf32, #tpu.memory_space<smem>>
    %c38 = arith.constant 38 : index
    %38 = memref.load %arg1[%c38] : memref<361xf32, #tpu.memory_space<smem>>
    %c39 = arith.constant 39 : index
    %39 = memref.load %arg1[%c39] : memref<361xf32, #tpu.memory_space<smem>>
    %c40 = arith.constant 40 : index
    %40 = memref.load %arg1[%c40] : memref<361xf32, #tpu.memory_space<smem>>
    %c41 = arith.constant 41 : index
    %41 = memref.load %arg1[%c41] : memref<361xf32, #tpu.memory_space<smem>>
    %c42 = arith.constant 42 : index
    %42 = memref.load %arg1[%c42] : memref<361xf32, #tpu.memory_space<smem>>
    %c43 = arith.constant 43 : index
    %43 = memref.load %arg1[%c43] : memref<361xf32, #tpu.memory_space<smem>>
    %c44 = arith.constant 44 : index
    %44 = memref.load %arg1[%c44] : memref<361xf32, #tpu.memory_space<smem>>
    %c45 = arith.constant 45 : index
    %45 = memref.load %arg1[%c45] : memref<361xf32, #tpu.memory_space<smem>>
    %c46 = arith.constant 46 : index
    %46 = memref.load %arg1[%c46] : memref<361xf32, #tpu.memory_space<smem>>
    %c47 = arith.constant 47 : index
    %47 = memref.load %arg1[%c47] : memref<361xf32, #tpu.memory_space<smem>>
    %c48 = arith.constant 48 : index
    %48 = memref.load %arg1[%c48] : memref<361xf32, #tpu.memory_space<smem>>
    %c49 = arith.constant 49 : index
    %49 = memref.load %arg1[%c49] : memref<361xf32, #tpu.memory_space<smem>>
    %c50 = arith.constant 50 : index
    %50 = memref.load %arg1[%c50] : memref<361xf32, #tpu.memory_space<smem>>
    %c51 = arith.constant 51 : index
    %51 = memref.load %arg1[%c51] : memref<361xf32, #tpu.memory_space<smem>>
    %c52 = arith.constant 52 : index
    %52 = memref.load %arg1[%c52] : memref<361xf32, #tpu.memory_space<smem>>
    %c53 = arith.constant 53 : index
    %53 = memref.load %arg1[%c53] : memref<361xf32, #tpu.memory_space<smem>>
    %c54 = arith.constant 54 : index
    %54 = memref.load %arg1[%c54] : memref<361xf32, #tpu.memory_space<smem>>
    %c55 = arith.constant 55 : index
    %55 = memref.load %arg1[%c55] : memref<361xf32, #tpu.memory_space<smem>>
    %c56 = arith.constant 56 : index
    %56 = memref.load %arg1[%c56] : memref<361xf32, #tpu.memory_space<smem>>
    %c57 = arith.constant 57 : index
    %57 = memref.load %arg1[%c57] : memref<361xf32, #tpu.memory_space<smem>>
    %c58 = arith.constant 58 : index
    %58 = memref.load %arg1[%c58] : memref<361xf32, #tpu.memory_space<smem>>
    %c59 = arith.constant 59 : index
    %59 = memref.load %arg1[%c59] : memref<361xf32, #tpu.memory_space<smem>>
    %c60 = arith.constant 60 : index
    %60 = memref.load %arg1[%c60] : memref<361xf32, #tpu.memory_space<smem>>
    %c61 = arith.constant 61 : index
    %61 = memref.load %arg1[%c61] : memref<361xf32, #tpu.memory_space<smem>>
    %c62 = arith.constant 62 : index
    %62 = memref.load %arg1[%c62] : memref<361xf32, #tpu.memory_space<smem>>
    %c63 = arith.constant 63 : index
    %63 = memref.load %arg1[%c63] : memref<361xf32, #tpu.memory_space<smem>>
    %c64 = arith.constant 64 : index
    %64 = memref.load %arg1[%c64] : memref<361xf32, #tpu.memory_space<smem>>
    %c65 = arith.constant 65 : index
    %65 = memref.load %arg1[%c65] : memref<361xf32, #tpu.memory_space<smem>>
    %c66 = arith.constant 66 : index
    %66 = memref.load %arg1[%c66] : memref<361xf32, #tpu.memory_space<smem>>
    %c67 = arith.constant 67 : index
    %67 = memref.load %arg1[%c67] : memref<361xf32, #tpu.memory_space<smem>>
    %c68 = arith.constant 68 : index
    %68 = memref.load %arg1[%c68] : memref<361xf32, #tpu.memory_space<smem>>
    %c69 = arith.constant 69 : index
    %69 = memref.load %arg1[%c69] : memref<361xf32, #tpu.memory_space<smem>>
    %c70 = arith.constant 70 : index
    %70 = memref.load %arg1[%c70] : memref<361xf32, #tpu.memory_space<smem>>
    %c71 = arith.constant 71 : index
    %71 = memref.load %arg1[%c71] : memref<361xf32, #tpu.memory_space<smem>>
    %c72 = arith.constant 72 : index
    %72 = memref.load %arg1[%c72] : memref<361xf32, #tpu.memory_space<smem>>
    %c73 = arith.constant 73 : index
    %73 = memref.load %arg1[%c73] : memref<361xf32, #tpu.memory_space<smem>>
    %c74 = arith.constant 74 : index
    %74 = memref.load %arg1[%c74] : memref<361xf32, #tpu.memory_space<smem>>
    %c75 = arith.constant 75 : index
    %75 = memref.load %arg1[%c75] : memref<361xf32, #tpu.memory_space<smem>>
    %c76 = arith.constant 76 : index
    %76 = memref.load %arg1[%c76] : memref<361xf32, #tpu.memory_space<smem>>
    %c77 = arith.constant 77 : index
    %77 = memref.load %arg1[%c77] : memref<361xf32, #tpu.memory_space<smem>>
    %c78 = arith.constant 78 : index
    %78 = memref.load %arg1[%c78] : memref<361xf32, #tpu.memory_space<smem>>
    %c79 = arith.constant 79 : index
    %79 = memref.load %arg1[%c79] : memref<361xf32, #tpu.memory_space<smem>>
    %c80 = arith.constant 80 : index
    %80 = memref.load %arg1[%c80] : memref<361xf32, #tpu.memory_space<smem>>
    %c81 = arith.constant 81 : index
    %81 = memref.load %arg1[%c81] : memref<361xf32, #tpu.memory_space<smem>>
    %c82 = arith.constant 82 : index
    %82 = memref.load %arg1[%c82] : memref<361xf32, #tpu.memory_space<smem>>
    %c83 = arith.constant 83 : index
    %83 = memref.load %arg1[%c83] : memref<361xf32, #tpu.memory_space<smem>>
    %c84 = arith.constant 84 : index
    %84 = memref.load %arg1[%c84] : memref<361xf32, #tpu.memory_space<smem>>
    %c85 = arith.constant 85 : index
    %85 = memref.load %arg1[%c85] : memref<361xf32, #tpu.memory_space<smem>>
    %c86 = arith.constant 86 : index
    %86 = memref.load %arg1[%c86] : memref<361xf32, #tpu.memory_space<smem>>
    %c87 = arith.constant 87 : index
    %87 = memref.load %arg1[%c87] : memref<361xf32, #tpu.memory_space<smem>>
    %c88 = arith.constant 88 : index
    %88 = memref.load %arg1[%c88] : memref<361xf32, #tpu.memory_space<smem>>
    %c89 = arith.constant 89 : index
    %89 = memref.load %arg1[%c89] : memref<361xf32, #tpu.memory_space<smem>>
    %c90 = arith.constant 90 : index
    %90 = memref.load %arg1[%c90] : memref<361xf32, #tpu.memory_space<smem>>
    %c91 = arith.constant 91 : index
    %91 = memref.load %arg1[%c91] : memref<361xf32, #tpu.memory_space<smem>>
    %c92 = arith.constant 92 : index
    %92 = memref.load %arg1[%c92] : memref<361xf32, #tpu.memory_space<smem>>
    %c93 = arith.constant 93 : index
    %93 = memref.load %arg1[%c93] : memref<361xf32, #tpu.memory_space<smem>>
    %c94 = arith.constant 94 : index
    %94 = memref.load %arg1[%c94] : memref<361xf32, #tpu.memory_space<smem>>
    %c95 = arith.constant 95 : index
    %95 = memref.load %arg1[%c95] : memref<361xf32, #tpu.memory_space<smem>>
    %c96 = arith.constant 96 : index
    %96 = memref.load %arg1[%c96] : memref<361xf32, #tpu.memory_space<smem>>
    %c97 = arith.constant 97 : index
    %97 = memref.load %arg1[%c97] : memref<361xf32, #tpu.memory_space<smem>>
    %c98 = arith.constant 98 : index
    %98 = memref.load %arg1[%c98] : memref<361xf32, #tpu.memory_space<smem>>
    %c99 = arith.constant 99 : index
    %99 = memref.load %arg1[%c99] : memref<361xf32, #tpu.memory_space<smem>>
    %c100 = arith.constant 100 : index
    %100 = memref.load %arg1[%c100] : memref<361xf32, #tpu.memory_space<smem>>
    %c101 = arith.constant 101 : index
    %101 = memref.load %arg1[%c101] : memref<361xf32, #tpu.memory_space<smem>>
    %c102 = arith.constant 102 : index
    %102 = memref.load %arg1[%c102] : memref<361xf32, #tpu.memory_space<smem>>
    %c103 = arith.constant 103 : index
    %103 = memref.load %arg1[%c103] : memref<361xf32, #tpu.memory_space<smem>>
    %c104 = arith.constant 104 : index
    %104 = memref.load %arg1[%c104] : memref<361xf32, #tpu.memory_space<smem>>
    %c105 = arith.constant 105 : index
    %105 = memref.load %arg1[%c105] : memref<361xf32, #tpu.memory_space<smem>>
    %c106 = arith.constant 106 : index
    %106 = memref.load %arg1[%c106] : memref<361xf32, #tpu.memory_space<smem>>
    %c107 = arith.constant 107 : index
    %107 = memref.load %arg1[%c107] : memref<361xf32, #tpu.memory_space<smem>>
    %c108 = arith.constant 108 : index
    %108 = memref.load %arg1[%c108] : memref<361xf32, #tpu.memory_space<smem>>
    %c109 = arith.constant 109 : index
    %109 = memref.load %arg1[%c109] : memref<361xf32, #tpu.memory_space<smem>>
    %c110 = arith.constant 110 : index
    %110 = memref.load %arg1[%c110] : memref<361xf32, #tpu.memory_space<smem>>
    %c111 = arith.constant 111 : index
    %111 = memref.load %arg1[%c111] : memref<361xf32, #tpu.memory_space<smem>>
    %c112 = arith.constant 112 : index
    %112 = memref.load %arg1[%c112] : memref<361xf32, #tpu.memory_space<smem>>
    %c113 = arith.constant 113 : index
    %113 = memref.load %arg1[%c113] : memref<361xf32, #tpu.memory_space<smem>>
    %c114 = arith.constant 114 : index
    %114 = memref.load %arg1[%c114] : memref<361xf32, #tpu.memory_space<smem>>
    %c115 = arith.constant 115 : index
    %115 = memref.load %arg1[%c115] : memref<361xf32, #tpu.memory_space<smem>>
    %c116 = arith.constant 116 : index
    %116 = memref.load %arg1[%c116] : memref<361xf32, #tpu.memory_space<smem>>
    %c117 = arith.constant 117 : index
    %117 = memref.load %arg1[%c117] : memref<361xf32, #tpu.memory_space<smem>>
    %c118 = arith.constant 118 : index
    %118 = memref.load %arg1[%c118] : memref<361xf32, #tpu.memory_space<smem>>
    %c119 = arith.constant 119 : index
    %119 = memref.load %arg1[%c119] : memref<361xf32, #tpu.memory_space<smem>>
    %c120 = arith.constant 120 : index
    %120 = memref.load %arg1[%c120] : memref<361xf32, #tpu.memory_space<smem>>
    %c121 = arith.constant 121 : index
    %121 = memref.load %arg1[%c121] : memref<361xf32, #tpu.memory_space<smem>>
    %c122 = arith.constant 122 : index
    %122 = memref.load %arg1[%c122] : memref<361xf32, #tpu.memory_space<smem>>
    %c123 = arith.constant 123 : index
    %123 = memref.load %arg1[%c123] : memref<361xf32, #tpu.memory_space<smem>>
    %c124 = arith.constant 124 : index
    %124 = memref.load %arg1[%c124] : memref<361xf32, #tpu.memory_space<smem>>
    %c125 = arith.constant 125 : index
    %125 = memref.load %arg1[%c125] : memref<361xf32, #tpu.memory_space<smem>>
    %c126 = arith.constant 126 : index
    %126 = memref.load %arg1[%c126] : memref<361xf32, #tpu.memory_space<smem>>
    %c127 = arith.constant 127 : index
    %127 = memref.load %arg1[%c127] : memref<361xf32, #tpu.memory_space<smem>>
    %c128 = arith.constant 128 : index
    %128 = memref.load %arg1[%c128] : memref<361xf32, #tpu.memory_space<smem>>
    %c129 = arith.constant 129 : index
    %129 = memref.load %arg1[%c129] : memref<361xf32, #tpu.memory_space<smem>>
    %c130 = arith.constant 130 : index
    %130 = memref.load %arg1[%c130] : memref<361xf32, #tpu.memory_space<smem>>
    %c131 = arith.constant 131 : index
    %131 = memref.load %arg1[%c131] : memref<361xf32, #tpu.memory_space<smem>>
    %c132 = arith.constant 132 : index
    %132 = memref.load %arg1[%c132] : memref<361xf32, #tpu.memory_space<smem>>
    %c133 = arith.constant 133 : index
    %133 = memref.load %arg1[%c133] : memref<361xf32, #tpu.memory_space<smem>>
    %c134 = arith.constant 134 : index
    %134 = memref.load %arg1[%c134] : memref<361xf32, #tpu.memory_space<smem>>
    %c135 = arith.constant 135 : index
    %135 = memref.load %arg1[%c135] : memref<361xf32, #tpu.memory_space<smem>>
    %c136 = arith.constant 136 : index
    %136 = memref.load %arg1[%c136] : memref<361xf32, #tpu.memory_space<smem>>
    %c137 = arith.constant 137 : index
    %137 = memref.load %arg1[%c137] : memref<361xf32, #tpu.memory_space<smem>>
    %c138 = arith.constant 138 : index
    %138 = memref.load %arg1[%c138] : memref<361xf32, #tpu.memory_space<smem>>
    %c139 = arith.constant 139 : index
    %139 = memref.load %arg1[%c139] : memref<361xf32, #tpu.memory_space<smem>>
    %c140 = arith.constant 140 : index
    %140 = memref.load %arg1[%c140] : memref<361xf32, #tpu.memory_space<smem>>
    %c141 = arith.constant 141 : index
    %141 = memref.load %arg1[%c141] : memref<361xf32, #tpu.memory_space<smem>>
    %c142 = arith.constant 142 : index
    %142 = memref.load %arg1[%c142] : memref<361xf32, #tpu.memory_space<smem>>
    %c143 = arith.constant 143 : index
    %143 = memref.load %arg1[%c143] : memref<361xf32, #tpu.memory_space<smem>>
    %c144 = arith.constant 144 : index
    %144 = memref.load %arg1[%c144] : memref<361xf32, #tpu.memory_space<smem>>
    %c145 = arith.constant 145 : index
    %145 = memref.load %arg1[%c145] : memref<361xf32, #tpu.memory_space<smem>>
    %c146 = arith.constant 146 : index
    %146 = memref.load %arg1[%c146] : memref<361xf32, #tpu.memory_space<smem>>
    %c147 = arith.constant 147 : index
    %147 = memref.load %arg1[%c147] : memref<361xf32, #tpu.memory_space<smem>>
    %c148 = arith.constant 148 : index
    %148 = memref.load %arg1[%c148] : memref<361xf32, #tpu.memory_space<smem>>
    %c149 = arith.constant 149 : index
    %149 = memref.load %arg1[%c149] : memref<361xf32, #tpu.memory_space<smem>>
    %c150 = arith.constant 150 : index
    %150 = memref.load %arg1[%c150] : memref<361xf32, #tpu.memory_space<smem>>
    %c151 = arith.constant 151 : index
    %151 = memref.load %arg1[%c151] : memref<361xf32, #tpu.memory_space<smem>>
    %c152 = arith.constant 152 : index
    %152 = memref.load %arg1[%c152] : memref<361xf32, #tpu.memory_space<smem>>
    %c153 = arith.constant 153 : index
    %153 = memref.load %arg1[%c153] : memref<361xf32, #tpu.memory_space<smem>>
    %c154 = arith.constant 154 : index
    %154 = memref.load %arg1[%c154] : memref<361xf32, #tpu.memory_space<smem>>
    %c155 = arith.constant 155 : index
    %155 = memref.load %arg1[%c155] : memref<361xf32, #tpu.memory_space<smem>>
    %c156 = arith.constant 156 : index
    %156 = memref.load %arg1[%c156] : memref<361xf32, #tpu.memory_space<smem>>
    %c157 = arith.constant 157 : index
    %157 = memref.load %arg1[%c157] : memref<361xf32, #tpu.memory_space<smem>>
    %c158 = arith.constant 158 : index
    %158 = memref.load %arg1[%c158] : memref<361xf32, #tpu.memory_space<smem>>
    %c159 = arith.constant 159 : index
    %159 = memref.load %arg1[%c159] : memref<361xf32, #tpu.memory_space<smem>>
    %c160 = arith.constant 160 : index
    %160 = memref.load %arg1[%c160] : memref<361xf32, #tpu.memory_space<smem>>
    %c161 = arith.constant 161 : index
    %161 = memref.load %arg1[%c161] : memref<361xf32, #tpu.memory_space<smem>>
    %c162 = arith.constant 162 : index
    %162 = memref.load %arg1[%c162] : memref<361xf32, #tpu.memory_space<smem>>
    %c163 = arith.constant 163 : index
    %163 = memref.load %arg1[%c163] : memref<361xf32, #tpu.memory_space<smem>>
    %c164 = arith.constant 164 : index
    %164 = memref.load %arg1[%c164] : memref<361xf32, #tpu.memory_space<smem>>
    %c165 = arith.constant 165 : index
    %165 = memref.load %arg1[%c165] : memref<361xf32, #tpu.memory_space<smem>>
    %c166 = arith.constant 166 : index
    %166 = memref.load %arg1[%c166] : memref<361xf32, #tpu.memory_space<smem>>
    %c167 = arith.constant 167 : index
    %167 = memref.load %arg1[%c167] : memref<361xf32, #tpu.memory_space<smem>>
    %c168 = arith.constant 168 : index
    %168 = memref.load %arg1[%c168] : memref<361xf32, #tpu.memory_space<smem>>
    %c169 = arith.constant 169 : index
    %169 = memref.load %arg1[%c169] : memref<361xf32, #tpu.memory_space<smem>>
    %c170 = arith.constant 170 : index
    %170 = memref.load %arg1[%c170] : memref<361xf32, #tpu.memory_space<smem>>
    %c171 = arith.constant 171 : index
    %171 = memref.load %arg1[%c171] : memref<361xf32, #tpu.memory_space<smem>>
    %c172 = arith.constant 172 : index
    %172 = memref.load %arg1[%c172] : memref<361xf32, #tpu.memory_space<smem>>
    %c173 = arith.constant 173 : index
    %173 = memref.load %arg1[%c173] : memref<361xf32, #tpu.memory_space<smem>>
    %c174 = arith.constant 174 : index
    %174 = memref.load %arg1[%c174] : memref<361xf32, #tpu.memory_space<smem>>
    %c175 = arith.constant 175 : index
    %175 = memref.load %arg1[%c175] : memref<361xf32, #tpu.memory_space<smem>>
    %c176 = arith.constant 176 : index
    %176 = memref.load %arg1[%c176] : memref<361xf32, #tpu.memory_space<smem>>
    %c177 = arith.constant 177 : index
    %177 = memref.load %arg1[%c177] : memref<361xf32, #tpu.memory_space<smem>>
    %c178 = arith.constant 178 : index
    %178 = memref.load %arg1[%c178] : memref<361xf32, #tpu.memory_space<smem>>
    %c179 = arith.constant 179 : index
    %179 = memref.load %arg1[%c179] : memref<361xf32, #tpu.memory_space<smem>>
    %c180 = arith.constant 180 : index
    %180 = memref.load %arg1[%c180] : memref<361xf32, #tpu.memory_space<smem>>
    %c181 = arith.constant 181 : index
    %181 = memref.load %arg1[%c181] : memref<361xf32, #tpu.memory_space<smem>>
    %c182 = arith.constant 182 : index
    %182 = memref.load %arg1[%c182] : memref<361xf32, #tpu.memory_space<smem>>
    %c183 = arith.constant 183 : index
    %183 = memref.load %arg1[%c183] : memref<361xf32, #tpu.memory_space<smem>>
    %c184 = arith.constant 184 : index
    %184 = memref.load %arg1[%c184] : memref<361xf32, #tpu.memory_space<smem>>
    %c185 = arith.constant 185 : index
    %185 = memref.load %arg1[%c185] : memref<361xf32, #tpu.memory_space<smem>>
    %c186 = arith.constant 186 : index
    %186 = memref.load %arg1[%c186] : memref<361xf32, #tpu.memory_space<smem>>
    %c187 = arith.constant 187 : index
    %187 = memref.load %arg1[%c187] : memref<361xf32, #tpu.memory_space<smem>>
    %c188 = arith.constant 188 : index
    %188 = memref.load %arg1[%c188] : memref<361xf32, #tpu.memory_space<smem>>
    %c189 = arith.constant 189 : index
    %189 = memref.load %arg1[%c189] : memref<361xf32, #tpu.memory_space<smem>>
    %c190 = arith.constant 190 : index
    %190 = memref.load %arg1[%c190] : memref<361xf32, #tpu.memory_space<smem>>
    %c191 = arith.constant 191 : index
    %191 = memref.load %arg1[%c191] : memref<361xf32, #tpu.memory_space<smem>>
    %c192 = arith.constant 192 : index
    %192 = memref.load %arg1[%c192] : memref<361xf32, #tpu.memory_space<smem>>
    %c193 = arith.constant 193 : index
    %193 = memref.load %arg1[%c193] : memref<361xf32, #tpu.memory_space<smem>>
    %c194 = arith.constant 194 : index
    %194 = memref.load %arg1[%c194] : memref<361xf32, #tpu.memory_space<smem>>
    %c195 = arith.constant 195 : index
    %195 = memref.load %arg1[%c195] : memref<361xf32, #tpu.memory_space<smem>>
    %c196 = arith.constant 196 : index
    %196 = memref.load %arg1[%c196] : memref<361xf32, #tpu.memory_space<smem>>
    %c197 = arith.constant 197 : index
    %197 = memref.load %arg1[%c197] : memref<361xf32, #tpu.memory_space<smem>>
    %c198 = arith.constant 198 : index
    %198 = memref.load %arg1[%c198] : memref<361xf32, #tpu.memory_space<smem>>
    %c199 = arith.constant 199 : index
    %199 = memref.load %arg1[%c199] : memref<361xf32, #tpu.memory_space<smem>>
    %c200 = arith.constant 200 : index
    %200 = memref.load %arg1[%c200] : memref<361xf32, #tpu.memory_space<smem>>
    %c201 = arith.constant 201 : index
    %201 = memref.load %arg1[%c201] : memref<361xf32, #tpu.memory_space<smem>>
    %c202 = arith.constant 202 : index
    %202 = memref.load %arg1[%c202] : memref<361xf32, #tpu.memory_space<smem>>
    %c203 = arith.constant 203 : index
    %203 = memref.load %arg1[%c203] : memref<361xf32, #tpu.memory_space<smem>>
    %c204 = arith.constant 204 : index
    %204 = memref.load %arg1[%c204] : memref<361xf32, #tpu.memory_space<smem>>
    %c205 = arith.constant 205 : index
    %205 = memref.load %arg1[%c205] : memref<361xf32, #tpu.memory_space<smem>>
    %c206 = arith.constant 206 : index
    %206 = memref.load %arg1[%c206] : memref<361xf32, #tpu.memory_space<smem>>
    %c207 = arith.constant 207 : index
    %207 = memref.load %arg1[%c207] : memref<361xf32, #tpu.memory_space<smem>>
    %c208 = arith.constant 208 : index
    %208 = memref.load %arg1[%c208] : memref<361xf32, #tpu.memory_space<smem>>
    %c209 = arith.constant 209 : index
    %209 = memref.load %arg1[%c209] : memref<361xf32, #tpu.memory_space<smem>>
    %c210 = arith.constant 210 : index
    %210 = memref.load %arg1[%c210] : memref<361xf32, #tpu.memory_space<smem>>
    %c211 = arith.constant 211 : index
    %211 = memref.load %arg1[%c211] : memref<361xf32, #tpu.memory_space<smem>>
    %c212 = arith.constant 212 : index
    %212 = memref.load %arg1[%c212] : memref<361xf32, #tpu.memory_space<smem>>
    %c213 = arith.constant 213 : index
    %213 = memref.load %arg1[%c213] : memref<361xf32, #tpu.memory_space<smem>>
    %c214 = arith.constant 214 : index
    %214 = memref.load %arg1[%c214] : memref<361xf32, #tpu.memory_space<smem>>
    %c215 = arith.constant 215 : index
    %215 = memref.load %arg1[%c215] : memref<361xf32, #tpu.memory_space<smem>>
    %c216 = arith.constant 216 : index
    %216 = memref.load %arg1[%c216] : memref<361xf32, #tpu.memory_space<smem>>
    %c217 = arith.constant 217 : index
    %217 = memref.load %arg1[%c217] : memref<361xf32, #tpu.memory_space<smem>>
    %c218 = arith.constant 218 : index
    %218 = memref.load %arg1[%c218] : memref<361xf32, #tpu.memory_space<smem>>
    %c219 = arith.constant 219 : index
    %219 = memref.load %arg1[%c219] : memref<361xf32, #tpu.memory_space<smem>>
    %c220 = arith.constant 220 : index
    %220 = memref.load %arg1[%c220] : memref<361xf32, #tpu.memory_space<smem>>
    %c221 = arith.constant 221 : index
    %221 = memref.load %arg1[%c221] : memref<361xf32, #tpu.memory_space<smem>>
    %c222 = arith.constant 222 : index
    %222 = memref.load %arg1[%c222] : memref<361xf32, #tpu.memory_space<smem>>
    %c223 = arith.constant 223 : index
    %223 = memref.load %arg1[%c223] : memref<361xf32, #tpu.memory_space<smem>>
    %c224 = arith.constant 224 : index
    %224 = memref.load %arg1[%c224] : memref<361xf32, #tpu.memory_space<smem>>
    %c225 = arith.constant 225 : index
    %225 = memref.load %arg1[%c225] : memref<361xf32, #tpu.memory_space<smem>>
    %c226 = arith.constant 226 : index
    %226 = memref.load %arg1[%c226] : memref<361xf32, #tpu.memory_space<smem>>
    %c227 = arith.constant 227 : index
    %227 = memref.load %arg1[%c227] : memref<361xf32, #tpu.memory_space<smem>>
    %c228 = arith.constant 228 : index
    %228 = memref.load %arg1[%c228] : memref<361xf32, #tpu.memory_space<smem>>
    %c229 = arith.constant 229 : index
    %229 = memref.load %arg1[%c229] : memref<361xf32, #tpu.memory_space<smem>>
    %c230 = arith.constant 230 : index
    %230 = memref.load %arg1[%c230] : memref<361xf32, #tpu.memory_space<smem>>
    %c231 = arith.constant 231 : index
    %231 = memref.load %arg1[%c231] : memref<361xf32, #tpu.memory_space<smem>>
    %c232 = arith.constant 232 : index
    %232 = memref.load %arg1[%c232] : memref<361xf32, #tpu.memory_space<smem>>
    %c233 = arith.constant 233 : index
    %233 = memref.load %arg1[%c233] : memref<361xf32, #tpu.memory_space<smem>>
    %c234 = arith.constant 234 : index
    %234 = memref.load %arg1[%c234] : memref<361xf32, #tpu.memory_space<smem>>
    %c235 = arith.constant 235 : index
    %235 = memref.load %arg1[%c235] : memref<361xf32, #tpu.memory_space<smem>>
    %c236 = arith.constant 236 : index
    %236 = memref.load %arg1[%c236] : memref<361xf32, #tpu.memory_space<smem>>
    %c237 = arith.constant 237 : index
    %237 = memref.load %arg1[%c237] : memref<361xf32, #tpu.memory_space<smem>>
    %c238 = arith.constant 238 : index
    %238 = memref.load %arg1[%c238] : memref<361xf32, #tpu.memory_space<smem>>
    %c239 = arith.constant 239 : index
    %239 = memref.load %arg1[%c239] : memref<361xf32, #tpu.memory_space<smem>>
    %c240 = arith.constant 240 : index
    %240 = memref.load %arg1[%c240] : memref<361xf32, #tpu.memory_space<smem>>
    %c241 = arith.constant 241 : index
    %241 = memref.load %arg1[%c241] : memref<361xf32, #tpu.memory_space<smem>>
    %c242 = arith.constant 242 : index
    %242 = memref.load %arg1[%c242] : memref<361xf32, #tpu.memory_space<smem>>
    %c243 = arith.constant 243 : index
    %243 = memref.load %arg1[%c243] : memref<361xf32, #tpu.memory_space<smem>>
    %c244 = arith.constant 244 : index
    %244 = memref.load %arg1[%c244] : memref<361xf32, #tpu.memory_space<smem>>
    %c245 = arith.constant 245 : index
    %245 = memref.load %arg1[%c245] : memref<361xf32, #tpu.memory_space<smem>>
    %c246 = arith.constant 246 : index
    %246 = memref.load %arg1[%c246] : memref<361xf32, #tpu.memory_space<smem>>
    %c247 = arith.constant 247 : index
    %247 = memref.load %arg1[%c247] : memref<361xf32, #tpu.memory_space<smem>>
    %c248 = arith.constant 248 : index
    %248 = memref.load %arg1[%c248] : memref<361xf32, #tpu.memory_space<smem>>
    %c249 = arith.constant 249 : index
    %249 = memref.load %arg1[%c249] : memref<361xf32, #tpu.memory_space<smem>>
    %c250 = arith.constant 250 : index
    %250 = memref.load %arg1[%c250] : memref<361xf32, #tpu.memory_space<smem>>
    %c251 = arith.constant 251 : index
    %251 = memref.load %arg1[%c251] : memref<361xf32, #tpu.memory_space<smem>>
    %c252 = arith.constant 252 : index
    %252 = memref.load %arg1[%c252] : memref<361xf32, #tpu.memory_space<smem>>
    %c253 = arith.constant 253 : index
    %253 = memref.load %arg1[%c253] : memref<361xf32, #tpu.memory_space<smem>>
    %c254 = arith.constant 254 : index
    %254 = memref.load %arg1[%c254] : memref<361xf32, #tpu.memory_space<smem>>
    %c255 = arith.constant 255 : index
    %255 = memref.load %arg1[%c255] : memref<361xf32, #tpu.memory_space<smem>>
    %c256 = arith.constant 256 : index
    %256 = memref.load %arg1[%c256] : memref<361xf32, #tpu.memory_space<smem>>
    %c257 = arith.constant 257 : index
    %257 = memref.load %arg1[%c257] : memref<361xf32, #tpu.memory_space<smem>>
    %c258 = arith.constant 258 : index
    %258 = memref.load %arg1[%c258] : memref<361xf32, #tpu.memory_space<smem>>
    %c259 = arith.constant 259 : index
    %259 = memref.load %arg1[%c259] : memref<361xf32, #tpu.memory_space<smem>>
    %c260 = arith.constant 260 : index
    %260 = memref.load %arg1[%c260] : memref<361xf32, #tpu.memory_space<smem>>
    %c261 = arith.constant 261 : index
    %261 = memref.load %arg1[%c261] : memref<361xf32, #tpu.memory_space<smem>>
    %c262 = arith.constant 262 : index
    %262 = memref.load %arg1[%c262] : memref<361xf32, #tpu.memory_space<smem>>
    %c263 = arith.constant 263 : index
    %263 = memref.load %arg1[%c263] : memref<361xf32, #tpu.memory_space<smem>>
    %c264 = arith.constant 264 : index
    %264 = memref.load %arg1[%c264] : memref<361xf32, #tpu.memory_space<smem>>
    %c265 = arith.constant 265 : index
    %265 = memref.load %arg1[%c265] : memref<361xf32, #tpu.memory_space<smem>>
    %c266 = arith.constant 266 : index
    %266 = memref.load %arg1[%c266] : memref<361xf32, #tpu.memory_space<smem>>
    %c267 = arith.constant 267 : index
    %267 = memref.load %arg1[%c267] : memref<361xf32, #tpu.memory_space<smem>>
    %c268 = arith.constant 268 : index
    %268 = memref.load %arg1[%c268] : memref<361xf32, #tpu.memory_space<smem>>
    %c269 = arith.constant 269 : index
    %269 = memref.load %arg1[%c269] : memref<361xf32, #tpu.memory_space<smem>>
    %c270 = arith.constant 270 : index
    %270 = memref.load %arg1[%c270] : memref<361xf32, #tpu.memory_space<smem>>
    %c271 = arith.constant 271 : index
    %271 = memref.load %arg1[%c271] : memref<361xf32, #tpu.memory_space<smem>>
    %c272 = arith.constant 272 : index
    %272 = memref.load %arg1[%c272] : memref<361xf32, #tpu.memory_space<smem>>
    %c273 = arith.constant 273 : index
    %273 = memref.load %arg1[%c273] : memref<361xf32, #tpu.memory_space<smem>>
    %c274 = arith.constant 274 : index
    %274 = memref.load %arg1[%c274] : memref<361xf32, #tpu.memory_space<smem>>
    %c275 = arith.constant 275 : index
    %275 = memref.load %arg1[%c275] : memref<361xf32, #tpu.memory_space<smem>>
    %c276 = arith.constant 276 : index
    %276 = memref.load %arg1[%c276] : memref<361xf32, #tpu.memory_space<smem>>
    %c277 = arith.constant 277 : index
    %277 = memref.load %arg1[%c277] : memref<361xf32, #tpu.memory_space<smem>>
    %c278 = arith.constant 278 : index
    %278 = memref.load %arg1[%c278] : memref<361xf32, #tpu.memory_space<smem>>
    %c279 = arith.constant 279 : index
    %279 = memref.load %arg1[%c279] : memref<361xf32, #tpu.memory_space<smem>>
    %c280 = arith.constant 280 : index
    %280 = memref.load %arg1[%c280] : memref<361xf32, #tpu.memory_space<smem>>
    %c281 = arith.constant 281 : index
    %281 = memref.load %arg1[%c281] : memref<361xf32, #tpu.memory_space<smem>>
    %c282 = arith.constant 282 : index
    %282 = memref.load %arg1[%c282] : memref<361xf32, #tpu.memory_space<smem>>
    %c283 = arith.constant 283 : index
    %283 = memref.load %arg1[%c283] : memref<361xf32, #tpu.memory_space<smem>>
    %c284 = arith.constant 284 : index
    %284 = memref.load %arg1[%c284] : memref<361xf32, #tpu.memory_space<smem>>
    %c285 = arith.constant 285 : index
    %285 = memref.load %arg1[%c285] : memref<361xf32, #tpu.memory_space<smem>>
    %c286 = arith.constant 286 : index
    %286 = memref.load %arg1[%c286] : memref<361xf32, #tpu.memory_space<smem>>
    %c287 = arith.constant 287 : index
    %287 = memref.load %arg1[%c287] : memref<361xf32, #tpu.memory_space<smem>>
    %c288 = arith.constant 288 : index
    %288 = memref.load %arg1[%c288] : memref<361xf32, #tpu.memory_space<smem>>
    %c289 = arith.constant 289 : index
    %289 = memref.load %arg1[%c289] : memref<361xf32, #tpu.memory_space<smem>>
    %c290 = arith.constant 290 : index
    %290 = memref.load %arg1[%c290] : memref<361xf32, #tpu.memory_space<smem>>
    %c291 = arith.constant 291 : index
    %291 = memref.load %arg1[%c291] : memref<361xf32, #tpu.memory_space<smem>>
    %c292 = arith.constant 292 : index
    %292 = memref.load %arg1[%c292] : memref<361xf32, #tpu.memory_space<smem>>
    %c293 = arith.constant 293 : index
    %293 = memref.load %arg1[%c293] : memref<361xf32, #tpu.memory_space<smem>>
    %c294 = arith.constant 294 : index
    %294 = memref.load %arg1[%c294] : memref<361xf32, #tpu.memory_space<smem>>
    %c295 = arith.constant 295 : index
    %295 = memref.load %arg1[%c295] : memref<361xf32, #tpu.memory_space<smem>>
    %c296 = arith.constant 296 : index
    %296 = memref.load %arg1[%c296] : memref<361xf32, #tpu.memory_space<smem>>
    %c297 = arith.constant 297 : index
    %297 = memref.load %arg1[%c297] : memref<361xf32, #tpu.memory_space<smem>>
    %c298 = arith.constant 298 : index
    %298 = memref.load %arg1[%c298] : memref<361xf32, #tpu.memory_space<smem>>
    %c299 = arith.constant 299 : index
    %299 = memref.load %arg1[%c299] : memref<361xf32, #tpu.memory_space<smem>>
    %c300 = arith.constant 300 : index
    %300 = memref.load %arg1[%c300] : memref<361xf32, #tpu.memory_space<smem>>
    %c301 = arith.constant 301 : index
    %301 = memref.load %arg1[%c301] : memref<361xf32, #tpu.memory_space<smem>>
    %c302 = arith.constant 302 : index
    %302 = memref.load %arg1[%c302] : memref<361xf32, #tpu.memory_space<smem>>
    %c303 = arith.constant 303 : index
    %303 = memref.load %arg1[%c303] : memref<361xf32, #tpu.memory_space<smem>>
    %c304 = arith.constant 304 : index
    %304 = memref.load %arg1[%c304] : memref<361xf32, #tpu.memory_space<smem>>
    %c305 = arith.constant 305 : index
    %305 = memref.load %arg1[%c305] : memref<361xf32, #tpu.memory_space<smem>>
    %c306 = arith.constant 306 : index
    %306 = memref.load %arg1[%c306] : memref<361xf32, #tpu.memory_space<smem>>
    %c307 = arith.constant 307 : index
    %307 = memref.load %arg1[%c307] : memref<361xf32, #tpu.memory_space<smem>>
    %c308 = arith.constant 308 : index
    %308 = memref.load %arg1[%c308] : memref<361xf32, #tpu.memory_space<smem>>
    %c309 = arith.constant 309 : index
    %309 = memref.load %arg1[%c309] : memref<361xf32, #tpu.memory_space<smem>>
    %c310 = arith.constant 310 : index
    %310 = memref.load %arg1[%c310] : memref<361xf32, #tpu.memory_space<smem>>
    %c311 = arith.constant 311 : index
    %311 = memref.load %arg1[%c311] : memref<361xf32, #tpu.memory_space<smem>>
    %c312 = arith.constant 312 : index
    %312 = memref.load %arg1[%c312] : memref<361xf32, #tpu.memory_space<smem>>
    %c313 = arith.constant 313 : index
    %313 = memref.load %arg1[%c313] : memref<361xf32, #tpu.memory_space<smem>>
    %c314 = arith.constant 314 : index
    %314 = memref.load %arg1[%c314] : memref<361xf32, #tpu.memory_space<smem>>
    %c315 = arith.constant 315 : index
    %315 = memref.load %arg1[%c315] : memref<361xf32, #tpu.memory_space<smem>>
    %c316 = arith.constant 316 : index
    %316 = memref.load %arg1[%c316] : memref<361xf32, #tpu.memory_space<smem>>
    %c317 = arith.constant 317 : index
    %317 = memref.load %arg1[%c317] : memref<361xf32, #tpu.memory_space<smem>>
    %c318 = arith.constant 318 : index
    %318 = memref.load %arg1[%c318] : memref<361xf32, #tpu.memory_space<smem>>
    %c319 = arith.constant 319 : index
    %319 = memref.load %arg1[%c319] : memref<361xf32, #tpu.memory_space<smem>>
    %c320 = arith.constant 320 : index
    %320 = memref.load %arg1[%c320] : memref<361xf32, #tpu.memory_space<smem>>
    %c321 = arith.constant 321 : index
    %321 = memref.load %arg1[%c321] : memref<361xf32, #tpu.memory_space<smem>>
    %c322 = arith.constant 322 : index
    %322 = memref.load %arg1[%c322] : memref<361xf32, #tpu.memory_space<smem>>
    %c323 = arith.constant 323 : index
    %323 = memref.load %arg1[%c323] : memref<361xf32, #tpu.memory_space<smem>>
    %c324 = arith.constant 324 : index
    %324 = memref.load %arg1[%c324] : memref<361xf32, #tpu.memory_space<smem>>
    %c325 = arith.constant 325 : index
    %325 = memref.load %arg1[%c325] : memref<361xf32, #tpu.memory_space<smem>>
    %c326 = arith.constant 326 : index
    %326 = memref.load %arg1[%c326] : memref<361xf32, #tpu.memory_space<smem>>
    %c327 = arith.constant 327 : index
    %327 = memref.load %arg1[%c327] : memref<361xf32, #tpu.memory_space<smem>>
    %c328 = arith.constant 328 : index
    %328 = memref.load %arg1[%c328] : memref<361xf32, #tpu.memory_space<smem>>
    %c329 = arith.constant 329 : index
    %329 = memref.load %arg1[%c329] : memref<361xf32, #tpu.memory_space<smem>>
    %c330 = arith.constant 330 : index
    %330 = memref.load %arg1[%c330] : memref<361xf32, #tpu.memory_space<smem>>
    %c331 = arith.constant 331 : index
    %331 = memref.load %arg1[%c331] : memref<361xf32, #tpu.memory_space<smem>>
    %c332 = arith.constant 332 : index
    %332 = memref.load %arg1[%c332] : memref<361xf32, #tpu.memory_space<smem>>
    %c333 = arith.constant 333 : index
    %333 = memref.load %arg1[%c333] : memref<361xf32, #tpu.memory_space<smem>>
    %c334 = arith.constant 334 : index
    %334 = memref.load %arg1[%c334] : memref<361xf32, #tpu.memory_space<smem>>
    %c335 = arith.constant 335 : index
    %335 = memref.load %arg1[%c335] : memref<361xf32, #tpu.memory_space<smem>>
    %c336 = arith.constant 336 : index
    %336 = memref.load %arg1[%c336] : memref<361xf32, #tpu.memory_space<smem>>
    %c337 = arith.constant 337 : index
    %337 = memref.load %arg1[%c337] : memref<361xf32, #tpu.memory_space<smem>>
    %c338 = arith.constant 338 : index
    %338 = memref.load %arg1[%c338] : memref<361xf32, #tpu.memory_space<smem>>
    %c339 = arith.constant 339 : index
    %339 = memref.load %arg1[%c339] : memref<361xf32, #tpu.memory_space<smem>>
    %c340 = arith.constant 340 : index
    %340 = memref.load %arg1[%c340] : memref<361xf32, #tpu.memory_space<smem>>
    %c341 = arith.constant 341 : index
    %341 = memref.load %arg1[%c341] : memref<361xf32, #tpu.memory_space<smem>>
    %c342 = arith.constant 342 : index
    %342 = memref.load %arg1[%c342] : memref<361xf32, #tpu.memory_space<smem>>
    %c343 = arith.constant 343 : index
    %343 = memref.load %arg1[%c343] : memref<361xf32, #tpu.memory_space<smem>>
    %c344 = arith.constant 344 : index
    %344 = memref.load %arg1[%c344] : memref<361xf32, #tpu.memory_space<smem>>
    %c345 = arith.constant 345 : index
    %345 = memref.load %arg1[%c345] : memref<361xf32, #tpu.memory_space<smem>>
    %c346 = arith.constant 346 : index
    %346 = memref.load %arg1[%c346] : memref<361xf32, #tpu.memory_space<smem>>
    %c347 = arith.constant 347 : index
    %347 = memref.load %arg1[%c347] : memref<361xf32, #tpu.memory_space<smem>>
    %c348 = arith.constant 348 : index
    %348 = memref.load %arg1[%c348] : memref<361xf32, #tpu.memory_space<smem>>
    %c349 = arith.constant 349 : index
    %349 = memref.load %arg1[%c349] : memref<361xf32, #tpu.memory_space<smem>>
    %c350 = arith.constant 350 : index
    %350 = memref.load %arg1[%c350] : memref<361xf32, #tpu.memory_space<smem>>
    %c351 = arith.constant 351 : index
    %351 = memref.load %arg1[%c351] : memref<361xf32, #tpu.memory_space<smem>>
    %c352 = arith.constant 352 : index
    %352 = memref.load %arg1[%c352] : memref<361xf32, #tpu.memory_space<smem>>
    %c353 = arith.constant 353 : index
    %353 = memref.load %arg1[%c353] : memref<361xf32, #tpu.memory_space<smem>>
    %c354 = arith.constant 354 : index
    %354 = memref.load %arg1[%c354] : memref<361xf32, #tpu.memory_space<smem>>
    %c355 = arith.constant 355 : index
    %355 = memref.load %arg1[%c355] : memref<361xf32, #tpu.memory_space<smem>>
    %c356 = arith.constant 356 : index
    %356 = memref.load %arg1[%c356] : memref<361xf32, #tpu.memory_space<smem>>
    %c357 = arith.constant 357 : index
    %357 = memref.load %arg1[%c357] : memref<361xf32, #tpu.memory_space<smem>>
    %c358 = arith.constant 358 : index
    %358 = memref.load %arg1[%c358] : memref<361xf32, #tpu.memory_space<smem>>
    %c359 = arith.constant 359 : index
    %359 = memref.load %arg1[%c359] : memref<361xf32, #tpu.memory_space<smem>>
    %c360 = arith.constant 360 : index
    %360 = memref.load %arg1[%c360] : memref<361xf32, #tpu.memory_space<smem>>
    %c0_i32 = arith.constant 0 : i32
    %c16_i32 = arith.constant 16 : i32
    %361 = arith.muli %c0_i32, %c16_i32 : i32
    %362 = tpu.assume_multiple %361, 16 : i32
    %363 = arith.index_cast %362 : i32 to index
    %c0_0 = arith.constant 0 : index
    %364 = vector.load %arg2[%363, %c0_0] : memref<16x128xf32, #tpu.memory_space<vmem>>, vector<16x128xf32>
    %365 = vector.broadcast %0 : f32 to vector<16x128xf32>
    %366 = arith.mulf %364, %365 : vector<16x128xf32>
    %367 = vector.broadcast %10 : f32 to vector<16x128xf32>
    %368 = arith.addf %366, %367 : vector<16x128xf32>
    %369 = vector.broadcast %1 : f32 to vector<16x128xf32>
    %370 = arith.mulf %364, %369 : vector<16x128xf32>
    %371 = vector.broadcast %11 : f32 to vector<16x128xf32>
    %372 = arith.addf %370, %371 : vector<16x128xf32>
    %373 = vector.broadcast %2 : f32 to vector<16x128xf32>
    %374 = arith.mulf %364, %373 : vector<16x128xf32>
    %375 = vector.broadcast %12 : f32 to vector<16x128xf32>
    %376 = arith.addf %374, %375 : vector<16x128xf32>
    %377 = vector.broadcast %3 : f32 to vector<16x128xf32>
    %378 = arith.mulf %364, %377 : vector<16x128xf32>
    %379 = vector.broadcast %13 : f32 to vector<16x128xf32>
    %380 = arith.addf %378, %379 : vector<16x128xf32>
    %381 = vector.broadcast %4 : f32 to vector<16x128xf32>
    %382 = arith.mulf %364, %381 : vector<16x128xf32>
    %383 = vector.broadcast %14 : f32 to vector<16x128xf32>
    %384 = arith.addf %382, %383 : vector<16x128xf32>
    %385 = vector.broadcast %5 : f32 to vector<16x128xf32>
    %386 = arith.mulf %364, %385 : vector<16x128xf32>
    %387 = vector.broadcast %15 : f32 to vector<16x128xf32>
    %388 = arith.addf %386, %387 : vector<16x128xf32>
    %389 = vector.broadcast %6 : f32 to vector<16x128xf32>
    %390 = arith.mulf %364, %389 : vector<16x128xf32>
    %391 = vector.broadcast %16 : f32 to vector<16x128xf32>
    %392 = arith.addf %390, %391 : vector<16x128xf32>
    %393 = vector.broadcast %7 : f32 to vector<16x128xf32>
    %394 = arith.mulf %364, %393 : vector<16x128xf32>
    %395 = vector.broadcast %17 : f32 to vector<16x128xf32>
    %396 = arith.addf %394, %395 : vector<16x128xf32>
    %397 = vector.broadcast %8 : f32 to vector<16x128xf32>
    %398 = arith.mulf %364, %397 : vector<16x128xf32>
    %399 = vector.broadcast %18 : f32 to vector<16x128xf32>
    %400 = arith.addf %398, %399 : vector<16x128xf32>
    %401 = vector.broadcast %9 : f32 to vector<16x128xf32>
    %402 = arith.mulf %364, %401 : vector<16x128xf32>
    %403 = vector.broadcast %19 : f32 to vector<16x128xf32>
    %404 = arith.addf %402, %403 : vector<16x128xf32>
    %cst = arith.constant 0.000000e+00 : f32
    %405 = vector.broadcast %cst : f32 to vector<16x128xf32>
    %406 = arith.cmpf ogt, %368, %405 : vector<16x128xf32>
    %407 = math.exp %368 : vector<16x128xf32>
    %cst_1 = arith.constant 1.000000e+00 : f32
    %408 = vector.broadcast %cst_1 : f32 to vector<16x128xf32>
    %409 = arith.subf %407, %408 : vector<16x128xf32>
    %410 = arith.select %406, %368, %409 : vector<16x128xi1>, vector<16x128xf32>
    %cst_2 = arith.constant 0.000000e+00 : f32
    %411 = vector.broadcast %cst_2 : f32 to vector<16x128xf32>
    %412 = arith.cmpf ogt, %372, %411 : vector<16x128xf32>
    %413 = math.exp %372 : vector<16x128xf32>
    %cst_3 = arith.constant 1.000000e+00 : f32
    %414 = vector.broadcast %cst_3 : f32 to vector<16x128xf32>
    %415 = arith.subf %413, %414 : vector<16x128xf32>
    %416 = arith.select %412, %372, %415 : vector<16x128xi1>, vector<16x128xf32>
    %cst_4 = arith.constant 0.000000e+00 : f32
    %417 = vector.broadcast %cst_4 : f32 to vector<16x128xf32>
    %418 = arith.cmpf ogt, %376, %417 : vector<16x128xf32>
    %419 = math.exp %376 : vector<16x128xf32>
    %cst_5 = arith.constant 1.000000e+00 : f32
    %420 = vector.broadcast %cst_5 : f32 to vector<16x128xf32>
    %421 = arith.subf %419, %420 : vector<16x128xf32>
    %422 = arith.select %418, %376, %421 : vector<16x128xi1>, vector<16x128xf32>
    %cst_6 = arith.constant 0.000000e+00 : f32
    %423 = vector.broadcast %cst_6 : f32 to vector<16x128xf32>
    %424 = arith.cmpf ogt, %380, %423 : vector<16x128xf32>
    %425 = math.exp %380 : vector<16x128xf32>
    %cst_7 = arith.constant 1.000000e+00 : f32
    %426 = vector.broadcast %cst_7 : f32 to vector<16x128xf32>
    %427 = arith.subf %425, %426 : vector<16x128xf32>
    %428 = arith.select %424, %380, %427 : vector<16x128xi1>, vector<16x128xf32>
    %cst_8 = arith.constant 0.000000e+00 : f32
    %429 = vector.broadcast %cst_8 : f32 to vector<16x128xf32>
    %430 = arith.cmpf ogt, %384, %429 : vector<16x128xf32>
    %431 = math.exp %384 : vector<16x128xf32>
    %cst_9 = arith.constant 1.000000e+00 : f32
    %432 = vector.broadcast %cst_9 : f32 to vector<16x128xf32>
    %433 = arith.subf %431, %432 : vector<16x128xf32>
    %434 = arith.select %430, %384, %433 : vector<16x128xi1>, vector<16x128xf32>
    %cst_10 = arith.constant 0.000000e+00 : f32
    %435 = vector.broadcast %cst_10 : f32 to vector<16x128xf32>
    %436 = arith.cmpf ogt, %388, %435 : vector<16x128xf32>
    %437 = math.exp %388 : vector<16x128xf32>
    %cst_11 = arith.constant 1.000000e+00 : f32
    %438 = vector.broadcast %cst_11 : f32 to vector<16x128xf32>
    %439 = arith.subf %437, %438 : vector<16x128xf32>
    %440 = arith.select %436, %388, %439 : vector<16x128xi1>, vector<16x128xf32>
    %cst_12 = arith.constant 0.000000e+00 : f32
    %441 = vector.broadcast %cst_12 : f32 to vector<16x128xf32>
    %442 = arith.cmpf ogt, %392, %441 : vector<16x128xf32>
    %443 = math.exp %392 : vector<16x128xf32>
    %cst_13 = arith.constant 1.000000e+00 : f32
    %444 = vector.broadcast %cst_13 : f32 to vector<16x128xf32>
    %445 = arith.subf %443, %444 : vector<16x128xf32>
    %446 = arith.select %442, %392, %445 : vector<16x128xi1>, vector<16x128xf32>
    %cst_14 = arith.constant 0.000000e+00 : f32
    %447 = vector.broadcast %cst_14 : f32 to vector<16x128xf32>
    %448 = arith.cmpf ogt, %396, %447 : vector<16x128xf32>
    %449 = math.exp %396 : vector<16x128xf32>
    %cst_15 = arith.constant 1.000000e+00 : f32
    %450 = vector.broadcast %cst_15 : f32 to vector<16x128xf32>
    %451 = arith.subf %449, %450 : vector<16x128xf32>
    %452 = arith.select %448, %396, %451 : vector<16x128xi1>, vector<16x128xf32>
    %cst_16 = arith.constant 0.000000e+00 : f32
    %453 = vector.broadcast %cst_16 : f32 to vector<16x128xf32>
    %454 = arith.cmpf ogt, %400, %453 : vector<16x128xf32>
    %455 = math.exp %400 : vector<16x128xf32>
    %cst_17 = arith.constant 1.000000e+00 : f32
    %456 = vector.broadcast %cst_17 : f32 to vector<16x128xf32>
    %457 = arith.subf %455, %456 : vector<16x128xf32>
    %458 = arith.select %454, %400, %457 : vector<16x128xi1>, vector<16x128xf32>
    %cst_18 = arith.constant 0.000000e+00 : f32
    %459 = vector.broadcast %cst_18 : f32 to vector<16x128xf32>
    %460 = arith.cmpf ogt, %404, %459 : vector<16x128xf32>
    %461 = math.exp %404 : vector<16x128xf32>
    %cst_19 = arith.constant 1.000000e+00 : f32
    %462 = vector.broadcast %cst_19 : f32 to vector<16x128xf32>
    %463 = arith.subf %461, %462 : vector<16x128xf32>
    %464 = arith.select %460, %404, %463 : vector<16x128xi1>, vector<16x128xf32>
    %465 = vector.broadcast %20 : f32 to vector<16x128xf32>
    %466 = arith.mulf %410, %465 : vector<16x128xf32>
    %467 = vector.broadcast %120 : f32 to vector<16x128xf32>
    %468 = arith.addf %466, %467 : vector<16x128xf32>
    %469 = vector.broadcast %30 : f32 to vector<16x128xf32>
    %470 = arith.mulf %416, %469 : vector<16x128xf32>
    %471 = arith.addf %468, %470 : vector<16x128xf32>
    %472 = vector.broadcast %40 : f32 to vector<16x128xf32>
    %473 = arith.mulf %422, %472 : vector<16x128xf32>
    %474 = arith.addf %471, %473 : vector<16x128xf32>
    %475 = vector.broadcast %50 : f32 to vector<16x128xf32>
    %476 = arith.mulf %428, %475 : vector<16x128xf32>
    %477 = arith.addf %474, %476 : vector<16x128xf32>
    %478 = vector.broadcast %60 : f32 to vector<16x128xf32>
    %479 = arith.mulf %434, %478 : vector<16x128xf32>
    %480 = arith.addf %477, %479 : vector<16x128xf32>
    %481 = vector.broadcast %70 : f32 to vector<16x128xf32>
    %482 = arith.mulf %440, %481 : vector<16x128xf32>
    %483 = arith.addf %480, %482 : vector<16x128xf32>
    %484 = vector.broadcast %80 : f32 to vector<16x128xf32>
    %485 = arith.mulf %446, %484 : vector<16x128xf32>
    %486 = arith.addf %483, %485 : vector<16x128xf32>
    %487 = vector.broadcast %90 : f32 to vector<16x128xf32>
    %488 = arith.mulf %452, %487 : vector<16x128xf32>
    %489 = arith.addf %486, %488 : vector<16x128xf32>
    %490 = vector.broadcast %100 : f32 to vector<16x128xf32>
    %491 = arith.mulf %458, %490 : vector<16x128xf32>
    %492 = arith.addf %489, %491 : vector<16x128xf32>
    %493 = vector.broadcast %110 : f32 to vector<16x128xf32>
    %494 = arith.mulf %464, %493 : vector<16x128xf32>
    %495 = arith.addf %492, %494 : vector<16x128xf32>
    %496 = vector.broadcast %21 : f32 to vector<16x128xf32>
    %497 = arith.mulf %410, %496 : vector<16x128xf32>
    %498 = vector.broadcast %121 : f32 to vector<16x128xf32>
    %499 = arith.addf %497, %498 : vector<16x128xf32>
    %500 = vector.broadcast %31 : f32 to vector<16x128xf32>
    %501 = arith.mulf %416, %500 : vector<16x128xf32>
    %502 = arith.addf %499, %501 : vector<16x128xf32>
    %503 = vector.broadcast %41 : f32 to vector<16x128xf32>
    %504 = arith.mulf %422, %503 : vector<16x128xf32>
    %505 = arith.addf %502, %504 : vector<16x128xf32>
    %506 = vector.broadcast %51 : f32 to vector<16x128xf32>
    %507 = arith.mulf %428, %506 : vector<16x128xf32>
    %508 = arith.addf %505, %507 : vector<16x128xf32>
    %509 = vector.broadcast %61 : f32 to vector<16x128xf32>
    %510 = arith.mulf %434, %509 : vector<16x128xf32>
    %511 = arith.addf %508, %510 : vector<16x128xf32>
    %512 = vector.broadcast %71 : f32 to vector<16x128xf32>
    %513 = arith.mulf %440, %512 : vector<16x128xf32>
    %514 = arith.addf %511, %513 : vector<16x128xf32>
    %515 = vector.broadcast %81 : f32 to vector<16x128xf32>
    %516 = arith.mulf %446, %515 : vector<16x128xf32>
    %517 = arith.addf %514, %516 : vector<16x128xf32>
    %518 = vector.broadcast %91 : f32 to vector<16x128xf32>
    %519 = arith.mulf %452, %518 : vector<16x128xf32>
    %520 = arith.addf %517, %519 : vector<16x128xf32>
    %521 = vector.broadcast %101 : f32 to vector<16x128xf32>
    %522 = arith.mulf %458, %521 : vector<16x128xf32>
    %523 = arith.addf %520, %522 : vector<16x128xf32>
    %524 = vector.broadcast %111 : f32 to vector<16x128xf32>
    %525 = arith.mulf %464, %524 : vector<16x128xf32>
    %526 = arith.addf %523, %525 : vector<16x128xf32>
    %527 = vector.broadcast %22 : f32 to vector<16x128xf32>
    %528 = arith.mulf %410, %527 : vector<16x128xf32>
    %529 = vector.broadcast %122 : f32 to vector<16x128xf32>
    %530 = arith.addf %528, %529 : vector<16x128xf32>
    %531 = vector.broadcast %32 : f32 to vector<16x128xf32>
    %532 = arith.mulf %416, %531 : vector<16x128xf32>
    %533 = arith.addf %530, %532 : vector<16x128xf32>
    %534 = vector.broadcast %42 : f32 to vector<16x128xf32>
    %535 = arith.mulf %422, %534 : vector<16x128xf32>
    %536 = arith.addf %533, %535 : vector<16x128xf32>
    %537 = vector.broadcast %52 : f32 to vector<16x128xf32>
    %538 = arith.mulf %428, %537 : vector<16x128xf32>
    %539 = arith.addf %536, %538 : vector<16x128xf32>
    %540 = vector.broadcast %62 : f32 to vector<16x128xf32>
    %541 = arith.mulf %434, %540 : vector<16x128xf32>
    %542 = arith.addf %539, %541 : vector<16x128xf32>
    %543 = vector.broadcast %72 : f32 to vector<16x128xf32>
    %544 = arith.mulf %440, %543 : vector<16x128xf32>
    %545 = arith.addf %542, %544 : vector<16x128xf32>
    %546 = vector.broadcast %82 : f32 to vector<16x128xf32>
    %547 = arith.mulf %446, %546 : vector<16x128xf32>
    %548 = arith.addf %545, %547 : vector<16x128xf32>
    %549 = vector.broadcast %92 : f32 to vector<16x128xf32>
    %550 = arith.mulf %452, %549 : vector<16x128xf32>
    %551 = arith.addf %548, %550 : vector<16x128xf32>
    %552 = vector.broadcast %102 : f32 to vector<16x128xf32>
    %553 = arith.mulf %458, %552 : vector<16x128xf32>
    %554 = arith.addf %551, %553 : vector<16x128xf32>
    %555 = vector.broadcast %112 : f32 to vector<16x128xf32>
    %556 = arith.mulf %464, %555 : vector<16x128xf32>
    %557 = arith.addf %554, %556 : vector<16x128xf32>
    %558 = vector.broadcast %23 : f32 to vector<16x128xf32>
    %559 = arith.mulf %410, %558 : vector<16x128xf32>
    %560 = vector.broadcast %123 : f32 to vector<16x128xf32>
    %561 = arith.addf %559, %560 : vector<16x128xf32>
    %562 = vector.broadcast %33 : f32 to vector<16x128xf32>
    %563 = arith.mulf %416, %562 : vector<16x128xf32>
    %564 = arith.addf %561, %563 : vector<16x128xf32>
    %565 = vector.broadcast %43 : f32 to vector<16x128xf32>
    %566 = arith.mulf %422, %565 : vector<16x128xf32>
    %567 = arith.addf %564, %566 : vector<16x128xf32>
    %568 = vector.broadcast %53 : f32 to vector<16x128xf32>
    %569 = arith.mulf %428, %568 : vector<16x128xf32>
    %570 = arith.addf %567, %569 : vector<16x128xf32>
    %571 = vector.broadcast %63 : f32 to vector<16x128xf32>
    %572 = arith.mulf %434, %571 : vector<16x128xf32>
    %573 = arith.addf %570, %572 : vector<16x128xf32>
    %574 = vector.broadcast %73 : f32 to vector<16x128xf32>
    %575 = arith.mulf %440, %574 : vector<16x128xf32>
    %576 = arith.addf %573, %575 : vector<16x128xf32>
    %577 = vector.broadcast %83 : f32 to vector<16x128xf32>
    %578 = arith.mulf %446, %577 : vector<16x128xf32>
    %579 = arith.addf %576, %578 : vector<16x128xf32>
    %580 = vector.broadcast %93 : f32 to vector<16x128xf32>
    %581 = arith.mulf %452, %580 : vector<16x128xf32>
    %582 = arith.addf %579, %581 : vector<16x128xf32>
    %583 = vector.broadcast %103 : f32 to vector<16x128xf32>
    %584 = arith.mulf %458, %583 : vector<16x128xf32>
    %585 = arith.addf %582, %584 : vector<16x128xf32>
    %586 = vector.broadcast %113 : f32 to vector<16x128xf32>
    %587 = arith.mulf %464, %586 : vector<16x128xf32>
    %588 = arith.addf %585, %587 : vector<16x128xf32>
    %589 = vector.broadcast %24 : f32 to vector<16x128xf32>
    %590 = arith.mulf %410, %589 : vector<16x128xf32>
    %591 = vector.broadcast %124 : f32 to vector<16x128xf32>
    %592 = arith.addf %590, %591 : vector<16x128xf32>
    %593 = vector.broadcast %34 : f32 to vector<16x128xf32>
    %594 = arith.mulf %416, %593 : vector<16x128xf32>
    %595 = arith.addf %592, %594 : vector<16x128xf32>
    %596 = vector.broadcast %44 : f32 to vector<16x128xf32>
    %597 = arith.mulf %422, %596 : vector<16x128xf32>
    %598 = arith.addf %595, %597 : vector<16x128xf32>
    %599 = vector.broadcast %54 : f32 to vector<16x128xf32>
    %600 = arith.mulf %428, %599 : vector<16x128xf32>
    %601 = arith.addf %598, %600 : vector<16x128xf32>
    %602 = vector.broadcast %64 : f32 to vector<16x128xf32>
    %603 = arith.mulf %434, %602 : vector<16x128xf32>
    %604 = arith.addf %601, %603 : vector<16x128xf32>
    %605 = vector.broadcast %74 : f32 to vector<16x128xf32>
    %606 = arith.mulf %440, %605 : vector<16x128xf32>
    %607 = arith.addf %604, %606 : vector<16x128xf32>
    %608 = vector.broadcast %84 : f32 to vector<16x128xf32>
    %609 = arith.mulf %446, %608 : vector<16x128xf32>
    %610 = arith.addf %607, %609 : vector<16x128xf32>
    %611 = vector.broadcast %94 : f32 to vector<16x128xf32>
    %612 = arith.mulf %452, %611 : vector<16x128xf32>
    %613 = arith.addf %610, %612 : vector<16x128xf32>
    %614 = vector.broadcast %104 : f32 to vector<16x128xf32>
    %615 = arith.mulf %458, %614 : vector<16x128xf32>
    %616 = arith.addf %613, %615 : vector<16x128xf32>
    %617 = vector.broadcast %114 : f32 to vector<16x128xf32>
    %618 = arith.mulf %464, %617 : vector<16x128xf32>
    %619 = arith.addf %616, %618 : vector<16x128xf32>
    %620 = vector.broadcast %25 : f32 to vector<16x128xf32>
    %621 = arith.mulf %410, %620 : vector<16x128xf32>
    %622 = vector.broadcast %125 : f32 to vector<16x128xf32>
    %623 = arith.addf %621, %622 : vector<16x128xf32>
    %624 = vector.broadcast %35 : f32 to vector<16x128xf32>
    %625 = arith.mulf %416, %624 : vector<16x128xf32>
    %626 = arith.addf %623, %625 : vector<16x128xf32>
    %627 = vector.broadcast %45 : f32 to vector<16x128xf32>
    %628 = arith.mulf %422, %627 : vector<16x128xf32>
    %629 = arith.addf %626, %628 : vector<16x128xf32>
    %630 = vector.broadcast %55 : f32 to vector<16x128xf32>
    %631 = arith.mulf %428, %630 : vector<16x128xf32>
    %632 = arith.addf %629, %631 : vector<16x128xf32>
    %633 = vector.broadcast %65 : f32 to vector<16x128xf32>
    %634 = arith.mulf %434, %633 : vector<16x128xf32>
    %635 = arith.addf %632, %634 : vector<16x128xf32>
    %636 = vector.broadcast %75 : f32 to vector<16x128xf32>
    %637 = arith.mulf %440, %636 : vector<16x128xf32>
    %638 = arith.addf %635, %637 : vector<16x128xf32>
    %639 = vector.broadcast %85 : f32 to vector<16x128xf32>
    %640 = arith.mulf %446, %639 : vector<16x128xf32>
    %641 = arith.addf %638, %640 : vector<16x128xf32>
    %642 = vector.broadcast %95 : f32 to vector<16x128xf32>
    %643 = arith.mulf %452, %642 : vector<16x128xf32>
    %644 = arith.addf %641, %643 : vector<16x128xf32>
    %645 = vector.broadcast %105 : f32 to vector<16x128xf32>
    %646 = arith.mulf %458, %645 : vector<16x128xf32>
    %647 = arith.addf %644, %646 : vector<16x128xf32>
    %648 = vector.broadcast %115 : f32 to vector<16x128xf32>
    %649 = arith.mulf %464, %648 : vector<16x128xf32>
    %650 = arith.addf %647, %649 : vector<16x128xf32>
    %651 = vector.broadcast %26 : f32 to vector<16x128xf32>
    %652 = arith.mulf %410, %651 : vector<16x128xf32>
    %653 = vector.broadcast %126 : f32 to vector<16x128xf32>
    %654 = arith.addf %652, %653 : vector<16x128xf32>
    %655 = vector.broadcast %36 : f32 to vector<16x128xf32>
    %656 = arith.mulf %416, %655 : vector<16x128xf32>
    %657 = arith.addf %654, %656 : vector<16x128xf32>
    %658 = vector.broadcast %46 : f32 to vector<16x128xf32>
    %659 = arith.mulf %422, %658 : vector<16x128xf32>
    %660 = arith.addf %657, %659 : vector<16x128xf32>
    %661 = vector.broadcast %56 : f32 to vector<16x128xf32>
    %662 = arith.mulf %428, %661 : vector<16x128xf32>
    %663 = arith.addf %660, %662 : vector<16x128xf32>
    %664 = vector.broadcast %66 : f32 to vector<16x128xf32>
    %665 = arith.mulf %434, %664 : vector<16x128xf32>
    %666 = arith.addf %663, %665 : vector<16x128xf32>
    %667 = vector.broadcast %76 : f32 to vector<16x128xf32>
    %668 = arith.mulf %440, %667 : vector<16x128xf32>
    %669 = arith.addf %666, %668 : vector<16x128xf32>
    %670 = vector.broadcast %86 : f32 to vector<16x128xf32>
    %671 = arith.mulf %446, %670 : vector<16x128xf32>
    %672 = arith.addf %669, %671 : vector<16x128xf32>
    %673 = vector.broadcast %96 : f32 to vector<16x128xf32>
    %674 = arith.mulf %452, %673 : vector<16x128xf32>
    %675 = arith.addf %672, %674 : vector<16x128xf32>
    %676 = vector.broadcast %106 : f32 to vector<16x128xf32>
    %677 = arith.mulf %458, %676 : vector<16x128xf32>
    %678 = arith.addf %675, %677 : vector<16x128xf32>
    %679 = vector.broadcast %116 : f32 to vector<16x128xf32>
    %680 = arith.mulf %464, %679 : vector<16x128xf32>
    %681 = arith.addf %678, %680 : vector<16x128xf32>
    %682 = vector.broadcast %27 : f32 to vector<16x128xf32>
    %683 = arith.mulf %410, %682 : vector<16x128xf32>
    %684 = vector.broadcast %127 : f32 to vector<16x128xf32>
    %685 = arith.addf %683, %684 : vector<16x128xf32>
    %686 = vector.broadcast %37 : f32 to vector<16x128xf32>
    %687 = arith.mulf %416, %686 : vector<16x128xf32>
    %688 = arith.addf %685, %687 : vector<16x128xf32>
    %689 = vector.broadcast %47 : f32 to vector<16x128xf32>
    %690 = arith.mulf %422, %689 : vector<16x128xf32>
    %691 = arith.addf %688, %690 : vector<16x128xf32>
    %692 = vector.broadcast %57 : f32 to vector<16x128xf32>
    %693 = arith.mulf %428, %692 : vector<16x128xf32>
    %694 = arith.addf %691, %693 : vector<16x128xf32>
    %695 = vector.broadcast %67 : f32 to vector<16x128xf32>
    %696 = arith.mulf %434, %695 : vector<16x128xf32>
    %697 = arith.addf %694, %696 : vector<16x128xf32>
    %698 = vector.broadcast %77 : f32 to vector<16x128xf32>
    %699 = arith.mulf %440, %698 : vector<16x128xf32>
    %700 = arith.addf %697, %699 : vector<16x128xf32>
    %701 = vector.broadcast %87 : f32 to vector<16x128xf32>
    %702 = arith.mulf %446, %701 : vector<16x128xf32>
    %703 = arith.addf %700, %702 : vector<16x128xf32>
    %704 = vector.broadcast %97 : f32 to vector<16x128xf32>
    %705 = arith.mulf %452, %704 : vector<16x128xf32>
    %706 = arith.addf %703, %705 : vector<16x128xf32>
    %707 = vector.broadcast %107 : f32 to vector<16x128xf32>
    %708 = arith.mulf %458, %707 : vector<16x128xf32>
    %709 = arith.addf %706, %708 : vector<16x128xf32>
    %710 = vector.broadcast %117 : f32 to vector<16x128xf32>
    %711 = arith.mulf %464, %710 : vector<16x128xf32>
    %712 = arith.addf %709, %711 : vector<16x128xf32>
    %713 = vector.broadcast %28 : f32 to vector<16x128xf32>
    %714 = arith.mulf %410, %713 : vector<16x128xf32>
    %715 = vector.broadcast %128 : f32 to vector<16x128xf32>
    %716 = arith.addf %714, %715 : vector<16x128xf32>
    %717 = vector.broadcast %38 : f32 to vector<16x128xf32>
    %718 = arith.mulf %416, %717 : vector<16x128xf32>
    %719 = arith.addf %716, %718 : vector<16x128xf32>
    %720 = vector.broadcast %48 : f32 to vector<16x128xf32>
    %721 = arith.mulf %422, %720 : vector<16x128xf32>
    %722 = arith.addf %719, %721 : vector<16x128xf32>
    %723 = vector.broadcast %58 : f32 to vector<16x128xf32>
    %724 = arith.mulf %428, %723 : vector<16x128xf32>
    %725 = arith.addf %722, %724 : vector<16x128xf32>
    %726 = vector.broadcast %68 : f32 to vector<16x128xf32>
    %727 = arith.mulf %434, %726 : vector<16x128xf32>
    %728 = arith.addf %725, %727 : vector<16x128xf32>
    %729 = vector.broadcast %78 : f32 to vector<16x128xf32>
    %730 = arith.mulf %440, %729 : vector<16x128xf32>
    %731 = arith.addf %728, %730 : vector<16x128xf32>
    %732 = vector.broadcast %88 : f32 to vector<16x128xf32>
    %733 = arith.mulf %446, %732 : vector<16x128xf32>
    %734 = arith.addf %731, %733 : vector<16x128xf32>
    %735 = vector.broadcast %98 : f32 to vector<16x128xf32>
    %736 = arith.mulf %452, %735 : vector<16x128xf32>
    %737 = arith.addf %734, %736 : vector<16x128xf32>
    %738 = vector.broadcast %108 : f32 to vector<16x128xf32>
    %739 = arith.mulf %458, %738 : vector<16x128xf32>
    %740 = arith.addf %737, %739 : vector<16x128xf32>
    %741 = vector.broadcast %118 : f32 to vector<16x128xf32>
    %742 = arith.mulf %464, %741 : vector<16x128xf32>
    %743 = arith.addf %740, %742 : vector<16x128xf32>
    %744 = vector.broadcast %29 : f32 to vector<16x128xf32>
    %745 = arith.mulf %410, %744 : vector<16x128xf32>
    %746 = vector.broadcast %129 : f32 to vector<16x128xf32>
    %747 = arith.addf %745, %746 : vector<16x128xf32>
    %748 = vector.broadcast %39 : f32 to vector<16x128xf32>
    %749 = arith.mulf %416, %748 : vector<16x128xf32>
    %750 = arith.addf %747, %749 : vector<16x128xf32>
    %751 = vector.broadcast %49 : f32 to vector<16x128xf32>
    %752 = arith.mulf %422, %751 : vector<16x128xf32>
    %753 = arith.addf %750, %752 : vector<16x128xf32>
    %754 = vector.broadcast %59 : f32 to vector<16x128xf32>
    %755 = arith.mulf %428, %754 : vector<16x128xf32>
    %756 = arith.addf %753, %755 : vector<16x128xf32>
    %757 = vector.broadcast %69 : f32 to vector<16x128xf32>
    %758 = arith.mulf %434, %757 : vector<16x128xf32>
    %759 = arith.addf %756, %758 : vector<16x128xf32>
    %760 = vector.broadcast %79 : f32 to vector<16x128xf32>
    %761 = arith.mulf %440, %760 : vector<16x128xf32>
    %762 = arith.addf %759, %761 : vector<16x128xf32>
    %763 = vector.broadcast %89 : f32 to vector<16x128xf32>
    %764 = arith.mulf %446, %763 : vector<16x128xf32>
    %765 = arith.addf %762, %764 : vector<16x128xf32>
    %766 = vector.broadcast %99 : f32 to vector<16x128xf32>
    %767 = arith.mulf %452, %766 : vector<16x128xf32>
    %768 = arith.addf %765, %767 : vector<16x128xf32>
    %769 = vector.broadcast %109 : f32 to vector<16x128xf32>
    %770 = arith.mulf %458, %769 : vector<16x128xf32>
    %771 = arith.addf %768, %770 : vector<16x128xf32>
    %772 = vector.broadcast %119 : f32 to vector<16x128xf32>
    %773 = arith.mulf %464, %772 : vector<16x128xf32>
    %774 = arith.addf %771, %773 : vector<16x128xf32>
    %cst_20 = arith.constant 0.000000e+00 : f32
    %775 = vector.broadcast %cst_20 : f32 to vector<16x128xf32>
    %776 = arith.cmpf ogt, %495, %775 : vector<16x128xf32>
    %777 = math.exp %495 : vector<16x128xf32>
    %cst_21 = arith.constant 1.000000e+00 : f32
    %778 = vector.broadcast %cst_21 : f32 to vector<16x128xf32>
    %779 = arith.subf %777, %778 : vector<16x128xf32>
    %780 = arith.select %776, %495, %779 : vector<16x128xi1>, vector<16x128xf32>
    %cst_22 = arith.constant 0.000000e+00 : f32
    %781 = vector.broadcast %cst_22 : f32 to vector<16x128xf32>
    %782 = arith.cmpf ogt, %526, %781 : vector<16x128xf32>
    %783 = math.exp %526 : vector<16x128xf32>
    %cst_23 = arith.constant 1.000000e+00 : f32
    %784 = vector.broadcast %cst_23 : f32 to vector<16x128xf32>
    %785 = arith.subf %783, %784 : vector<16x128xf32>
    %786 = arith.select %782, %526, %785 : vector<16x128xi1>, vector<16x128xf32>
    %cst_24 = arith.constant 0.000000e+00 : f32
    %787 = vector.broadcast %cst_24 : f32 to vector<16x128xf32>
    %788 = arith.cmpf ogt, %557, %787 : vector<16x128xf32>
    %789 = math.exp %557 : vector<16x128xf32>
    %cst_25 = arith.constant 1.000000e+00 : f32
    %790 = vector.broadcast %cst_25 : f32 to vector<16x128xf32>
    %791 = arith.subf %789, %790 : vector<16x128xf32>
    %792 = arith.select %788, %557, %791 : vector<16x128xi1>, vector<16x128xf32>
    %cst_26 = arith.constant 0.000000e+00 : f32
    %793 = vector.broadcast %cst_26 : f32 to vector<16x128xf32>
    %794 = arith.cmpf ogt, %588, %793 : vector<16x128xf32>
    %795 = math.exp %588 : vector<16x128xf32>
    %cst_27 = arith.constant 1.000000e+00 : f32
    %796 = vector.broadcast %cst_27 : f32 to vector<16x128xf32>
    %797 = arith.subf %795, %796 : vector<16x128xf32>
    %798 = arith.select %794, %588, %797 : vector<16x128xi1>, vector<16x128xf32>
    %cst_28 = arith.constant 0.000000e+00 : f32
    %799 = vector.broadcast %cst_28 : f32 to vector<16x128xf32>
    %800 = arith.cmpf ogt, %619, %799 : vector<16x128xf32>
    %801 = math.exp %619 : vector<16x128xf32>
    %cst_29 = arith.constant 1.000000e+00 : f32
    %802 = vector.broadcast %cst_29 : f32 to vector<16x128xf32>
    %803 = arith.subf %801, %802 : vector<16x128xf32>
    %804 = arith.select %800, %619, %803 : vector<16x128xi1>, vector<16x128xf32>
    %cst_30 = arith.constant 0.000000e+00 : f32
    %805 = vector.broadcast %cst_30 : f32 to vector<16x128xf32>
    %806 = arith.cmpf ogt, %650, %805 : vector<16x128xf32>
    %807 = math.exp %650 : vector<16x128xf32>
    %cst_31 = arith.constant 1.000000e+00 : f32
    %808 = vector.broadcast %cst_31 : f32 to vector<16x128xf32>
    %809 = arith.subf %807, %808 : vector<16x128xf32>
    %810 = arith.select %806, %650, %809 : vector<16x128xi1>, vector<16x128xf32>
    %cst_32 = arith.constant 0.000000e+00 : f32
    %811 = vector.broadcast %cst_32 : f32 to vector<16x128xf32>
    %812 = arith.cmpf ogt, %681, %811 : vector<16x128xf32>
    %813 = math.exp %681 : vector<16x128xf32>
    %cst_33 = arith.constant 1.000000e+00 : f32
    %814 = vector.broadcast %cst_33 : f32 to vector<16x128xf32>
    %815 = arith.subf %813, %814 : vector<16x128xf32>
    %816 = arith.select %812, %681, %815 : vector<16x128xi1>, vector<16x128xf32>
    %cst_34 = arith.constant 0.000000e+00 : f32
    %817 = vector.broadcast %cst_34 : f32 to vector<16x128xf32>
    %818 = arith.cmpf ogt, %712, %817 : vector<16x128xf32>
    %819 = math.exp %712 : vector<16x128xf32>
    %cst_35 = arith.constant 1.000000e+00 : f32
    %820 = vector.broadcast %cst_35 : f32 to vector<16x128xf32>
    %821 = arith.subf %819, %820 : vector<16x128xf32>
    %822 = arith.select %818, %712, %821 : vector<16x128xi1>, vector<16x128xf32>
    %cst_36 = arith.constant 0.000000e+00 : f32
    %823 = vector.broadcast %cst_36 : f32 to vector<16x128xf32>
    %824 = arith.cmpf ogt, %743, %823 : vector<16x128xf32>
    %825 = math.exp %743 : vector<16x128xf32>
    %cst_37 = arith.constant 1.000000e+00 : f32
    %826 = vector.broadcast %cst_37 : f32 to vector<16x128xf32>
    %827 = arith.subf %825, %826 : vector<16x128xf32>
    %828 = arith.select %824, %743, %827 : vector<16x128xi1>, vector<16x128xf32>
    %cst_38 = arith.constant 0.000000e+00 : f32
    %829 = vector.broadcast %cst_38 : f32 to vector<16x128xf32>
    %830 = arith.cmpf ogt, %774, %829 : vector<16x128xf32>
    %831 = math.exp %774 : vector<16x128xf32>
    %cst_39 = arith.constant 1.000000e+00 : f32
    %832 = vector.broadcast %cst_39 : f32 to vector<16x128xf32>
    %833 = arith.subf %831, %832 : vector<16x128xf32>
    %834 = arith.select %830, %774, %833 : vector<16x128xi1>, vector<16x128xf32>
    %835 = vector.broadcast %130 : f32 to vector<16x128xf32>
    %836 = arith.mulf %780, %835 : vector<16x128xf32>
    %837 = vector.broadcast %230 : f32 to vector<16x128xf32>
    %838 = arith.addf %836, %837 : vector<16x128xf32>
    %839 = vector.broadcast %140 : f32 to vector<16x128xf32>
    %840 = arith.mulf %786, %839 : vector<16x128xf32>
    %841 = arith.addf %838, %840 : vector<16x128xf32>
    %842 = vector.broadcast %150 : f32 to vector<16x128xf32>
    %843 = arith.mulf %792, %842 : vector<16x128xf32>
    %844 = arith.addf %841, %843 : vector<16x128xf32>
    %845 = vector.broadcast %160 : f32 to vector<16x128xf32>
    %846 = arith.mulf %798, %845 : vector<16x128xf32>
    %847 = arith.addf %844, %846 : vector<16x128xf32>
    %848 = vector.broadcast %170 : f32 to vector<16x128xf32>
    %849 = arith.mulf %804, %848 : vector<16x128xf32>
    %850 = arith.addf %847, %849 : vector<16x128xf32>
    %851 = vector.broadcast %180 : f32 to vector<16x128xf32>
    %852 = arith.mulf %810, %851 : vector<16x128xf32>
    %853 = arith.addf %850, %852 : vector<16x128xf32>
    %854 = vector.broadcast %190 : f32 to vector<16x128xf32>
    %855 = arith.mulf %816, %854 : vector<16x128xf32>
    %856 = arith.addf %853, %855 : vector<16x128xf32>
    %857 = vector.broadcast %200 : f32 to vector<16x128xf32>
    %858 = arith.mulf %822, %857 : vector<16x128xf32>
    %859 = arith.addf %856, %858 : vector<16x128xf32>
    %860 = vector.broadcast %210 : f32 to vector<16x128xf32>
    %861 = arith.mulf %828, %860 : vector<16x128xf32>
    %862 = arith.addf %859, %861 : vector<16x128xf32>
    %863 = vector.broadcast %220 : f32 to vector<16x128xf32>
    %864 = arith.mulf %834, %863 : vector<16x128xf32>
    %865 = arith.addf %862, %864 : vector<16x128xf32>
    %866 = vector.broadcast %131 : f32 to vector<16x128xf32>
    %867 = arith.mulf %780, %866 : vector<16x128xf32>
    %868 = vector.broadcast %231 : f32 to vector<16x128xf32>
    %869 = arith.addf %867, %868 : vector<16x128xf32>
    %870 = vector.broadcast %141 : f32 to vector<16x128xf32>
    %871 = arith.mulf %786, %870 : vector<16x128xf32>
    %872 = arith.addf %869, %871 : vector<16x128xf32>
    %873 = vector.broadcast %151 : f32 to vector<16x128xf32>
    %874 = arith.mulf %792, %873 : vector<16x128xf32>
    %875 = arith.addf %872, %874 : vector<16x128xf32>
    %876 = vector.broadcast %161 : f32 to vector<16x128xf32>
    %877 = arith.mulf %798, %876 : vector<16x128xf32>
    %878 = arith.addf %875, %877 : vector<16x128xf32>
    %879 = vector.broadcast %171 : f32 to vector<16x128xf32>
    %880 = arith.mulf %804, %879 : vector<16x128xf32>
    %881 = arith.addf %878, %880 : vector<16x128xf32>
    %882 = vector.broadcast %181 : f32 to vector<16x128xf32>
    %883 = arith.mulf %810, %882 : vector<16x128xf32>
    %884 = arith.addf %881, %883 : vector<16x128xf32>
    %885 = vector.broadcast %191 : f32 to vector<16x128xf32>
    %886 = arith.mulf %816, %885 : vector<16x128xf32>
    %887 = arith.addf %884, %886 : vector<16x128xf32>
    %888 = vector.broadcast %201 : f32 to vector<16x128xf32>
    %889 = arith.mulf %822, %888 : vector<16x128xf32>
    %890 = arith.addf %887, %889 : vector<16x128xf32>
    %891 = vector.broadcast %211 : f32 to vector<16x128xf32>
    %892 = arith.mulf %828, %891 : vector<16x128xf32>
    %893 = arith.addf %890, %892 : vector<16x128xf32>
    %894 = vector.broadcast %221 : f32 to vector<16x128xf32>
    %895 = arith.mulf %834, %894 : vector<16x128xf32>
    %896 = arith.addf %893, %895 : vector<16x128xf32>
    %897 = vector.broadcast %132 : f32 to vector<16x128xf32>
    %898 = arith.mulf %780, %897 : vector<16x128xf32>
    %899 = vector.broadcast %232 : f32 to vector<16x128xf32>
    %900 = arith.addf %898, %899 : vector<16x128xf32>
    %901 = vector.broadcast %142 : f32 to vector<16x128xf32>
    %902 = arith.mulf %786, %901 : vector<16x128xf32>
    %903 = arith.addf %900, %902 : vector<16x128xf32>
    %904 = vector.broadcast %152 : f32 to vector<16x128xf32>
    %905 = arith.mulf %792, %904 : vector<16x128xf32>
    %906 = arith.addf %903, %905 : vector<16x128xf32>
    %907 = vector.broadcast %162 : f32 to vector<16x128xf32>
    %908 = arith.mulf %798, %907 : vector<16x128xf32>
    %909 = arith.addf %906, %908 : vector<16x128xf32>
    %910 = vector.broadcast %172 : f32 to vector<16x128xf32>
    %911 = arith.mulf %804, %910 : vector<16x128xf32>
    %912 = arith.addf %909, %911 : vector<16x128xf32>
    %913 = vector.broadcast %182 : f32 to vector<16x128xf32>
    %914 = arith.mulf %810, %913 : vector<16x128xf32>
    %915 = arith.addf %912, %914 : vector<16x128xf32>
    %916 = vector.broadcast %192 : f32 to vector<16x128xf32>
    %917 = arith.mulf %816, %916 : vector<16x128xf32>
    %918 = arith.addf %915, %917 : vector<16x128xf32>
    %919 = vector.broadcast %202 : f32 to vector<16x128xf32>
    %920 = arith.mulf %822, %919 : vector<16x128xf32>
    %921 = arith.addf %918, %920 : vector<16x128xf32>
    %922 = vector.broadcast %212 : f32 to vector<16x128xf32>
    %923 = arith.mulf %828, %922 : vector<16x128xf32>
    %924 = arith.addf %921, %923 : vector<16x128xf32>
    %925 = vector.broadcast %222 : f32 to vector<16x128xf32>
    %926 = arith.mulf %834, %925 : vector<16x128xf32>
    %927 = arith.addf %924, %926 : vector<16x128xf32>
    %928 = vector.broadcast %133 : f32 to vector<16x128xf32>
    %929 = arith.mulf %780, %928 : vector<16x128xf32>
    %930 = vector.broadcast %233 : f32 to vector<16x128xf32>
    %931 = arith.addf %929, %930 : vector<16x128xf32>
    %932 = vector.broadcast %143 : f32 to vector<16x128xf32>
    %933 = arith.mulf %786, %932 : vector<16x128xf32>
    %934 = arith.addf %931, %933 : vector<16x128xf32>
    %935 = vector.broadcast %153 : f32 to vector<16x128xf32>
    %936 = arith.mulf %792, %935 : vector<16x128xf32>
    %937 = arith.addf %934, %936 : vector<16x128xf32>
    %938 = vector.broadcast %163 : f32 to vector<16x128xf32>
    %939 = arith.mulf %798, %938 : vector<16x128xf32>
    %940 = arith.addf %937, %939 : vector<16x128xf32>
    %941 = vector.broadcast %173 : f32 to vector<16x128xf32>
    %942 = arith.mulf %804, %941 : vector<16x128xf32>
    %943 = arith.addf %940, %942 : vector<16x128xf32>
    %944 = vector.broadcast %183 : f32 to vector<16x128xf32>
    %945 = arith.mulf %810, %944 : vector<16x128xf32>
    %946 = arith.addf %943, %945 : vector<16x128xf32>
    %947 = vector.broadcast %193 : f32 to vector<16x128xf32>
    %948 = arith.mulf %816, %947 : vector<16x128xf32>
    %949 = arith.addf %946, %948 : vector<16x128xf32>
    %950 = vector.broadcast %203 : f32 to vector<16x128xf32>
    %951 = arith.mulf %822, %950 : vector<16x128xf32>
    %952 = arith.addf %949, %951 : vector<16x128xf32>
    %953 = vector.broadcast %213 : f32 to vector<16x128xf32>
    %954 = arith.mulf %828, %953 : vector<16x128xf32>
    %955 = arith.addf %952, %954 : vector<16x128xf32>
    %956 = vector.broadcast %223 : f32 to vector<16x128xf32>
    %957 = arith.mulf %834, %956 : vector<16x128xf32>
    %958 = arith.addf %955, %957 : vector<16x128xf32>
    %959 = vector.broadcast %134 : f32 to vector<16x128xf32>
    %960 = arith.mulf %780, %959 : vector<16x128xf32>
    %961 = vector.broadcast %234 : f32 to vector<16x128xf32>
    %962 = arith.addf %960, %961 : vector<16x128xf32>
    %963 = vector.broadcast %144 : f32 to vector<16x128xf32>
    %964 = arith.mulf %786, %963 : vector<16x128xf32>
    %965 = arith.addf %962, %964 : vector<16x128xf32>
    %966 = vector.broadcast %154 : f32 to vector<16x128xf32>
    %967 = arith.mulf %792, %966 : vector<16x128xf32>
    %968 = arith.addf %965, %967 : vector<16x128xf32>
    %969 = vector.broadcast %164 : f32 to vector<16x128xf32>
    %970 = arith.mulf %798, %969 : vector<16x128xf32>
    %971 = arith.addf %968, %970 : vector<16x128xf32>
    %972 = vector.broadcast %174 : f32 to vector<16x128xf32>
    %973 = arith.mulf %804, %972 : vector<16x128xf32>
    %974 = arith.addf %971, %973 : vector<16x128xf32>
    %975 = vector.broadcast %184 : f32 to vector<16x128xf32>
    %976 = arith.mulf %810, %975 : vector<16x128xf32>
    %977 = arith.addf %974, %976 : vector<16x128xf32>
    %978 = vector.broadcast %194 : f32 to vector<16x128xf32>
    %979 = arith.mulf %816, %978 : vector<16x128xf32>
    %980 = arith.addf %977, %979 : vector<16x128xf32>
    %981 = vector.broadcast %204 : f32 to vector<16x128xf32>
    %982 = arith.mulf %822, %981 : vector<16x128xf32>
    %983 = arith.addf %980, %982 : vector<16x128xf32>
    %984 = vector.broadcast %214 : f32 to vector<16x128xf32>
    %985 = arith.mulf %828, %984 : vector<16x128xf32>
    %986 = arith.addf %983, %985 : vector<16x128xf32>
    %987 = vector.broadcast %224 : f32 to vector<16x128xf32>
    %988 = arith.mulf %834, %987 : vector<16x128xf32>
    %989 = arith.addf %986, %988 : vector<16x128xf32>
    %990 = vector.broadcast %135 : f32 to vector<16x128xf32>
    %991 = arith.mulf %780, %990 : vector<16x128xf32>
    %992 = vector.broadcast %235 : f32 to vector<16x128xf32>
    %993 = arith.addf %991, %992 : vector<16x128xf32>
    %994 = vector.broadcast %145 : f32 to vector<16x128xf32>
    %995 = arith.mulf %786, %994 : vector<16x128xf32>
    %996 = arith.addf %993, %995 : vector<16x128xf32>
    %997 = vector.broadcast %155 : f32 to vector<16x128xf32>
    %998 = arith.mulf %792, %997 : vector<16x128xf32>
    %999 = arith.addf %996, %998 : vector<16x128xf32>
    %1000 = vector.broadcast %165 : f32 to vector<16x128xf32>
    %1001 = arith.mulf %798, %1000 : vector<16x128xf32>
    %1002 = arith.addf %999, %1001 : vector<16x128xf32>
    %1003 = vector.broadcast %175 : f32 to vector<16x128xf32>
    %1004 = arith.mulf %804, %1003 : vector<16x128xf32>
    %1005 = arith.addf %1002, %1004 : vector<16x128xf32>
    %1006 = vector.broadcast %185 : f32 to vector<16x128xf32>
    %1007 = arith.mulf %810, %1006 : vector<16x128xf32>
    %1008 = arith.addf %1005, %1007 : vector<16x128xf32>
    %1009 = vector.broadcast %195 : f32 to vector<16x128xf32>
    %1010 = arith.mulf %816, %1009 : vector<16x128xf32>
    %1011 = arith.addf %1008, %1010 : vector<16x128xf32>
    %1012 = vector.broadcast %205 : f32 to vector<16x128xf32>
    %1013 = arith.mulf %822, %1012 : vector<16x128xf32>
    %1014 = arith.addf %1011, %1013 : vector<16x128xf32>
    %1015 = vector.broadcast %215 : f32 to vector<16x128xf32>
    %1016 = arith.mulf %828, %1015 : vector<16x128xf32>
    %1017 = arith.addf %1014, %1016 : vector<16x128xf32>
    %1018 = vector.broadcast %225 : f32 to vector<16x128xf32>
    %1019 = arith.mulf %834, %1018 : vector<16x128xf32>
    %1020 = arith.addf %1017, %1019 : vector<16x128xf32>
    %1021 = vector.broadcast %136 : f32 to vector<16x128xf32>
    %1022 = arith.mulf %780, %1021 : vector<16x128xf32>
    %1023 = vector.broadcast %236 : f32 to vector<16x128xf32>
    %1024 = arith.addf %1022, %1023 : vector<16x128xf32>
    %1025 = vector.broadcast %146 : f32 to vector<16x128xf32>
    %1026 = arith.mulf %786, %1025 : vector<16x128xf32>
    %1027 = arith.addf %1024, %1026 : vector<16x128xf32>
    %1028 = vector.broadcast %156 : f32 to vector<16x128xf32>
    %1029 = arith.mulf %792, %1028 : vector<16x128xf32>
    %1030 = arith.addf %1027, %1029 : vector<16x128xf32>
    %1031 = vector.broadcast %166 : f32 to vector<16x128xf32>
    %1032 = arith.mulf %798, %1031 : vector<16x128xf32>
    %1033 = arith.addf %1030, %1032 : vector<16x128xf32>
    %1034 = vector.broadcast %176 : f32 to vector<16x128xf32>
    %1035 = arith.mulf %804, %1034 : vector<16x128xf32>
    %1036 = arith.addf %1033, %1035 : vector<16x128xf32>
    %1037 = vector.broadcast %186 : f32 to vector<16x128xf32>
    %1038 = arith.mulf %810, %1037 : vector<16x128xf32>
    %1039 = arith.addf %1036, %1038 : vector<16x128xf32>
    %1040 = vector.broadcast %196 : f32 to vector<16x128xf32>
    %1041 = arith.mulf %816, %1040 : vector<16x128xf32>
    %1042 = arith.addf %1039, %1041 : vector<16x128xf32>
    %1043 = vector.broadcast %206 : f32 to vector<16x128xf32>
    %1044 = arith.mulf %822, %1043 : vector<16x128xf32>
    %1045 = arith.addf %1042, %1044 : vector<16x128xf32>
    %1046 = vector.broadcast %216 : f32 to vector<16x128xf32>
    %1047 = arith.mulf %828, %1046 : vector<16x128xf32>
    %1048 = arith.addf %1045, %1047 : vector<16x128xf32>
    %1049 = vector.broadcast %226 : f32 to vector<16x128xf32>
    %1050 = arith.mulf %834, %1049 : vector<16x128xf32>
    %1051 = arith.addf %1048, %1050 : vector<16x128xf32>
    %1052 = vector.broadcast %137 : f32 to vector<16x128xf32>
    %1053 = arith.mulf %780, %1052 : vector<16x128xf32>
    %1054 = vector.broadcast %237 : f32 to vector<16x128xf32>
    %1055 = arith.addf %1053, %1054 : vector<16x128xf32>
    %1056 = vector.broadcast %147 : f32 to vector<16x128xf32>
    %1057 = arith.mulf %786, %1056 : vector<16x128xf32>
    %1058 = arith.addf %1055, %1057 : vector<16x128xf32>
    %1059 = vector.broadcast %157 : f32 to vector<16x128xf32>
    %1060 = arith.mulf %792, %1059 : vector<16x128xf32>
    %1061 = arith.addf %1058, %1060 : vector<16x128xf32>
    %1062 = vector.broadcast %167 : f32 to vector<16x128xf32>
    %1063 = arith.mulf %798, %1062 : vector<16x128xf32>
    %1064 = arith.addf %1061, %1063 : vector<16x128xf32>
    %1065 = vector.broadcast %177 : f32 to vector<16x128xf32>
    %1066 = arith.mulf %804, %1065 : vector<16x128xf32>
    %1067 = arith.addf %1064, %1066 : vector<16x128xf32>
    %1068 = vector.broadcast %187 : f32 to vector<16x128xf32>
    %1069 = arith.mulf %810, %1068 : vector<16x128xf32>
    %1070 = arith.addf %1067, %1069 : vector<16x128xf32>
    %1071 = vector.broadcast %197 : f32 to vector<16x128xf32>
    %1072 = arith.mulf %816, %1071 : vector<16x128xf32>
    %1073 = arith.addf %1070, %1072 : vector<16x128xf32>
    %1074 = vector.broadcast %207 : f32 to vector<16x128xf32>
    %1075 = arith.mulf %822, %1074 : vector<16x128xf32>
    %1076 = arith.addf %1073, %1075 : vector<16x128xf32>
    %1077 = vector.broadcast %217 : f32 to vector<16x128xf32>
    %1078 = arith.mulf %828, %1077 : vector<16x128xf32>
    %1079 = arith.addf %1076, %1078 : vector<16x128xf32>
    %1080 = vector.broadcast %227 : f32 to vector<16x128xf32>
    %1081 = arith.mulf %834, %1080 : vector<16x128xf32>
    %1082 = arith.addf %1079, %1081 : vector<16x128xf32>
    %1083 = vector.broadcast %138 : f32 to vector<16x128xf32>
    %1084 = arith.mulf %780, %1083 : vector<16x128xf32>
    %1085 = vector.broadcast %238 : f32 to vector<16x128xf32>
    %1086 = arith.addf %1084, %1085 : vector<16x128xf32>
    %1087 = vector.broadcast %148 : f32 to vector<16x128xf32>
    %1088 = arith.mulf %786, %1087 : vector<16x128xf32>
    %1089 = arith.addf %1086, %1088 : vector<16x128xf32>
    %1090 = vector.broadcast %158 : f32 to vector<16x128xf32>
    %1091 = arith.mulf %792, %1090 : vector<16x128xf32>
    %1092 = arith.addf %1089, %1091 : vector<16x128xf32>
    %1093 = vector.broadcast %168 : f32 to vector<16x128xf32>
    %1094 = arith.mulf %798, %1093 : vector<16x128xf32>
    %1095 = arith.addf %1092, %1094 : vector<16x128xf32>
    %1096 = vector.broadcast %178 : f32 to vector<16x128xf32>
    %1097 = arith.mulf %804, %1096 : vector<16x128xf32>
    %1098 = arith.addf %1095, %1097 : vector<16x128xf32>
    %1099 = vector.broadcast %188 : f32 to vector<16x128xf32>
    %1100 = arith.mulf %810, %1099 : vector<16x128xf32>
    %1101 = arith.addf %1098, %1100 : vector<16x128xf32>
    %1102 = vector.broadcast %198 : f32 to vector<16x128xf32>
    %1103 = arith.mulf %816, %1102 : vector<16x128xf32>
    %1104 = arith.addf %1101, %1103 : vector<16x128xf32>
    %1105 = vector.broadcast %208 : f32 to vector<16x128xf32>
    %1106 = arith.mulf %822, %1105 : vector<16x128xf32>
    %1107 = arith.addf %1104, %1106 : vector<16x128xf32>
    %1108 = vector.broadcast %218 : f32 to vector<16x128xf32>
    %1109 = arith.mulf %828, %1108 : vector<16x128xf32>
    %1110 = arith.addf %1107, %1109 : vector<16x128xf32>
    %1111 = vector.broadcast %228 : f32 to vector<16x128xf32>
    %1112 = arith.mulf %834, %1111 : vector<16x128xf32>
    %1113 = arith.addf %1110, %1112 : vector<16x128xf32>
    %1114 = vector.broadcast %139 : f32 to vector<16x128xf32>
    %1115 = arith.mulf %780, %1114 : vector<16x128xf32>
    %1116 = vector.broadcast %239 : f32 to vector<16x128xf32>
    %1117 = arith.addf %1115, %1116 : vector<16x128xf32>
    %1118 = vector.broadcast %149 : f32 to vector<16x128xf32>
    %1119 = arith.mulf %786, %1118 : vector<16x128xf32>
    %1120 = arith.addf %1117, %1119 : vector<16x128xf32>
    %1121 = vector.broadcast %159 : f32 to vector<16x128xf32>
    %1122 = arith.mulf %792, %1121 : vector<16x128xf32>
    %1123 = arith.addf %1120, %1122 : vector<16x128xf32>
    %1124 = vector.broadcast %169 : f32 to vector<16x128xf32>
    %1125 = arith.mulf %798, %1124 : vector<16x128xf32>
    %1126 = arith.addf %1123, %1125 : vector<16x128xf32>
    %1127 = vector.broadcast %179 : f32 to vector<16x128xf32>
    %1128 = arith.mulf %804, %1127 : vector<16x128xf32>
    %1129 = arith.addf %1126, %1128 : vector<16x128xf32>
    %1130 = vector.broadcast %189 : f32 to vector<16x128xf32>
    %1131 = arith.mulf %810, %1130 : vector<16x128xf32>
    %1132 = arith.addf %1129, %1131 : vector<16x128xf32>
    %1133 = vector.broadcast %199 : f32 to vector<16x128xf32>
    %1134 = arith.mulf %816, %1133 : vector<16x128xf32>
    %1135 = arith.addf %1132, %1134 : vector<16x128xf32>
    %1136 = vector.broadcast %209 : f32 to vector<16x128xf32>
    %1137 = arith.mulf %822, %1136 : vector<16x128xf32>
    %1138 = arith.addf %1135, %1137 : vector<16x128xf32>
    %1139 = vector.broadcast %219 : f32 to vector<16x128xf32>
    %1140 = arith.mulf %828, %1139 : vector<16x128xf32>
    %1141 = arith.addf %1138, %1140 : vector<16x128xf32>
    %1142 = vector.broadcast %229 : f32 to vector<16x128xf32>
    %1143 = arith.mulf %834, %1142 : vector<16x128xf32>
    %1144 = arith.addf %1141, %1143 : vector<16x128xf32>
    %cst_40 = arith.constant 0.000000e+00 : f32
    %1145 = vector.broadcast %cst_40 : f32 to vector<16x128xf32>
    %1146 = arith.cmpf ogt, %865, %1145 : vector<16x128xf32>
    %1147 = math.exp %865 : vector<16x128xf32>
    %cst_41 = arith.constant 1.000000e+00 : f32
    %1148 = vector.broadcast %cst_41 : f32 to vector<16x128xf32>
    %1149 = arith.subf %1147, %1148 : vector<16x128xf32>
    %1150 = arith.select %1146, %865, %1149 : vector<16x128xi1>, vector<16x128xf32>
    %cst_42 = arith.constant 0.000000e+00 : f32
    %1151 = vector.broadcast %cst_42 : f32 to vector<16x128xf32>
    %1152 = arith.cmpf ogt, %896, %1151 : vector<16x128xf32>
    %1153 = math.exp %896 : vector<16x128xf32>
    %cst_43 = arith.constant 1.000000e+00 : f32
    %1154 = vector.broadcast %cst_43 : f32 to vector<16x128xf32>
    %1155 = arith.subf %1153, %1154 : vector<16x128xf32>
    %1156 = arith.select %1152, %896, %1155 : vector<16x128xi1>, vector<16x128xf32>
    %cst_44 = arith.constant 0.000000e+00 : f32
    %1157 = vector.broadcast %cst_44 : f32 to vector<16x128xf32>
    %1158 = arith.cmpf ogt, %927, %1157 : vector<16x128xf32>
    %1159 = math.exp %927 : vector<16x128xf32>
    %cst_45 = arith.constant 1.000000e+00 : f32
    %1160 = vector.broadcast %cst_45 : f32 to vector<16x128xf32>
    %1161 = arith.subf %1159, %1160 : vector<16x128xf32>
    %1162 = arith.select %1158, %927, %1161 : vector<16x128xi1>, vector<16x128xf32>
    %cst_46 = arith.constant 0.000000e+00 : f32
    %1163 = vector.broadcast %cst_46 : f32 to vector<16x128xf32>
    %1164 = arith.cmpf ogt, %958, %1163 : vector<16x128xf32>
    %1165 = math.exp %958 : vector<16x128xf32>
    %cst_47 = arith.constant 1.000000e+00 : f32
    %1166 = vector.broadcast %cst_47 : f32 to vector<16x128xf32>
    %1167 = arith.subf %1165, %1166 : vector<16x128xf32>
    %1168 = arith.select %1164, %958, %1167 : vector<16x128xi1>, vector<16x128xf32>
    %cst_48 = arith.constant 0.000000e+00 : f32
    %1169 = vector.broadcast %cst_48 : f32 to vector<16x128xf32>
    %1170 = arith.cmpf ogt, %989, %1169 : vector<16x128xf32>
    %1171 = math.exp %989 : vector<16x128xf32>
    %cst_49 = arith.constant 1.000000e+00 : f32
    %1172 = vector.broadcast %cst_49 : f32 to vector<16x128xf32>
    %1173 = arith.subf %1171, %1172 : vector<16x128xf32>
    %1174 = arith.select %1170, %989, %1173 : vector<16x128xi1>, vector<16x128xf32>
    %cst_50 = arith.constant 0.000000e+00 : f32
    %1175 = vector.broadcast %cst_50 : f32 to vector<16x128xf32>
    %1176 = arith.cmpf ogt, %1020, %1175 : vector<16x128xf32>
    %1177 = math.exp %1020 : vector<16x128xf32>
    %cst_51 = arith.constant 1.000000e+00 : f32
    %1178 = vector.broadcast %cst_51 : f32 to vector<16x128xf32>
    %1179 = arith.subf %1177, %1178 : vector<16x128xf32>
    %1180 = arith.select %1176, %1020, %1179 : vector<16x128xi1>, vector<16x128xf32>
    %cst_52 = arith.constant 0.000000e+00 : f32
    %1181 = vector.broadcast %cst_52 : f32 to vector<16x128xf32>
    %1182 = arith.cmpf ogt, %1051, %1181 : vector<16x128xf32>
    %1183 = math.exp %1051 : vector<16x128xf32>
    %cst_53 = arith.constant 1.000000e+00 : f32
    %1184 = vector.broadcast %cst_53 : f32 to vector<16x128xf32>
    %1185 = arith.subf %1183, %1184 : vector<16x128xf32>
    %1186 = arith.select %1182, %1051, %1185 : vector<16x128xi1>, vector<16x128xf32>
    %cst_54 = arith.constant 0.000000e+00 : f32
    %1187 = vector.broadcast %cst_54 : f32 to vector<16x128xf32>
    %1188 = arith.cmpf ogt, %1082, %1187 : vector<16x128xf32>
    %1189 = math.exp %1082 : vector<16x128xf32>
    %cst_55 = arith.constant 1.000000e+00 : f32
    %1190 = vector.broadcast %cst_55 : f32 to vector<16x128xf32>
    %1191 = arith.subf %1189, %1190 : vector<16x128xf32>
    %1192 = arith.select %1188, %1082, %1191 : vector<16x128xi1>, vector<16x128xf32>
    %cst_56 = arith.constant 0.000000e+00 : f32
    %1193 = vector.broadcast %cst_56 : f32 to vector<16x128xf32>
    %1194 = arith.cmpf ogt, %1113, %1193 : vector<16x128xf32>
    %1195 = math.exp %1113 : vector<16x128xf32>
    %cst_57 = arith.constant 1.000000e+00 : f32
    %1196 = vector.broadcast %cst_57 : f32 to vector<16x128xf32>
    %1197 = arith.subf %1195, %1196 : vector<16x128xf32>
    %1198 = arith.select %1194, %1113, %1197 : vector<16x128xi1>, vector<16x128xf32>
    %cst_58 = arith.constant 0.000000e+00 : f32
    %1199 = vector.broadcast %cst_58 : f32 to vector<16x128xf32>
    %1200 = arith.cmpf ogt, %1144, %1199 : vector<16x128xf32>
    %1201 = math.exp %1144 : vector<16x128xf32>
    %cst_59 = arith.constant 1.000000e+00 : f32
    %1202 = vector.broadcast %cst_59 : f32 to vector<16x128xf32>
    %1203 = arith.subf %1201, %1202 : vector<16x128xf32>
    %1204 = arith.select %1200, %1144, %1203 : vector<16x128xi1>, vector<16x128xf32>
    %1205 = vector.broadcast %240 : f32 to vector<16x128xf32>
    %1206 = arith.mulf %1150, %1205 : vector<16x128xf32>
    %1207 = vector.broadcast %340 : f32 to vector<16x128xf32>
    %1208 = arith.addf %1206, %1207 : vector<16x128xf32>
    %1209 = vector.broadcast %250 : f32 to vector<16x128xf32>
    %1210 = arith.mulf %1156, %1209 : vector<16x128xf32>
    %1211 = arith.addf %1208, %1210 : vector<16x128xf32>
    %1212 = vector.broadcast %260 : f32 to vector<16x128xf32>
    %1213 = arith.mulf %1162, %1212 : vector<16x128xf32>
    %1214 = arith.addf %1211, %1213 : vector<16x128xf32>
    %1215 = vector.broadcast %270 : f32 to vector<16x128xf32>
    %1216 = arith.mulf %1168, %1215 : vector<16x128xf32>
    %1217 = arith.addf %1214, %1216 : vector<16x128xf32>
    %1218 = vector.broadcast %280 : f32 to vector<16x128xf32>
    %1219 = arith.mulf %1174, %1218 : vector<16x128xf32>
    %1220 = arith.addf %1217, %1219 : vector<16x128xf32>
    %1221 = vector.broadcast %290 : f32 to vector<16x128xf32>
    %1222 = arith.mulf %1180, %1221 : vector<16x128xf32>
    %1223 = arith.addf %1220, %1222 : vector<16x128xf32>
    %1224 = vector.broadcast %300 : f32 to vector<16x128xf32>
    %1225 = arith.mulf %1186, %1224 : vector<16x128xf32>
    %1226 = arith.addf %1223, %1225 : vector<16x128xf32>
    %1227 = vector.broadcast %310 : f32 to vector<16x128xf32>
    %1228 = arith.mulf %1192, %1227 : vector<16x128xf32>
    %1229 = arith.addf %1226, %1228 : vector<16x128xf32>
    %1230 = vector.broadcast %320 : f32 to vector<16x128xf32>
    %1231 = arith.mulf %1198, %1230 : vector<16x128xf32>
    %1232 = arith.addf %1229, %1231 : vector<16x128xf32>
    %1233 = vector.broadcast %330 : f32 to vector<16x128xf32>
    %1234 = arith.mulf %1204, %1233 : vector<16x128xf32>
    %1235 = arith.addf %1232, %1234 : vector<16x128xf32>
    %1236 = vector.broadcast %241 : f32 to vector<16x128xf32>
    %1237 = arith.mulf %1150, %1236 : vector<16x128xf32>
    %1238 = vector.broadcast %341 : f32 to vector<16x128xf32>
    %1239 = arith.addf %1237, %1238 : vector<16x128xf32>
    %1240 = vector.broadcast %251 : f32 to vector<16x128xf32>
    %1241 = arith.mulf %1156, %1240 : vector<16x128xf32>
    %1242 = arith.addf %1239, %1241 : vector<16x128xf32>
    %1243 = vector.broadcast %261 : f32 to vector<16x128xf32>
    %1244 = arith.mulf %1162, %1243 : vector<16x128xf32>
    %1245 = arith.addf %1242, %1244 : vector<16x128xf32>
    %1246 = vector.broadcast %271 : f32 to vector<16x128xf32>
    %1247 = arith.mulf %1168, %1246 : vector<16x128xf32>
    %1248 = arith.addf %1245, %1247 : vector<16x128xf32>
    %1249 = vector.broadcast %281 : f32 to vector<16x128xf32>
    %1250 = arith.mulf %1174, %1249 : vector<16x128xf32>
    %1251 = arith.addf %1248, %1250 : vector<16x128xf32>
    %1252 = vector.broadcast %291 : f32 to vector<16x128xf32>
    %1253 = arith.mulf %1180, %1252 : vector<16x128xf32>
    %1254 = arith.addf %1251, %1253 : vector<16x128xf32>
    %1255 = vector.broadcast %301 : f32 to vector<16x128xf32>
    %1256 = arith.mulf %1186, %1255 : vector<16x128xf32>
    %1257 = arith.addf %1254, %1256 : vector<16x128xf32>
    %1258 = vector.broadcast %311 : f32 to vector<16x128xf32>
    %1259 = arith.mulf %1192, %1258 : vector<16x128xf32>
    %1260 = arith.addf %1257, %1259 : vector<16x128xf32>
    %1261 = vector.broadcast %321 : f32 to vector<16x128xf32>
    %1262 = arith.mulf %1198, %1261 : vector<16x128xf32>
    %1263 = arith.addf %1260, %1262 : vector<16x128xf32>
    %1264 = vector.broadcast %331 : f32 to vector<16x128xf32>
    %1265 = arith.mulf %1204, %1264 : vector<16x128xf32>
    %1266 = arith.addf %1263, %1265 : vector<16x128xf32>
    %1267 = vector.broadcast %242 : f32 to vector<16x128xf32>
    %1268 = arith.mulf %1150, %1267 : vector<16x128xf32>
    %1269 = vector.broadcast %342 : f32 to vector<16x128xf32>
    %1270 = arith.addf %1268, %1269 : vector<16x128xf32>
    %1271 = vector.broadcast %252 : f32 to vector<16x128xf32>
    %1272 = arith.mulf %1156, %1271 : vector<16x128xf32>
    %1273 = arith.addf %1270, %1272 : vector<16x128xf32>
    %1274 = vector.broadcast %262 : f32 to vector<16x128xf32>
    %1275 = arith.mulf %1162, %1274 : vector<16x128xf32>
    %1276 = arith.addf %1273, %1275 : vector<16x128xf32>
    %1277 = vector.broadcast %272 : f32 to vector<16x128xf32>
    %1278 = arith.mulf %1168, %1277 : vector<16x128xf32>
    %1279 = arith.addf %1276, %1278 : vector<16x128xf32>
    %1280 = vector.broadcast %282 : f32 to vector<16x128xf32>
    %1281 = arith.mulf %1174, %1280 : vector<16x128xf32>
    %1282 = arith.addf %1279, %1281 : vector<16x128xf32>
    %1283 = vector.broadcast %292 : f32 to vector<16x128xf32>
    %1284 = arith.mulf %1180, %1283 : vector<16x128xf32>
    %1285 = arith.addf %1282, %1284 : vector<16x128xf32>
    %1286 = vector.broadcast %302 : f32 to vector<16x128xf32>
    %1287 = arith.mulf %1186, %1286 : vector<16x128xf32>
    %1288 = arith.addf %1285, %1287 : vector<16x128xf32>
    %1289 = vector.broadcast %312 : f32 to vector<16x128xf32>
    %1290 = arith.mulf %1192, %1289 : vector<16x128xf32>
    %1291 = arith.addf %1288, %1290 : vector<16x128xf32>
    %1292 = vector.broadcast %322 : f32 to vector<16x128xf32>
    %1293 = arith.mulf %1198, %1292 : vector<16x128xf32>
    %1294 = arith.addf %1291, %1293 : vector<16x128xf32>
    %1295 = vector.broadcast %332 : f32 to vector<16x128xf32>
    %1296 = arith.mulf %1204, %1295 : vector<16x128xf32>
    %1297 = arith.addf %1294, %1296 : vector<16x128xf32>
    %1298 = vector.broadcast %243 : f32 to vector<16x128xf32>
    %1299 = arith.mulf %1150, %1298 : vector<16x128xf32>
    %1300 = vector.broadcast %343 : f32 to vector<16x128xf32>
    %1301 = arith.addf %1299, %1300 : vector<16x128xf32>
    %1302 = vector.broadcast %253 : f32 to vector<16x128xf32>
    %1303 = arith.mulf %1156, %1302 : vector<16x128xf32>
    %1304 = arith.addf %1301, %1303 : vector<16x128xf32>
    %1305 = vector.broadcast %263 : f32 to vector<16x128xf32>
    %1306 = arith.mulf %1162, %1305 : vector<16x128xf32>
    %1307 = arith.addf %1304, %1306 : vector<16x128xf32>
    %1308 = vector.broadcast %273 : f32 to vector<16x128xf32>
    %1309 = arith.mulf %1168, %1308 : vector<16x128xf32>
    %1310 = arith.addf %1307, %1309 : vector<16x128xf32>
    %1311 = vector.broadcast %283 : f32 to vector<16x128xf32>
    %1312 = arith.mulf %1174, %1311 : vector<16x128xf32>
    %1313 = arith.addf %1310, %1312 : vector<16x128xf32>
    %1314 = vector.broadcast %293 : f32 to vector<16x128xf32>
    %1315 = arith.mulf %1180, %1314 : vector<16x128xf32>
    %1316 = arith.addf %1313, %1315 : vector<16x128xf32>
    %1317 = vector.broadcast %303 : f32 to vector<16x128xf32>
    %1318 = arith.mulf %1186, %1317 : vector<16x128xf32>
    %1319 = arith.addf %1316, %1318 : vector<16x128xf32>
    %1320 = vector.broadcast %313 : f32 to vector<16x128xf32>
    %1321 = arith.mulf %1192, %1320 : vector<16x128xf32>
    %1322 = arith.addf %1319, %1321 : vector<16x128xf32>
    %1323 = vector.broadcast %323 : f32 to vector<16x128xf32>
    %1324 = arith.mulf %1198, %1323 : vector<16x128xf32>
    %1325 = arith.addf %1322, %1324 : vector<16x128xf32>
    %1326 = vector.broadcast %333 : f32 to vector<16x128xf32>
    %1327 = arith.mulf %1204, %1326 : vector<16x128xf32>
    %1328 = arith.addf %1325, %1327 : vector<16x128xf32>
    %1329 = vector.broadcast %244 : f32 to vector<16x128xf32>
    %1330 = arith.mulf %1150, %1329 : vector<16x128xf32>
    %1331 = vector.broadcast %344 : f32 to vector<16x128xf32>
    %1332 = arith.addf %1330, %1331 : vector<16x128xf32>
    %1333 = vector.broadcast %254 : f32 to vector<16x128xf32>
    %1334 = arith.mulf %1156, %1333 : vector<16x128xf32>
    %1335 = arith.addf %1332, %1334 : vector<16x128xf32>
    %1336 = vector.broadcast %264 : f32 to vector<16x128xf32>
    %1337 = arith.mulf %1162, %1336 : vector<16x128xf32>
    %1338 = arith.addf %1335, %1337 : vector<16x128xf32>
    %1339 = vector.broadcast %274 : f32 to vector<16x128xf32>
    %1340 = arith.mulf %1168, %1339 : vector<16x128xf32>
    %1341 = arith.addf %1338, %1340 : vector<16x128xf32>
    %1342 = vector.broadcast %284 : f32 to vector<16x128xf32>
    %1343 = arith.mulf %1174, %1342 : vector<16x128xf32>
    %1344 = arith.addf %1341, %1343 : vector<16x128xf32>
    %1345 = vector.broadcast %294 : f32 to vector<16x128xf32>
    %1346 = arith.mulf %1180, %1345 : vector<16x128xf32>
    %1347 = arith.addf %1344, %1346 : vector<16x128xf32>
    %1348 = vector.broadcast %304 : f32 to vector<16x128xf32>
    %1349 = arith.mulf %1186, %1348 : vector<16x128xf32>
    %1350 = arith.addf %1347, %1349 : vector<16x128xf32>
    %1351 = vector.broadcast %314 : f32 to vector<16x128xf32>
    %1352 = arith.mulf %1192, %1351 : vector<16x128xf32>
    %1353 = arith.addf %1350, %1352 : vector<16x128xf32>
    %1354 = vector.broadcast %324 : f32 to vector<16x128xf32>
    %1355 = arith.mulf %1198, %1354 : vector<16x128xf32>
    %1356 = arith.addf %1353, %1355 : vector<16x128xf32>
    %1357 = vector.broadcast %334 : f32 to vector<16x128xf32>
    %1358 = arith.mulf %1204, %1357 : vector<16x128xf32>
    %1359 = arith.addf %1356, %1358 : vector<16x128xf32>
    %1360 = vector.broadcast %245 : f32 to vector<16x128xf32>
    %1361 = arith.mulf %1150, %1360 : vector<16x128xf32>
    %1362 = vector.broadcast %345 : f32 to vector<16x128xf32>
    %1363 = arith.addf %1361, %1362 : vector<16x128xf32>
    %1364 = vector.broadcast %255 : f32 to vector<16x128xf32>
    %1365 = arith.mulf %1156, %1364 : vector<16x128xf32>
    %1366 = arith.addf %1363, %1365 : vector<16x128xf32>
    %1367 = vector.broadcast %265 : f32 to vector<16x128xf32>
    %1368 = arith.mulf %1162, %1367 : vector<16x128xf32>
    %1369 = arith.addf %1366, %1368 : vector<16x128xf32>
    %1370 = vector.broadcast %275 : f32 to vector<16x128xf32>
    %1371 = arith.mulf %1168, %1370 : vector<16x128xf32>
    %1372 = arith.addf %1369, %1371 : vector<16x128xf32>
    %1373 = vector.broadcast %285 : f32 to vector<16x128xf32>
    %1374 = arith.mulf %1174, %1373 : vector<16x128xf32>
    %1375 = arith.addf %1372, %1374 : vector<16x128xf32>
    %1376 = vector.broadcast %295 : f32 to vector<16x128xf32>
    %1377 = arith.mulf %1180, %1376 : vector<16x128xf32>
    %1378 = arith.addf %1375, %1377 : vector<16x128xf32>
    %1379 = vector.broadcast %305 : f32 to vector<16x128xf32>
    %1380 = arith.mulf %1186, %1379 : vector<16x128xf32>
    %1381 = arith.addf %1378, %1380 : vector<16x128xf32>
    %1382 = vector.broadcast %315 : f32 to vector<16x128xf32>
    %1383 = arith.mulf %1192, %1382 : vector<16x128xf32>
    %1384 = arith.addf %1381, %1383 : vector<16x128xf32>
    %1385 = vector.broadcast %325 : f32 to vector<16x128xf32>
    %1386 = arith.mulf %1198, %1385 : vector<16x128xf32>
    %1387 = arith.addf %1384, %1386 : vector<16x128xf32>
    %1388 = vector.broadcast %335 : f32 to vector<16x128xf32>
    %1389 = arith.mulf %1204, %1388 : vector<16x128xf32>
    %1390 = arith.addf %1387, %1389 : vector<16x128xf32>
    %1391 = vector.broadcast %246 : f32 to vector<16x128xf32>
    %1392 = arith.mulf %1150, %1391 : vector<16x128xf32>
    %1393 = vector.broadcast %346 : f32 to vector<16x128xf32>
    %1394 = arith.addf %1392, %1393 : vector<16x128xf32>
    %1395 = vector.broadcast %256 : f32 to vector<16x128xf32>
    %1396 = arith.mulf %1156, %1395 : vector<16x128xf32>
    %1397 = arith.addf %1394, %1396 : vector<16x128xf32>
    %1398 = vector.broadcast %266 : f32 to vector<16x128xf32>
    %1399 = arith.mulf %1162, %1398 : vector<16x128xf32>
    %1400 = arith.addf %1397, %1399 : vector<16x128xf32>
    %1401 = vector.broadcast %276 : f32 to vector<16x128xf32>
    %1402 = arith.mulf %1168, %1401 : vector<16x128xf32>
    %1403 = arith.addf %1400, %1402 : vector<16x128xf32>
    %1404 = vector.broadcast %286 : f32 to vector<16x128xf32>
    %1405 = arith.mulf %1174, %1404 : vector<16x128xf32>
    %1406 = arith.addf %1403, %1405 : vector<16x128xf32>
    %1407 = vector.broadcast %296 : f32 to vector<16x128xf32>
    %1408 = arith.mulf %1180, %1407 : vector<16x128xf32>
    %1409 = arith.addf %1406, %1408 : vector<16x128xf32>
    %1410 = vector.broadcast %306 : f32 to vector<16x128xf32>
    %1411 = arith.mulf %1186, %1410 : vector<16x128xf32>
    %1412 = arith.addf %1409, %1411 : vector<16x128xf32>
    %1413 = vector.broadcast %316 : f32 to vector<16x128xf32>
    %1414 = arith.mulf %1192, %1413 : vector<16x128xf32>
    %1415 = arith.addf %1412, %1414 : vector<16x128xf32>
    %1416 = vector.broadcast %326 : f32 to vector<16x128xf32>
    %1417 = arith.mulf %1198, %1416 : vector<16x128xf32>
    %1418 = arith.addf %1415, %1417 : vector<16x128xf32>
    %1419 = vector.broadcast %336 : f32 to vector<16x128xf32>
    %1420 = arith.mulf %1204, %1419 : vector<16x128xf32>
    %1421 = arith.addf %1418, %1420 : vector<16x128xf32>
    %1422 = vector.broadcast %247 : f32 to vector<16x128xf32>
    %1423 = arith.mulf %1150, %1422 : vector<16x128xf32>
    %1424 = vector.broadcast %347 : f32 to vector<16x128xf32>
    %1425 = arith.addf %1423, %1424 : vector<16x128xf32>
    %1426 = vector.broadcast %257 : f32 to vector<16x128xf32>
    %1427 = arith.mulf %1156, %1426 : vector<16x128xf32>
    %1428 = arith.addf %1425, %1427 : vector<16x128xf32>
    %1429 = vector.broadcast %267 : f32 to vector<16x128xf32>
    %1430 = arith.mulf %1162, %1429 : vector<16x128xf32>
    %1431 = arith.addf %1428, %1430 : vector<16x128xf32>
    %1432 = vector.broadcast %277 : f32 to vector<16x128xf32>
    %1433 = arith.mulf %1168, %1432 : vector<16x128xf32>
    %1434 = arith.addf %1431, %1433 : vector<16x128xf32>
    %1435 = vector.broadcast %287 : f32 to vector<16x128xf32>
    %1436 = arith.mulf %1174, %1435 : vector<16x128xf32>
    %1437 = arith.addf %1434, %1436 : vector<16x128xf32>
    %1438 = vector.broadcast %297 : f32 to vector<16x128xf32>
    %1439 = arith.mulf %1180, %1438 : vector<16x128xf32>
    %1440 = arith.addf %1437, %1439 : vector<16x128xf32>
    %1441 = vector.broadcast %307 : f32 to vector<16x128xf32>
    %1442 = arith.mulf %1186, %1441 : vector<16x128xf32>
    %1443 = arith.addf %1440, %1442 : vector<16x128xf32>
    %1444 = vector.broadcast %317 : f32 to vector<16x128xf32>
    %1445 = arith.mulf %1192, %1444 : vector<16x128xf32>
    %1446 = arith.addf %1443, %1445 : vector<16x128xf32>
    %1447 = vector.broadcast %327 : f32 to vector<16x128xf32>
    %1448 = arith.mulf %1198, %1447 : vector<16x128xf32>
    %1449 = arith.addf %1446, %1448 : vector<16x128xf32>
    %1450 = vector.broadcast %337 : f32 to vector<16x128xf32>
    %1451 = arith.mulf %1204, %1450 : vector<16x128xf32>
    %1452 = arith.addf %1449, %1451 : vector<16x128xf32>
    %1453 = vector.broadcast %248 : f32 to vector<16x128xf32>
    %1454 = arith.mulf %1150, %1453 : vector<16x128xf32>
    %1455 = vector.broadcast %348 : f32 to vector<16x128xf32>
    %1456 = arith.addf %1454, %1455 : vector<16x128xf32>
    %1457 = vector.broadcast %258 : f32 to vector<16x128xf32>
    %1458 = arith.mulf %1156, %1457 : vector<16x128xf32>
    %1459 = arith.addf %1456, %1458 : vector<16x128xf32>
    %1460 = vector.broadcast %268 : f32 to vector<16x128xf32>
    %1461 = arith.mulf %1162, %1460 : vector<16x128xf32>
    %1462 = arith.addf %1459, %1461 : vector<16x128xf32>
    %1463 = vector.broadcast %278 : f32 to vector<16x128xf32>
    %1464 = arith.mulf %1168, %1463 : vector<16x128xf32>
    %1465 = arith.addf %1462, %1464 : vector<16x128xf32>
    %1466 = vector.broadcast %288 : f32 to vector<16x128xf32>
    %1467 = arith.mulf %1174, %1466 : vector<16x128xf32>
    %1468 = arith.addf %1465, %1467 : vector<16x128xf32>
    %1469 = vector.broadcast %298 : f32 to vector<16x128xf32>
    %1470 = arith.mulf %1180, %1469 : vector<16x128xf32>
    %1471 = arith.addf %1468, %1470 : vector<16x128xf32>
    %1472 = vector.broadcast %308 : f32 to vector<16x128xf32>
    %1473 = arith.mulf %1186, %1472 : vector<16x128xf32>
    %1474 = arith.addf %1471, %1473 : vector<16x128xf32>
    %1475 = vector.broadcast %318 : f32 to vector<16x128xf32>
    %1476 = arith.mulf %1192, %1475 : vector<16x128xf32>
    %1477 = arith.addf %1474, %1476 : vector<16x128xf32>
    %1478 = vector.broadcast %328 : f32 to vector<16x128xf32>
    %1479 = arith.mulf %1198, %1478 : vector<16x128xf32>
    %1480 = arith.addf %1477, %1479 : vector<16x128xf32>
    %1481 = vector.broadcast %338 : f32 to vector<16x128xf32>
    %1482 = arith.mulf %1204, %1481 : vector<16x128xf32>
    %1483 = arith.addf %1480, %1482 : vector<16x128xf32>
    %1484 = vector.broadcast %249 : f32 to vector<16x128xf32>
    %1485 = arith.mulf %1150, %1484 : vector<16x128xf32>
    %1486 = vector.broadcast %349 : f32 to vector<16x128xf32>
    %1487 = arith.addf %1485, %1486 : vector<16x128xf32>
    %1488 = vector.broadcast %259 : f32 to vector<16x128xf32>
    %1489 = arith.mulf %1156, %1488 : vector<16x128xf32>
    %1490 = arith.addf %1487, %1489 : vector<16x128xf32>
    %1491 = vector.broadcast %269 : f32 to vector<16x128xf32>
    %1492 = arith.mulf %1162, %1491 : vector<16x128xf32>
    %1493 = arith.addf %1490, %1492 : vector<16x128xf32>
    %1494 = vector.broadcast %279 : f32 to vector<16x128xf32>
    %1495 = arith.mulf %1168, %1494 : vector<16x128xf32>
    %1496 = arith.addf %1493, %1495 : vector<16x128xf32>
    %1497 = vector.broadcast %289 : f32 to vector<16x128xf32>
    %1498 = arith.mulf %1174, %1497 : vector<16x128xf32>
    %1499 = arith.addf %1496, %1498 : vector<16x128xf32>
    %1500 = vector.broadcast %299 : f32 to vector<16x128xf32>
    %1501 = arith.mulf %1180, %1500 : vector<16x128xf32>
    %1502 = arith.addf %1499, %1501 : vector<16x128xf32>
    %1503 = vector.broadcast %309 : f32 to vector<16x128xf32>
    %1504 = arith.mulf %1186, %1503 : vector<16x128xf32>
    %1505 = arith.addf %1502, %1504 : vector<16x128xf32>
    %1506 = vector.broadcast %319 : f32 to vector<16x128xf32>
    %1507 = arith.mulf %1192, %1506 : vector<16x128xf32>
    %1508 = arith.addf %1505, %1507 : vector<16x128xf32>
    %1509 = vector.broadcast %329 : f32 to vector<16x128xf32>
    %1510 = arith.mulf %1198, %1509 : vector<16x128xf32>
    %1511 = arith.addf %1508, %1510 : vector<16x128xf32>
    %1512 = vector.broadcast %339 : f32 to vector<16x128xf32>
    %1513 = arith.mulf %1204, %1512 : vector<16x128xf32>
    %1514 = arith.addf %1511, %1513 : vector<16x128xf32>
    %cst_60 = arith.constant 0.000000e+00 : f32
    %1515 = vector.broadcast %cst_60 : f32 to vector<16x128xf32>
    %1516 = arith.cmpf ogt, %1235, %1515 : vector<16x128xf32>
    %1517 = math.exp %1235 : vector<16x128xf32>
    %cst_61 = arith.constant 1.000000e+00 : f32
    %1518 = vector.broadcast %cst_61 : f32 to vector<16x128xf32>
    %1519 = arith.subf %1517, %1518 : vector<16x128xf32>
    %1520 = arith.select %1516, %1235, %1519 : vector<16x128xi1>, vector<16x128xf32>
    %cst_62 = arith.constant 0.000000e+00 : f32
    %1521 = vector.broadcast %cst_62 : f32 to vector<16x128xf32>
    %1522 = arith.cmpf ogt, %1266, %1521 : vector<16x128xf32>
    %1523 = math.exp %1266 : vector<16x128xf32>
    %cst_63 = arith.constant 1.000000e+00 : f32
    %1524 = vector.broadcast %cst_63 : f32 to vector<16x128xf32>
    %1525 = arith.subf %1523, %1524 : vector<16x128xf32>
    %1526 = arith.select %1522, %1266, %1525 : vector<16x128xi1>, vector<16x128xf32>
    %cst_64 = arith.constant 0.000000e+00 : f32
    %1527 = vector.broadcast %cst_64 : f32 to vector<16x128xf32>
    %1528 = arith.cmpf ogt, %1297, %1527 : vector<16x128xf32>
    %1529 = math.exp %1297 : vector<16x128xf32>
    %cst_65 = arith.constant 1.000000e+00 : f32
    %1530 = vector.broadcast %cst_65 : f32 to vector<16x128xf32>
    %1531 = arith.subf %1529, %1530 : vector<16x128xf32>
    %1532 = arith.select %1528, %1297, %1531 : vector<16x128xi1>, vector<16x128xf32>
    %cst_66 = arith.constant 0.000000e+00 : f32
    %1533 = vector.broadcast %cst_66 : f32 to vector<16x128xf32>
    %1534 = arith.cmpf ogt, %1328, %1533 : vector<16x128xf32>
    %1535 = math.exp %1328 : vector<16x128xf32>
    %cst_67 = arith.constant 1.000000e+00 : f32
    %1536 = vector.broadcast %cst_67 : f32 to vector<16x128xf32>
    %1537 = arith.subf %1535, %1536 : vector<16x128xf32>
    %1538 = arith.select %1534, %1328, %1537 : vector<16x128xi1>, vector<16x128xf32>
    %cst_68 = arith.constant 0.000000e+00 : f32
    %1539 = vector.broadcast %cst_68 : f32 to vector<16x128xf32>
    %1540 = arith.cmpf ogt, %1359, %1539 : vector<16x128xf32>
    %1541 = math.exp %1359 : vector<16x128xf32>
    %cst_69 = arith.constant 1.000000e+00 : f32
    %1542 = vector.broadcast %cst_69 : f32 to vector<16x128xf32>
    %1543 = arith.subf %1541, %1542 : vector<16x128xf32>
    %1544 = arith.select %1540, %1359, %1543 : vector<16x128xi1>, vector<16x128xf32>
    %cst_70 = arith.constant 0.000000e+00 : f32
    %1545 = vector.broadcast %cst_70 : f32 to vector<16x128xf32>
    %1546 = arith.cmpf ogt, %1390, %1545 : vector<16x128xf32>
    %1547 = math.exp %1390 : vector<16x128xf32>
    %cst_71 = arith.constant 1.000000e+00 : f32
    %1548 = vector.broadcast %cst_71 : f32 to vector<16x128xf32>
    %1549 = arith.subf %1547, %1548 : vector<16x128xf32>
    %1550 = arith.select %1546, %1390, %1549 : vector<16x128xi1>, vector<16x128xf32>
    %cst_72 = arith.constant 0.000000e+00 : f32
    %1551 = vector.broadcast %cst_72 : f32 to vector<16x128xf32>
    %1552 = arith.cmpf ogt, %1421, %1551 : vector<16x128xf32>
    %1553 = math.exp %1421 : vector<16x128xf32>
    %cst_73 = arith.constant 1.000000e+00 : f32
    %1554 = vector.broadcast %cst_73 : f32 to vector<16x128xf32>
    %1555 = arith.subf %1553, %1554 : vector<16x128xf32>
    %1556 = arith.select %1552, %1421, %1555 : vector<16x128xi1>, vector<16x128xf32>
    %cst_74 = arith.constant 0.000000e+00 : f32
    %1557 = vector.broadcast %cst_74 : f32 to vector<16x128xf32>
    %1558 = arith.cmpf ogt, %1452, %1557 : vector<16x128xf32>
    %1559 = math.exp %1452 : vector<16x128xf32>
    %cst_75 = arith.constant 1.000000e+00 : f32
    %1560 = vector.broadcast %cst_75 : f32 to vector<16x128xf32>
    %1561 = arith.subf %1559, %1560 : vector<16x128xf32>
    %1562 = arith.select %1558, %1452, %1561 : vector<16x128xi1>, vector<16x128xf32>
    %cst_76 = arith.constant 0.000000e+00 : f32
    %1563 = vector.broadcast %cst_76 : f32 to vector<16x128xf32>
    %1564 = arith.cmpf ogt, %1483, %1563 : vector<16x128xf32>
    %1565 = math.exp %1483 : vector<16x128xf32>
    %cst_77 = arith.constant 1.000000e+00 : f32
    %1566 = vector.broadcast %cst_77 : f32 to vector<16x128xf32>
    %1567 = arith.subf %1565, %1566 : vector<16x128xf32>
    %1568 = arith.select %1564, %1483, %1567 : vector<16x128xi1>, vector<16x128xf32>
    %cst_78 = arith.constant 0.000000e+00 : f32
    %1569 = vector.broadcast %cst_78 : f32 to vector<16x128xf32>
    %1570 = arith.cmpf ogt, %1514, %1569 : vector<16x128xf32>
    %1571 = math.exp %1514 : vector<16x128xf32>
    %cst_79 = arith.constant 1.000000e+00 : f32
    %1572 = vector.broadcast %cst_79 : f32 to vector<16x128xf32>
    %1573 = arith.subf %1571, %1572 : vector<16x128xf32>
    %1574 = arith.select %1570, %1514, %1573 : vector<16x128xi1>, vector<16x128xf32>
    %1575 = vector.broadcast %350 : f32 to vector<16x128xf32>
    %1576 = arith.mulf %1520, %1575 : vector<16x128xf32>
    %1577 = vector.broadcast %360 : f32 to vector<16x128xf32>
    %1578 = arith.addf %1576, %1577 : vector<16x128xf32>
    %1579 = vector.broadcast %351 : f32 to vector<16x128xf32>
    %1580 = arith.mulf %1526, %1579 : vector<16x128xf32>
    %1581 = arith.addf %1578, %1580 : vector<16x128xf32>
    %1582 = vector.broadcast %352 : f32 to vector<16x128xf32>
    %1583 = arith.mulf %1532, %1582 : vector<16x128xf32>
    %1584 = arith.addf %1581, %1583 : vector<16x128xf32>
    %1585 = vector.broadcast %353 : f32 to vector<16x128xf32>
    %1586 = arith.mulf %1538, %1585 : vector<16x128xf32>
    %1587 = arith.addf %1584, %1586 : vector<16x128xf32>
    %1588 = vector.broadcast %354 : f32 to vector<16x128xf32>
    %1589 = arith.mulf %1544, %1588 : vector<16x128xf32>
    %1590 = arith.addf %1587, %1589 : vector<16x128xf32>
    %1591 = vector.broadcast %355 : f32 to vector<16x128xf32>
    %1592 = arith.mulf %1550, %1591 : vector<16x128xf32>
    %1593 = arith.addf %1590, %1592 : vector<16x128xf32>
    %1594 = vector.broadcast %356 : f32 to vector<16x128xf32>
    %1595 = arith.mulf %1556, %1594 : vector<16x128xf32>
    %1596 = arith.addf %1593, %1595 : vector<16x128xf32>
    %1597 = vector.broadcast %357 : f32 to vector<16x128xf32>
    %1598 = arith.mulf %1562, %1597 : vector<16x128xf32>
    %1599 = arith.addf %1596, %1598 : vector<16x128xf32>
    %1600 = vector.broadcast %358 : f32 to vector<16x128xf32>
    %1601 = arith.mulf %1568, %1600 : vector<16x128xf32>
    %1602 = arith.addf %1599, %1601 : vector<16x128xf32>
    %1603 = vector.broadcast %359 : f32 to vector<16x128xf32>
    %1604 = arith.mulf %1574, %1603 : vector<16x128xf32>
    %1605 = arith.addf %1602, %1604 : vector<16x128xf32>
    %1606 = arith.index_cast %362 : i32 to index
    %c0_80 = arith.constant 0 : index
    %1607 = vector.load %arg3[%1606, %c0_80] : memref<16x128xf32, #tpu.memory_space<vmem>>, vector<16x128xf32>
    tpu.vector_store %arg3[%1606, %c0_80], %1605 {strides = array<i32>} : memref<16x128xf32, #tpu.memory_space<vmem>>, vector<16x128xf32>,
    %c1_i32 = arith.constant 1 : i32
    return
  }
  func.func @transform_0(%arg0: i32) -> i32 {
    %c0_i32 = arith.constant 0 : i32
    %c0_i32_0 = arith.constant 0 : i32
    return %c0_i32 : i32
  }
  func.func @transform_1(%arg0: i32) -> (i32, i32) {
    %c0_i32 = arith.constant 0 : i32
    %c0_i32_0 = arith.constant 0 : i32
    return %arg0, %c0_i32 : i32, i32
  }
  func.func @transform_2(%arg0: i32) -> (i32, i32) {
    %c0_i32 = arith.constant 0 : i32
    %c0_i32_0 = arith.constant 0 : i32
    return %arg0, %c0_i32 : i32, i32
  }
}

</mosaic_0001>

<llo_original>
// kernel: mean_transform.1
$region0: #{mean_transform.1}
  #allocation0 [shape = 'u32[]', space=smem, size = 0x4, offset = 0x4, fixed_abs, tag = 'smem constant byte address 0x4 - core index']
  #allocation1 [shape = 'u32[72,128]{1,0:T(1,128)}', space=vmem, size = 0x9000, scoped, tag = 'internal scratch']
  %s0 = inlined_call_operand.vmem [shape: f32[361], index: 0, kind: input, shape index: {}]
  %s1 = inlined_call_operand.vmem [shape: f32[16,128], index: 1, kind: input, shape index: {}]
  %s2 = inlined_call_operand.vmem [shape: f32[16,128], index: 2, kind: output, shape index: {}]
  %s3 = sld [smem:[#allocation0]]
  $region22: #{mean_transform.1} parent=0
    _
  %s5 = ssub.s32 1, %s3
  %s6 = scalar_select 0, %s5, %s3
  $region1: #{mean_transform.1} parent=0
    #allocation2 [shape = 'u8[1536]{0}', space=smem, size = 0x600, scoped, tag = 'input window, operand 0, single buffered']
    #allocation3 [shape = 's32[1]{0}', space=sflag, size = 0x4, scoped, tag = 'scoped memory for mean_transform.1']
    %7 = vsyncpa [#allocation3], 0
    // Predicated region
    $region2: #{mean_transform.1} parent=1 // pred_check
      _
    $region3: #{mean_transform.1} parent=1 // pred_check_branch
      %9 = sbr.rel (0) target = $region5
    $region4: #{mean_transform.1} parent=1 // pred_region
      %11 = vsyncadd [#allocation3], 0
      %s13 = sshll.u32 %s0, 4
      %s14 = int_to_ptr.vmem [resolvable:$true] %s13
      %16 = dma.vmem_to_smem %s14, 48, [#allocation2], [#allocation3]
    $region5: #{mean_transform.1} parent=1 // pred_fallthru
      _
    // Predicated region
    $region6: #{mean_transform.1} parent=1 // pred_check
      _
    $region7: #{mean_transform.1} parent=1 // pred_check_branch
      %18 = sbr.rel (0) target = $region9
    $region8: #{mean_transform.1} parent=1 // pred_region
      _
    $region9: #{mean_transform.1} parent=1 // pred_fallthru
      _
    // Predicated region
    $region10: #{mean_transform.1} parent=1 // pred_check
      _
    $region11: #{mean_transform.1} parent=1 // pred_check_branch
      %20 = sbr.rel (0) target = $region13
    $region12: #{mean_transform.1} parent=1 // pred_region
      %22 = dma.done [#allocation3], 48
    $region13: #{mean_transform.1} parent=1 // pred_fallthru
      _
    %23 = sfence
    %s24 = sld [smem:[#allocation2]]
    %s25 = sld [smem:[#allocation2 + $0x1]]
    %s26 = sld [smem:[#allocation2 + $0x2]]
    %s27 = sld [smem:[#allocation2 + $0x3]]
    %s28 = sld [smem:[#allocation2 + $0x4]]
    %s29 = sld [smem:[#allocation2 + $0x5]]
    %s30 = sld [smem:[#allocation2 + $0x6]]
    %s31 = sld [smem:[#allocation2 + $0x7]]
    %s32 = sld [smem:[#allocation2 + $0x8]]
    %s33 = sld [smem:[#allocation2 + $0x9]]
    %s34 = sld [smem:[#allocation2 + $0xa]]
    %s35 = sld [smem:[#allocation2 + $0xb]]
    %s36 = sld [smem:[#allocation2 + $0xc]]
    %s37 = sld [smem:[#allocation2 + $0xd]]
    %s38 = sld [smem:[#allocation2 + $0xe]]
    %s39 = sld [smem:[#allocation2 + $0xf]]
    %s40 = sld [smem:[#allocation2 + $0x10]]
    %s41 = sld [smem:[#allocation2 + $0x11]]
    %s42 = sld [smem:[#allocation2 + $0x12]]
    %s43 = sld [smem:[#allocation2 + $0x13]]
    %s44 = sld [smem:[#allocation2 + $0x14]]
    %s45 = sld [smem:[#allocation2 + $0x15]]
    %s46 = sld [smem:[#allocation2 + $0x16]]
    %s47 = sld [smem:[#allocation2 + $0x17]]
    %s48 = sld [smem:[#allocation2 + $0x18]]
    %s49 = sld [smem:[#allocation2 + $0x19]]
    %s50 = sld [smem:[#allocation2 + $0x1a]]
    %s51 = sld [smem:[#allocation2 + $0x1b]]
    %s52 = sld [smem:[#allocation2 + $0x1c]]
    %s53 = sld [smem:[#allocation2 + $0x1d]]
    %s54 = sld [smem:[#allocation2 + $0x1e]]
    %s55 = sld [smem:[#allocation2 + $0x1f]]
    %s56 = sld [smem:[#allocation2 + $0x20]]
    %s57 = sld [smem:[#allocation2 + $0x21]]
    %s58 = sld [smem:[#allocation2 + $0x22]]
    %s59 = sld [smem:[#allocation2 + $0x23]]
    %s60 = sld [smem:[#allocation2 + $0x24]]
    %s61 = sld [smem:[#allocation2 + $0x25]]
    %s62 = sld [smem:[#allocation2 + $0x26]]
    %s63 = sld [smem:[#allocation2 + $0x27]]
    %s64 = sld [smem:[#allocation2 + $0x28]]
    %s65 = sld [smem:[#allocation2 + $0x29]]
    %s66 = sld [smem:[#allocation2 + $0x2a]]
    %s67 = sld [smem:[#allocation2 + $0x2b]]
    %s68 = sld [smem:[#allocation2 + $0x2c]]
    %s69 = sld [smem:[#allocation2 + $0x2d]]
    %s70 = sld [smem:[#allocation2 + $0x2e]]
    %s71 = sld [smem:[#allocation2 + $0x2f]]
    %s72 = sld [smem:[#allocation2 + $0x30]]
    %s73 = sld [smem:[#allocation2 + $0x31]]
    %s74 = sld [smem:[#allocation2 + $0x32]]
    %s75 = sld [smem:[#allocation2 + $0x33]]
    %s76 = sld [smem:[#allocation2 + $0x34]]
    %s77 = sld [smem:[#allocation2 + $0x35]]
    %s78 = sld [smem:[#allocation2 + $0x36]]
    %s79 = sld [smem:[#allocation2 + $0x37]]
    %s80 = sld [smem:[#allocation2 + $0x38]]
    %s81 = sld [smem:[#allocation2 + $0x39]]
    %s82 = sld [smem:[#allocation2 + $0x3a]]
    %s83 = sld [smem:[#allocation2 + $0x3b]]
    %s84 = sld [smem:[#allocation2 + $0x3c]]
    %s85 = sld [smem:[#allocation2 + $0x3d]]
    %s86 = sld [smem:[#allocation2 + $0x3e]]
    %s87 = sld [smem:[#allocation2 + $0x3f]]
    %s88 = sld [smem:[#allocation2 + $0x40]]
    %s89 = sld [smem:[#allocation2 + $0x41]]
    %s90 = sld [smem:[#allocation2 + $0x42]]
    %s91 = sld [smem:[#allocation2 + $0x43]]
    %s92 = sld [smem:[#allocation2 + $0x44]]
    %s93 = sld [smem:[#allocation2 + $0x45]]
    %s94 = sld [smem:[#allocation2 + $0x46]]
    %s95 = sld [smem:[#allocation2 + $0x47]]
    %s96 = sld [smem:[#allocation2 + $0x48]]
    %s97 = sld [smem:[#allocation2 + $0x49]]
    %s98 = sld [smem:[#allocation2 + $0x4a]]
    %s99 = sld [smem:[#allocation2 + $0x4b]]
    %s100 = sld [smem:[#allocation2 + $0x4c]]
    %s101 = sld [smem:[#allocation2 + $0x4d]]
    %s102 = sld [smem:[#allocation2 + $0x4e]]
    %s103 = sld [smem:[#allocation2 + $0x4f]]
    %s104 = sld [smem:[#allocation2 + $0x50]]
    %s105 = sld [smem:[#allocation2 + $0x51]]
    %s106 = sld [smem:[#allocation2 + $0x52]]
    %s107 = sld [smem:[#allocation2 + $0x53]]
    %s108 = sld [smem:[#allocation2 + $0x54]]
    %s109 = sld [smem:[#allocation2 + $0x55]]
    %s110 = sld [smem:[#allocation2 + $0x56]]
    %s111 = sld [smem:[#allocation2 + $0x57]]
    %s112 = sld [smem:[#allocation2 + $0x58]]
    %s113 = sld [smem:[#allocation2 + $0x59]]
    %s114 = sld [smem:[#allocation2 + $0x5a]]
    %s115 = sld [smem:[#allocation2 + $0x5b]]
    %s116 = sld [smem:[#allocation2 + $0x5c]]
    %s117 = sld [smem:[#allocation2 + $0x5d]]
    %s118 = sld [smem:[#allocation2 + $0x5e]]
    %s119 = sld [smem:[#allocation2 + $0x5f]]
    %s120 = sld [smem:[#allocation2 + $0x60]]
    %s121 = sld [smem:[#allocation2 + $0x61]]
    %s122 = sld [smem:[#allocation2 + $0x62]]
    %s123 = sld [smem:[#allocation2 + $0x63]]
    %s124 = sld [smem:[#allocation2 + $0x64]]
    %s125 = sld [smem:[#allocation2 + $0x65]]
    %s126 = sld [smem:[#allocation2 + $0x66]]
    %s127 = sld [smem:[#allocation2 + $0x67]]
    %s128 = sld [smem:[#allocation2 + $0x68]]
    %s129 = sld [smem:[#allocation2 + $0x69]]
    %s130 = sld [smem:[#allocation2 + $0x6a]]
    %s131 = sld [smem:[#allocation2 + $0x6b]]
    %s132 = sld [smem:[#allocation2 + $0x6c]]
    %s133 = sld [smem:[#allocation2 + $0x6d]]
    %s134 = sld [smem:[#allocation2 + $0x6e]]
    %s135 = sld [smem:[#allocation2 + $0x6f]]
    %s136 = sld [smem:[#allocation2 + $0x70]]
    %s137 = sld [smem:[#allocation2 + $0x71]]
    %s138 = sld [smem:[#allocation2 + $0x72]]
    %s139 = sld [smem:[#allocation2 + $0x73]]
    %s140 = sld [smem:[#allocation2 + $0x74]]
    %s141 = sld [smem:[#allocation2 + $0x75]]
    %s142 = sld [smem:[#allocation2 + $0x76]]
    %s143 = sld [smem:[#allocation2 + $0x77]]
    %s144 = sld [smem:[#allocation2 + $0x78]]
    %s145 = sld [smem:[#allocation2 + $0x79]]
    %s146 = sld [smem:[#allocation2 + $0x7a]]
    %s147 = sld [smem:[#allocation2 + $0x7b]]
    %s148 = sld [smem:[#allocation2 + $0x7c]]
    %s149 = sld [smem:[#allocation2 + $0x7d]]
    %s150 = sld [smem:[#allocation2 + $0x7e]]
    %s151 = sld [smem:[#allocation2 + $0x7f]]
    %s152 = sld [smem:[#allocation2 + $0x80]]
    %s153 = sld [smem:[#allocation2 + $0x81]]
    %s154 = sld [smem:[#allocation2 + $0x82]]
    %s155 = sld [smem:[#allocation2 + $0x83]]
    %s156 = sld [smem:[#allocation2 + $0x84]]
    %s157 = sld [smem:[#allocation2 + $0x85]]
    %s158 = sld [smem:[#allocation2 + $0x86]]
    %s159 = sld [smem:[#allocation2 + $0x87]]
    %s160 = sld [smem:[#allocation2 + $0x88]]
    %s161 = sld [smem:[#allocation2 + $0x89]]
    %s162 = sld [smem:[#allocation2 + $0x8a]]
    %s163 = sld [smem:[#allocation2 + $0x8b]]
    %s164 = sld [smem:[#allocation2 + $0x8c]]
    %s165 = sld [smem:[#allocation2 + $0x8d]]
    %s166 = sld [smem:[#allocation2 + $0x8e]]
    %s167 = sld [smem:[#allocation2 + $0x8f]]
    %s168 = sld [smem:[#allocation2 + $0x90]]
    %s169 = sld [smem:[#allocation2 + $0x91]]
    %s170 = sld [smem:[#allocation2 + $0x92]]
    %s171 = sld [smem:[#allocation2 + $0x93]]
    %s172 = sld [smem:[#allocation2 + $0x94]]
    %s173 = sld [smem:[#allocation2 + $0x95]]
    %s174 = sld [smem:[#allocation2 + $0x96]]
    %s175 = sld [smem:[#allocation2 + $0x97]]
    %s176 = sld [smem:[#allocation2 + $0x98]]
    %s177 = sld [smem:[#allocation2 + $0x99]]
    %s178 = sld [smem:[#allocation2 + $0x9a]]
    %s179 = sld [smem:[#allocation2 + $0x9b]]
    %s180 = sld [smem:[#allocation2 + $0x9c]]
    %s181 = sld [smem:[#allocation2 + $0x9d]]
    %s182 = sld [smem:[#allocation2 + $0x9e]]
    %s183 = sld [smem:[#allocation2 + $0x9f]]
    %s184 = sld [smem:[#allocation2 + $0xa0]]
    %s185 = sld [smem:[#allocation2 + $0xa1]]
    %s186 = sld [smem:[#allocation2 + $0xa2]]
    %s187 = sld [smem:[#allocation2 + $0xa3]]
    %s188 = sld [smem:[#allocation2 + $0xa4]]
    %s189 = sld [smem:[#allocation2 + $0xa5]]
    %s190 = sld [smem:[#allocation2 + $0xa6]]
    %s191 = sld [smem:[#allocation2 + $0xa7]]
    %s192 = sld [smem:[#allocation2 + $0xa8]]
    %s193 = sld [smem:[#allocation2 + $0xa9]]
    %s194 = sld [smem:[#allocation2 + $0xaa]]
    %s195 = sld [smem:[#allocation2 + $0xab]]
    %s196 = sld [smem:[#allocation2 + $0xac]]
    %s197 = sld [smem:[#allocation2 + $0xad]]
    %s198 = sld [smem:[#allocation2 + $0xae]]
    %s199 = sld [smem:[#allocation2 + $0xaf]]
    %s200 = sld [smem:[#allocation2 + $0xb0]]
    %s201 = sld [smem:[#allocation2 + $0xb1]]
    %s202 = sld [smem:[#allocation2 + $0xb2]]
    %s203 = sld [smem:[#allocation2 + $0xb3]]
    %s204 = sld [smem:[#allocation2 + $0xb4]]
    %s205 = sld [smem:[#allocation2 + $0xb5]]
    %s206 = sld [smem:[#allocation2 + $0xb6]]
    %s207 = sld [smem:[#allocation2 + $0xb7]]
    %s208 = sld [smem:[#allocation2 + $0xb8]]
    %s209 = sld [smem:[#allocation2 + $0xb9]]
    %s210 = sld [smem:[#allocation2 + $0xba]]
    %s211 = sld [smem:[#allocation2 + $0xbb]]
    %s212 = sld [smem:[#allocation2 + $0xbc]]
    %s213 = sld [smem:[#allocation2 + $0xbd]]
    %s214 = sld [smem:[#allocation2 + $0xbe]]
    %s215 = sld [smem:[#allocation2 + $0xbf]]
    %s216 = sld [smem:[#allocation2 + $0xc0]]
    %s217 = sld [smem:[#allocation2 + $0xc1]]
    %s218 = sld [smem:[#allocation2 + $0xc2]]
    %s219 = sld [smem:[#allocation2 + $0xc3]]
    %s220 = sld [smem:[#allocation2 + $0xc4]]
    %s221 = sld [smem:[#allocation2 + $0xc5]]
    %s222 = sld [smem:[#allocation2 + $0xc6]]
    %s223 = sld [smem:[#allocation2 + $0xc7]]
    %s224 = sld [smem:[#allocation2 + $0xc8]]
    %s225 = sld [smem:[#allocation2 + $0xc9]]
    %s226 = sld [smem:[#allocation2 + $0xca]]
    %s227 = sld [smem:[#allocation2 + $0xcb]]
    %s228 = sld [smem:[#allocation2 + $0xcc]]
    %s229 = sld [smem:[#allocation2 + $0xcd]]
    %s230 = sld [smem:[#allocation2 + $0xce]]
    %s231 = sld [smem:[#allocation2 + $0xcf]]
    %s232 = sld [smem:[#allocation2 + $0xd0]]
    %s233 = sld [smem:[#allocation2 + $0xd1]]
    %s234 = sld [smem:[#allocation2 + $0xd2]]
    %s235 = sld [smem:[#allocation2 + $0xd3]]
    %s236 = sld [smem:[#allocation2 + $0xd4]]
    %s237 = sld [smem:[#allocation2 + $0xd5]]
    %s238 = sld [smem:[#allocation2 + $0xd6]]
    %s239 = sld [smem:[#allocation2 + $0xd7]]
    %s240 = sld [smem:[#allocation2 + $0xd8]]
    %s241 = sld [smem:[#allocation2 + $0xd9]]
    %s242 = sld [smem:[#allocation2 + $0xda]]
    %s243 = sld [smem:[#allocation2 + $0xdb]]
    %s244 = sld [smem:[#allocation2 + $0xdc]]
    %s245 = sld [smem:[#allocation2 + $0xdd]]
    %s246 = sld [smem:[#allocation2 + $0xde]]
    %s247 = sld [smem:[#allocation2 + $0xdf]]
    %s248 = sld [smem:[#allocation2 + $0xe0]]
    %s249 = sld [smem:[#allocation2 + $0xe1]]
    %s250 = sld [smem:[#allocation2 + $0xe2]]
    %s251 = sld [smem:[#allocation2 + $0xe3]]
    %s252 = sld [smem:[#allocation2 + $0xe4]]
    %s253 = sld [smem:[#allocation2 + $0xe5]]
    %s254 = sld [smem:[#allocation2 + $0xe6]]
    %s255 = sld [smem:[#allocation2 + $0xe7]]
    %s256 = sld [smem:[#allocation2 + $0xe8]]
    %s257 = sld [smem:[#allocation2 + $0xe9]]
    %s258 = sld [smem:[#allocation2 + $0xea]]
    %s259 = sld [smem:[#allocation2 + $0xeb]]
    %s260 = sld [smem:[#allocation2 + $0xec]]
    %s261 = sld [smem:[#allocation2 + $0xed]]
    %s262 = sld [smem:[#allocation2 + $0xee]]
    %s263 = sld [smem:[#allocation2 + $0xef]]
    %s264 = sld [smem:[#allocation2 + $0xf0]]
    %s265 = sld [smem:[#allocation2 + $0xf1]]
    %s266 = sld [smem:[#allocation2 + $0xf2]]
    %s267 = sld [smem:[#allocation2 + $0xf3]]
    %s268 = sld [smem:[#allocation2 + $0xf4]]
    %s269 = sld [smem:[#allocation2 + $0xf5]]
    %s270 = sld [smem:[#allocation2 + $0xf6]]
    %s271 = sld [smem:[#allocation2 + $0xf7]]
    %s272 = sld [smem:[#allocation2 + $0xf8]]
    %s273 = sld [smem:[#allocation2 + $0xf9]]
    %s274 = sld [smem:[#allocation2 + $0xfa]]
    %s275 = sld [smem:[#allocation2 + $0xfb]]
    %s276 = sld [smem:[#allocation2 + $0xfc]]
    %s277 = sld [smem:[#allocation2 + $0xfd]]
    %s278 = sld [smem:[#allocation2 + $0xfe]]
    %s279 = sld [smem:[#allocation2 + $0xff]]
    %s280 = sld [smem:[#allocation2 + $0x100]]
    %s281 = sld [smem:[#allocation2 + $0x101]]
    %s282 = sld [smem:[#allocation2 + $0x102]]
    %s283 = sld [smem:[#allocation2 + $0x103]]
    %s284 = sld [smem:[#allocation2 + $0x104]]
    %s285 = sld [smem:[#allocation2 + $0x105]]
    %s286 = sld [smem:[#allocation2 + $0x106]]
    %s287 = sld [smem:[#allocation2 + $0x107]]
    %s288 = sld [smem:[#allocation2 + $0x108]]
    %s289 = sld [smem:[#allocation2 + $0x109]]
    %s290 = sld [smem:[#allocation2 + $0x10a]]
    %s291 = sld [smem:[#allocation2 + $0x10b]]
    %s292 = sld [smem:[#allocation2 + $0x10c]]
    %s293 = sld [smem:[#allocation2 + $0x10d]]
    %s294 = sld [smem:[#allocation2 + $0x10e]]
    %s295 = sld [smem:[#allocation2 + $0x10f]]
    %s296 = sld [smem:[#allocation2 + $0x110]]
    %s297 = sld [smem:[#allocation2 + $0x111]]
    %s298 = sld [smem:[#allocation2 + $0x112]]
    %s299 = sld [smem:[#allocation2 + $0x113]]
    %s300 = sld [smem:[#allocation2 + $0x114]]
    %s301 = sld [smem:[#allocation2 + $0x115]]
    %s302 = sld [smem:[#allocation2 + $0x116]]
    %s303 = sld [smem:[#allocation2 + $0x117]]
    %s304 = sld [smem:[#allocation2 + $0x118]]
    %s305 = sld [smem:[#allocation2 + $0x119]]
    %s306 = sld [smem:[#allocation2 + $0x11a]]
    %s307 = sld [smem:[#allocation2 + $0x11b]]
    %s308 = sld [smem:[#allocation2 + $0x11c]]
    %s309 = sld [smem:[#allocation2 + $0x11d]]
    %s310 = sld [smem:[#allocation2 + $0x11e]]
    %s311 = sld [smem:[#allocation2 + $0x11f]]
    %s312 = sld [smem:[#allocation2 + $0x120]]
    %s313 = sld [smem:[#allocation2 + $0x121]]
    %s314 = sld [smem:[#allocation2 + $0x122]]
    %s315 = sld [smem:[#allocation2 + $0x123]]
    %s316 = sld [smem:[#allocation2 + $0x124]]
    %s317 = sld [smem:[#allocation2 + $0x125]]
    %s318 = sld [smem:[#allocation2 + $0x126]]
    %s319 = sld [smem:[#allocation2 + $0x127]]
    %s320 = sld [smem:[#allocation2 + $0x128]]
    %s321 = sld [smem:[#allocation2 + $0x129]]
    %s322 = sld [smem:[#allocation2 + $0x12a]]
    %s323 = sld [smem:[#allocation2 + $0x12b]]
    %s324 = sld [smem:[#allocation2 + $0x12c]]
    %s325 = sld [smem:[#allocation2 + $0x12d]]
    %s326 = sld [smem:[#allocation2 + $0x12e]]
    %s327 = sld [smem:[#allocation2 + $0x12f]]
    %s328 = sld [smem:[#allocation2 + $0x130]]
    %s329 = sld [smem:[#allocation2 + $0x131]]
    %s330 = sld [smem:[#allocation2 + $0x132]]
    %s331 = sld [smem:[#allocation2 + $0x133]]
    %s332 = sld [smem:[#allocation2 + $0x134]]
    %s333 = sld [smem:[#allocation2 + $0x135]]
    %s334 = sld [smem:[#allocation2 + $0x136]]
    %s335 = sld [smem:[#allocation2 + $0x137]]
    %s336 = sld [smem:[#allocation2 + $0x138]]
    %s337 = sld [smem:[#allocation2 + $0x139]]
    %s338 = sld [smem:[#allocation2 + $0x13a]]
    %s339 = sld [smem:[#allocation2 + $0x13b]]
    %s340 = sld [smem:[#allocation2 + $0x13c]]
    %s341 = sld [smem:[#allocation2 + $0x13d]]
    %s342 = sld [smem:[#allocation2 + $0x13e]]
    %s343 = sld [smem:[#allocation2 + $0x13f]]
    %s344 = sld [smem:[#allocation2 + $0x140]]
    %s345 = sld [smem:[#allocation2 + $0x141]]
    %s346 = sld [smem:[#allocation2 + $0x142]]
    %s347 = sld [smem:[#allocation2 + $0x143]]
    %s348 = sld [smem:[#allocation2 + $0x144]]
    %s349 = sld [smem:[#allocation2 + $0x145]]
    %s350 = sld [smem:[#allocation2 + $0x146]]
    %s351 = sld [smem:[#allocation2 + $0x147]]
    %s352 = sld [smem:[#allocation2 + $0x148]]
    %s353 = sld [smem:[#allocation2 + $0x149]]
    %s354 = sld [smem:[#allocation2 + $0x14a]]
    %s355 = sld [smem:[#allocation2 + $0x14b]]
    %s356 = sld [smem:[#allocation2 + $0x14c]]
    %s357 = sld [smem:[#allocation2 + $0x14d]]
    %s358 = sld [smem:[#allocation2 + $0x14e]]
    %s359 = sld [smem:[#allocation2 + $0x14f]]
    %s360 = sld [smem:[#allocation2 + $0x150]]
    %s361 = sld [smem:[#allocation2 + $0x151]]
    %s362 = sld [smem:[#allocation2 + $0x152]]
    %s363 = sld [smem:[#allocation2 + $0x153]]
    %s364 = sld [smem:[#allocation2 + $0x154]]
    %s365 = sld [smem:[#allocation2 + $0x155]]
    %s366 = sld [smem:[#allocation2 + $0x156]]
    %s367 = sld [smem:[#allocation2 + $0x157]]
    %s368 = sld [smem:[#allocation2 + $0x158]]
    %s369 = sld [smem:[#allocation2 + $0x159]]
    %s370 = sld [smem:[#allocation2 + $0x15a]]
    %s371 = sld [smem:[#allocation2 + $0x15b]]
    %s372 = sld [smem:[#allocation2 + $0x15c]]
    %s373 = sld [smem:[#allocation2 + $0x15d]]
    %s374 = sld [smem:[#allocation2 + $0x15e]]
    %s375 = sld [smem:[#allocation2 + $0x15f]]
    %s376 = sld [smem:[#allocation2 + $0x160]]
    %s377 = sld [smem:[#allocation2 + $0x161]]
    %s378 = sld [smem:[#allocation2 + $0x162]]
    %s379 = sld [smem:[#allocation2 + $0x163]]
    %s380 = sld [smem:[#allocation2 + $0x164]]
    %s381 = sld [smem:[#allocation2 + $0x165]]
    %s382 = sld [smem:[#allocation2 + $0x166]]
    %s383 = sld [smem:[#allocation2 + $0x167]]
    %s384 = sld [smem:[#allocation2 + $0x168]]
    %v385 = vld [vmem:[%s1] sm:$0xff]
    %v386 = vld [vmem:[%s1 + $0x8] sm:$0xff]
    %v387 = vstv %s24
    %v388 = vmul.f32 %v385, %v387
    %v389 = vmul.f32 %v386, %v387
    %v390 = vstv %s34
    %v391 = vadd.f32 %v388, %v390
    %v392 = vadd.f32 %v389, %v390
    %v393 = vstv %s25
    %v394 = vmul.f32 %v385, %v393
    %v395 = vmul.f32 %v386, %v393
    %v396 = vstv %s35
    %v397 = vadd.f32 %v394, %v396
    %v398 = vadd.f32 %v395, %v396
    %v399 = vstv %s26
    %v400 = vmul.f32 %v385, %v399
    %v401 = vmul.f32 %v386, %v399
    %v402 = vstv %s36
    %v403 = vadd.f32 %v400, %v402
    %v404 = vadd.f32 %v401, %v402
    %v405 = vstv %s27
    %v406 = vmul.f32 %v385, %v405
    %v407 = vmul.f32 %v386, %v405
    %v408 = vstv %s37
    %v409 = vadd.f32 %v406, %v408
    %v410 = vadd.f32 %v407, %v408
    %v411 = vstv %s28
    %v412 = vmul.f32 %v385, %v411
    %v413 = vmul.f32 %v386, %v411
    %v414 = vstv %s38
    %v415 = vadd.f32 %v412, %v414
    %v416 = vadd.f32 %v413, %v414
    %v417 = vstv %s29
    %v418 = vmul.f32 %v385, %v417
    %v419 = vmul.f32 %v386, %v417
    %v420 = vstv %s39
    %v421 = vadd.f32 %v418, %v420
    %v422 = vadd.f32 %v419, %v420
    %v423 = vstv %s30
    %v424 = vmul.f32 %v385, %v423
    %v425 = vmul.f32 %v386, %v423
    %v426 = vstv %s40
    %v427 = vadd.f32 %v424, %v426
    %v428 = vadd.f32 %v425, %v426
    %v429 = vstv %s31
    %v430 = vmul.f32 %v385, %v429
    %v431 = vmul.f32 %v386, %v429
    %v432 = vstv %s41
    %v433 = vadd.f32 %v430, %v432
    %v434 = vadd.f32 %v431, %v432
    %v435 = vstv %s32
    %v436 = vmul.f32 %v385, %v435
    %v437 = vmul.f32 %v386, %v435
    %v438 = vstv %s42
    %v439 = vadd.f32 %v436, %v438
    %v440 = vadd.f32 %v437, %v438
    %v441 = vstv %s33
    %v442 = vmul.f32 %v385, %v441
    %v443 = vmul.f32 %v386, %v441
    %v444 = vstv %s43
    %v445 = vadd.f32 %v442, %v444
    %v446 = vadd.f32 %v443, %v444
    %vm447 = vcmp.gt.f32.partialorder %v391, 0.0
    %vm448 = vcmp.gt.f32.partialorder %v392, 0.0
    %v449 = vmul.f32 %v391, 1.442695
    %v450 = vpow.pop %v449
    %v451 = vmul.f32 %v392, 1.442695
    %v452 = vpow.pop %v451
    %v453 = vsub.f32 %v450, 1.0
    %v454 = vsub.f32 %v452, 1.0
    %v455 = vsel %vm447, %v391, %v453
    %v456 = vsel %vm448, %v392, %v454
    %vm457 = vcmp.gt.f32.partialorder %v397, 0.0
    %vm458 = vcmp.gt.f32.partialorder %v398, 0.0
    %v459 = vmul.f32 %v397, 1.442695
    %v460 = vpow.pop %v459
    %v461 = vmul.f32 %v398, 1.442695
    %v462 = vpow.pop %v461
    %v463 = vsub.f32 %v460, 1.0
    %v464 = vsub.f32 %v462, 1.0
    %v465 = vsel %vm457, %v397, %v463
    %v466 = vsel %vm458, %v398, %v464
    %vm467 = vcmp.gt.f32.partialorder %v403, 0.0
    %vm468 = vcmp.gt.f32.partialorder %v404, 0.0
    %v469 = vmul.f32 %v403, 1.442695
    %v470 = vpow.pop %v469
    %v471 = vmul.f32 %v404, 1.442695
    %v472 = vpow.pop %v471
    %v473 = vsub.f32 %v470, 1.0
    %v474 = vsub.f32 %v472, 1.0
    %v475 = vsel %vm467, %v403, %v473
    %v476 = vsel %vm468, %v404, %v474
    %vm477 = vcmp.gt.f32.partialorder %v409, 0.0
    %vm478 = vcmp.gt.f32.partialorder %v410, 0.0
    %v479 = vmul.f32 %v409, 1.442695
    %v480 = vpow.pop %v479
    %v481 = vmul.f32 %v410, 1.442695
    %v482 = vpow.pop %v481
    %v483 = vsub.f32 %v480, 1.0
    %v484 = vsub.f32 %v482, 1.0
    %v485 = vsel %vm477, %v409, %v483
    %v486 = vsel %vm478, %v410, %v484
    %vm487 = vcmp.gt.f32.partialorder %v415, 0.0
    %vm488 = vcmp.gt.f32.partialorder %v416, 0.0
    %v489 = vmul.f32 %v415, 1.442695
    %v490 = vpow.pop %v489
    %v491 = vmul.f32 %v416, 1.442695
    %v492 = vpow.pop %v491
    %v493 = vsub.f32 %v490, 1.0
    %v494 = vsub.f32 %v492, 1.0
    %v495 = vsel %vm487, %v415, %v493
    %v496 = vsel %vm488, %v416, %v494
    %vm497 = vcmp.gt.f32.partialorder %v421, 0.0
    %vm498 = vcmp.gt.f32.partialorder %v422, 0.0
    %v499 = vmul.f32 %v421, 1.442695
    %v500 = vpow.pop %v499
    %v501 = vmul.f32 %v422, 1.442695
    %v502 = vpow.pop %v501
    %v503 = vsub.f32 %v500, 1.0
    %v504 = vsub.f32 %v502, 1.0
    %v505 = vsel %vm497, %v421, %v503
    %v506 = vsel %vm498, %v422, %v504
    %vm507 = vcmp.gt.f32.partialorder %v427, 0.0
    %vm508 = vcmp.gt.f32.partialorder %v428, 0.0
    %v509 = vmul.f32 %v427, 1.442695
    %v510 = vpow.pop %v509
    %v511 = vmul.f32 %v428, 1.442695
    %v512 = vpow.pop %v511
    %v513 = vsub.f32 %v510, 1.0
    %v514 = vsub.f32 %v512, 1.0
    %v515 = vsel %vm507, %v427, %v513
    %v516 = vsel %vm508, %v428, %v514
    %vm517 = vcmp.gt.f32.partialorder %v433, 0.0
    %vm518 = vcmp.gt.f32.partialorder %v434, 0.0
    %v519 = vmul.f32 %v433, 1.442695
    %v520 = vpow.pop %v519
    %v521 = vmul.f32 %v434, 1.442695
    %v522 = vpow.pop %v521
    %v523 = vsub.f32 %v520, 1.0
    %v524 = vsub.f32 %v522, 1.0
    %v525 = vsel %vm517, %v433, %v523
    %v526 = vsel %vm518, %v434, %v524
    %vm527 = vcmp.gt.f32.partialorder %v439, 0.0
    %vm528 = vcmp.gt.f32.partialorder %v440, 0.0
    %v529 = vmul.f32 %v439, 1.442695
    %v530 = vpow.pop %v529
    %v531 = vmul.f32 %v440, 1.442695
    %v532 = vpow.pop %v531
    %v533 = vsub.f32 %v530, 1.0
    %v534 = vsub.f32 %v532, 1.0
    %v535 = vsel %vm527, %v439, %v533
    %v536 = vsel %vm528, %v440, %v534
    %vm537 = vcmp.gt.f32.partialorder %v445, 0.0
    %vm538 = vcmp.gt.f32.partialorder %v446, 0.0
    %v539 = vmul.f32 %v445, 1.442695
    %v540 = vpow.pop %v539
    %v541 = vmul.f32 %v446, 1.442695
    %v542 = vpow.pop %v541
    %v543 = vsub.f32 %v540, 1.0
    %v544 = vsub.f32 %v542, 1.0
    %v545 = vsel %vm537, %v445, %v543
    %v546 = vsel %vm538, %v446, %v544
    %v547 = vstv %s44
    %v548 = vmul.f32 %v455, %v547
    %v549 = vmul.f32 %v456, %v547
    %v550 = vstv %s144
    %v551 = vadd.f32 %v548, %v550
    %v552 = vadd.f32 %v549, %v550
    %v553 = vstv %s54
    %v554 = vmul.f32 %v465, %v553
    %v555 = vmul.f32 %v466, %v553
    %v556 = vadd.f32 %v551, %v554
    %v557 = vadd.f32 %v552, %v555
    %v558 = vstv %s64
    %v559 = vmul.f32 %v475, %v558
    %v560 = vmul.f32 %v476, %v558
    %v561 = vadd.f32 %v556, %v559
    %v562 = vadd.f32 %v557, %v560
    %v563 = vstv %s74
    %v564 = vmul.f32 %v485, %v563
    %v565 = vmul.f32 %v486, %v563
    %v566 = vadd.f32 %v561, %v564
    %v567 = vadd.f32 %v562, %v565
    %v568 = vstv %s84
    %v569 = vmul.f32 %v495, %v568
    %v570 = vmul.f32 %v496, %v568
    %v571 = vadd.f32 %v566, %v569
    %v572 = vadd.f32 %v567, %v570
    %v573 = vstv %s94
    %v574 = vmul.f32 %v505, %v573
    %v575 = vmul.f32 %v506, %v573
    %v576 = vadd.f32 %v571, %v574
    %v577 = vadd.f32 %v572, %v575
    %v578 = vstv %s104
    %v579 = vmul.f32 %v515, %v578
    %v580 = vmul.f32 %v516, %v578
    %v581 = vadd.f32 %v576, %v579
    %v582 = vadd.f32 %v577, %v580
    %v583 = vstv %s114
    %v584 = vmul.f32 %v525, %v583
    %v585 = vmul.f32 %v526, %v583
    %v586 = vadd.f32 %v581, %v584
    %v587 = vadd.f32 %v582, %v585
    %v588 = vstv %s124
    %v589 = vmul.f32 %v535, %v588
    %v590 = vmul.f32 %v536, %v588
    %v591 = vadd.f32 %v586, %v589
    %v592 = vadd.f32 %v587, %v590
    %v593 = vstv %s134
    %v594 = vmul.f32 %v545, %v593
    %v595 = vmul.f32 %v546, %v593
    %v596 = vadd.f32 %v591, %v594
    %v597 = vadd.f32 %v592, %v595
    %v598 = vstv %s45
    %v599 = vmul.f32 %v455, %v598
    %v600 = vmul.f32 %v456, %v598
    %v601 = vstv %s145
    %v602 = vadd.f32 %v599, %v601
    %v603 = vadd.f32 %v600, %v601
    %v604 = vstv %s55
    %v605 = vmul.f32 %v465, %v604
    %v606 = vmul.f32 %v466, %v604
    %v607 = vadd.f32 %v602, %v605
    %v608 = vadd.f32 %v603, %v606
    %v609 = vstv %s65
    %v610 = vmul.f32 %v475, %v609
    %v611 = vmul.f32 %v476, %v609
    %v612 = vadd.f32 %v607, %v610
    %v613 = vadd.f32 %v608, %v611
    %v614 = vstv %s75
    %v615 = vmul.f32 %v485, %v614
    %v616 = vmul.f32 %v486, %v614
    %v617 = vadd.f32 %v612, %v615
    %v618 = vadd.f32 %v613, %v616
    %v619 = vstv %s85
    %v620 = vmul.f32 %v495, %v619
    %v621 = vmul.f32 %v496, %v619
    %v622 = vadd.f32 %v617, %v620
    %v623 = vadd.f32 %v618, %v621
    %v624 = vstv %s95
    %v625 = vmul.f32 %v505, %v624
    %v626 = vmul.f32 %v506, %v624
    %v627 = vadd.f32 %v622, %v625
    %v628 = vadd.f32 %v623, %v626
    %v629 = vstv %s105
    %v630 = vmul.f32 %v515, %v629
    %v631 = vmul.f32 %v516, %v629
    %v632 = vadd.f32 %v627, %v630
    %v633 = vadd.f32 %v628, %v631
    %v634 = vstv %s115
    %v635 = vmul.f32 %v525, %v634
    %v636 = vmul.f32 %v526, %v634
    %v637 = vadd.f32 %v632, %v635
    %v638 = vadd.f32 %v633, %v636
    %v639 = vstv %s125
    %v640 = vmul.f32 %v535, %v639
    %v641 = vmul.f32 %v536, %v639
    %v642 = vadd.f32 %v637, %v640
    %v643 = vadd.f32 %v638, %v641
    %v644 = vstv %s135
    %v645 = vmul.f32 %v545, %v644
    %v646 = vmul.f32 %v546, %v644
    %v647 = vadd.f32 %v642, %v645
    %v648 = vadd.f32 %v643, %v646
    %v649 = vstv %s46
    %v650 = vmul.f32 %v455, %v649
    %v651 = vmul.f32 %v456, %v649
    %v652 = vstv %s146
    %v653 = vadd.f32 %v650, %v652
    %v654 = vadd.f32 %v651, %v652
    %v655 = vstv %s56
    %v656 = vmul.f32 %v465, %v655
    %v657 = vmul.f32 %v466, %v655
    %v658 = vadd.f32 %v653, %v656
    %v659 = vadd.f32 %v654, %v657
    %v660 = vstv %s66
    %v661 = vmul.f32 %v475, %v660
    %v662 = vmul.f32 %v476, %v660
    %v663 = vadd.f32 %v658, %v661
    %v664 = vadd.f32 %v659, %v662
    %v665 = vstv %s76
    %v666 = vmul.f32 %v485, %v665
    %v667 = vmul.f32 %v486, %v665
    %v668 = vadd.f32 %v663, %v666
    %v669 = vadd.f32 %v664, %v667
    %v670 = vstv %s86
    %v671 = vmul.f32 %v495, %v670
    %v672 = vmul.f32 %v496, %v670
    %v673 = vadd.f32 %v668, %v671
    %v674 = vadd.f32 %v669, %v672
    %v675 = vstv %s96
    %v676 = vmul.f32 %v505, %v675
    %v677 = vmul.f32 %v506, %v675
    %v678 = vadd.f32 %v673, %v676
    %v679 = vadd.f32 %v674, %v677
    %v680 = vstv %s106
    %v681 = vmul.f32 %v515, %v680
    %v682 = vmul.f32 %v516, %v680
    %v683 = vadd.f32 %v678, %v681
    %v684 = vadd.f32 %v679, %v682
    %v685 = vstv %s116
    %v686 = vmul.f32 %v525, %v685
    %v687 = vmul.f32 %v526, %v685
    %v688 = vadd.f32 %v683, %v686
    %v689 = vadd.f32 %v684, %v687
    %v690 = vstv %s126
    %v691 = vmul.f32 %v535, %v690
    %v692 = vmul.f32 %v536, %v690
    %v693 = vadd.f32 %v688, %v691
    %v694 = vadd.f32 %v689, %v692
    %v695 = vstv %s136
    %v696 = vmul.f32 %v545, %v695
    %v697 = vmul.f32 %v546, %v695
    %v698 = vadd.f32 %v693, %v696
    %v699 = vadd.f32 %v694, %v697
    %v700 = vstv %s47
    %v701 = vmul.f32 %v455, %v700
    %v702 = vmul.f32 %v456, %v700
    %v703 = vstv %s147
    %v704 = vadd.f32 %v701, %v703
    %v705 = vadd.f32 %v702, %v703
    %v706 = vstv %s57
    %v707 = vmul.f32 %v465, %v706
    %v708 = vmul.f32 %v466, %v706
    %v709 = vadd.f32 %v704, %v707
    %v710 = vadd.f32 %v705, %v708
    %v711 = vstv %s67
    %v712 = vmul.f32 %v475, %v711
    %v713 = vmul.f32 %v476, %v711
    %v714 = vadd.f32 %v709, %v712
    %v715 = vadd.f32 %v710, %v713
    %v716 = vstv %s77
    %v717 = vmul.f32 %v485, %v716
    %v718 = vmul.f32 %v486, %v716
    %v719 = vadd.f32 %v714, %v717
    %v720 = vadd.f32 %v715, %v718
    %v721 = vstv %s87
    %v722 = vmul.f32 %v495, %v721
    %v723 = vmul.f32 %v496, %v721
    %v724 = vadd.f32 %v719, %v722
    %v725 = vadd.f32 %v720, %v723
    %v726 = vstv %s97
    %v727 = vmul.f32 %v505, %v726
    %v728 = vmul.f32 %v506, %v726
    %v729 = vadd.f32 %v724, %v727
    %v730 = vadd.f32 %v725, %v728
    %v731 = vstv %s107
    %v732 = vmul.f32 %v515, %v731
    %v733 = vmul.f32 %v516, %v731
    %v734 = vadd.f32 %v729, %v732
    %v735 = vadd.f32 %v730, %v733
    %v736 = vstv %s117
    %v737 = vmul.f32 %v525, %v736
    %v738 = vmul.f32 %v526, %v736
    %v739 = vadd.f32 %v734, %v737
    %v740 = vadd.f32 %v735, %v738
    %v741 = vstv %s127
    %v742 = vmul.f32 %v535, %v741
    %v743 = vmul.f32 %v536, %v741
    %v744 = vadd.f32 %v739, %v742
    %v745 = vadd.f32 %v740, %v743
    %v746 = vstv %s137
    %v747 = vmul.f32 %v545, %v746
    %v748 = vmul.f32 %v546, %v746
    %v749 = vadd.f32 %v744, %v747
    %v750 = vadd.f32 %v745, %v748
    %v751 = vstv %s48
    %v752 = vmul.f32 %v455, %v751
    %v753 = vmul.f32 %v456, %v751
    %v754 = vstv %s148
    %v755 = vadd.f32 %v752, %v754
    %v756 = vadd.f32 %v753, %v754
    %v757 = vstv %s58
    %v758 = vmul.f32 %v465, %v757
    %v759 = vmul.f32 %v466, %v757
    %v760 = vadd.f32 %v755, %v758
    %v761 = vadd.f32 %v756, %v759
    %v762 = vstv %s68
    %v763 = vmul.f32 %v475, %v762
    %v764 = vmul.f32 %v476, %v762
    %v765 = vadd.f32 %v760, %v763
    %v766 = vadd.f32 %v761, %v764
    %v767 = vstv %s78
    %v768 = vmul.f32 %v485, %v767
    %v769 = vmul.f32 %v486, %v767
    %v770 = vadd.f32 %v765, %v768
    %v771 = vadd.f32 %v766, %v769
    %v772 = vstv %s88
    %v773 = vmul.f32 %v495, %v772
    %v774 = vmul.f32 %v496, %v772
    %v775 = vadd.f32 %v770, %v773
    %v776 = vadd.f32 %v771, %v774
    %v777 = vstv %s98
    %v778 = vmul.f32 %v505, %v777
    %v779 = vmul.f32 %v506, %v777
    %v780 = vadd.f32 %v775, %v778
    %v781 = vadd.f32 %v776, %v779
    %v782 = vstv %s108
    %v783 = vmul.f32 %v515, %v782
    %v784 = vmul.f32 %v516, %v782
    %v785 = vadd.f32 %v780, %v783
    %v786 = vadd.f32 %v781, %v784
    %v787 = vstv %s118
    %v788 = vmul.f32 %v525, %v787
    %v789 = vmul.f32 %v526, %v787
    %v790 = vadd.f32 %v785, %v788
    %v791 = vadd.f32 %v786, %v789
    %v792 = vstv %s128
    %v793 = vmul.f32 %v535, %v792
    %v794 = vmul.f32 %v536, %v792
    %v795 = vadd.f32 %v790, %v793
    %v796 = vadd.f32 %v791, %v794
    %v797 = vstv %s138
    %v798 = vmul.f32 %v545, %v797
    %v799 = vmul.f32 %v546, %v797
    %v800 = vadd.f32 %v795, %v798
    %v801 = vadd.f32 %v796, %v799
    %v802 = vstv %s49
    %v803 = vmul.f32 %v455, %v802
    %v804 = vmul.f32 %v456, %v802
    %v805 = vstv %s149
    %v806 = vadd.f32 %v803, %v805
    %v807 = vadd.f32 %v804, %v805
    %v808 = vstv %s59
    %v809 = vmul.f32 %v465, %v808
    %v810 = vmul.f32 %v466, %v808
    %v811 = vadd.f32 %v806, %v809
    %v812 = vadd.f32 %v807, %v810
    %v813 = vstv %s69
    %v814 = vmul.f32 %v475, %v813
    %v815 = vmul.f32 %v476, %v813
    %v816 = vadd.f32 %v811, %v814
    %v817 = vadd.f32 %v812, %v815
    %v818 = vstv %s79
    %v819 = vmul.f32 %v485, %v818
    %v820 = vmul.f32 %v486, %v818
    %v821 = vadd.f32 %v816, %v819
    %v822 = vadd.f32 %v817, %v820
    %v823 = vstv %s89
    %v824 = vmul.f32 %v495, %v823
    %v825 = vmul.f32 %v496, %v823
    %v826 = vadd.f32 %v821, %v824
    %v827 = vadd.f32 %v822, %v825
    %v828 = vstv %s99
    %v829 = vmul.f32 %v505, %v828
    %v830 = vmul.f32 %v506, %v828
    %v831 = vadd.f32 %v826, %v829
    %v832 = vadd.f32 %v827, %v830
    %v833 = vstv %s109
    %v834 = vmul.f32 %v515, %v833
    %v835 = vmul.f32 %v516, %v833
    %v836 = vadd.f32 %v831, %v834
    %v837 = vadd.f32 %v832, %v835
    %v838 = vstv %s119
    %v839 = vmul.f32 %v525, %v838
    %v840 = vmul.f32 %v526, %v838
    %v841 = vadd.f32 %v836, %v839
    %v842 = vadd.f32 %v837, %v840
    %v843 = vstv %s129
    %v844 = vmul.f32 %v535, %v843
    %v845 = vmul.f32 %v536, %v843
    %v846 = vadd.f32 %v841, %v844
    %v847 = vadd.f32 %v842, %v845
    %v848 = vstv %s139
    %v849 = vmul.f32 %v545, %v848
    %v850 = vmul.f32 %v546, %v848
    %v851 = vadd.f32 %v846, %v849
    %v852 = vadd.f32 %v847, %v850
    %v853 = vstv %s50
    %v854 = vmul.f32 %v455, %v853
    %v855 = vmul.f32 %v456, %v853
    %v856 = vstv %s150
    %v857 = vadd.f32 %v854, %v856
    %v858 = vadd.f32 %v855, %v856
    %v859 = vstv %s60
    %v860 = vmul.f32 %v465, %v859
    %v861 = vmul.f32 %v466, %v859
    %v862 = vadd.f32 %v857, %v860
    %v863 = vadd.f32 %v858, %v861
    %v864 = vstv %s70
    %v865 = vmul.f32 %v475, %v864
    %v866 = vmul.f32 %v476, %v864
    %v867 = vadd.f32 %v862, %v865
    %v868 = vadd.f32 %v863, %v866
    %v869 = vstv %s80
    %v870 = vmul.f32 %v485, %v869
    %v871 = vmul.f32 %v486, %v869
    %v872 = vadd.f32 %v867, %v870
    %v873 = vadd.f32 %v868, %v871
    %v874 = vstv %s90
    %v875 = vmul.f32 %v495, %v874
    %v876 = vmul.f32 %v496, %v874
    %v877 = vadd.f32 %v872, %v875
    %v878 = vadd.f32 %v873, %v876
    %v879 = vstv %s100
    %v880 = vmul.f32 %v505, %v879
    %v881 = vmul.f32 %v506, %v879
    %v882 = vadd.f32 %v877, %v880
    %v883 = vadd.f32 %v878, %v881
    %v884 = vstv %s110
    %v885 = vmul.f32 %v515, %v884
    %v886 = vmul.f32 %v516, %v884
    %v887 = vadd.f32 %v882, %v885
    %v888 = vadd.f32 %v883, %v886
    %v889 = vstv %s120
    %v890 = vmul.f32 %v525, %v889
    %v891 = vmul.f32 %v526, %v889
    %v892 = vadd.f32 %v887, %v890
    %v893 = vadd.f32 %v888, %v891
    %v894 = vstv %s130
    %v895 = vmul.f32 %v535, %v894
    %v896 = vmul.f32 %v536, %v894
    %v897 = vadd.f32 %v892, %v895
    %v898 = vadd.f32 %v893, %v896
    %v899 = vstv %s140
    %v900 = vmul.f32 %v545, %v899
    %v901 = vmul.f32 %v546, %v899
    %v902 = vadd.f32 %v897, %v900
    %v903 = vadd.f32 %v898, %v901
    %v904 = vstv %s51
    %v905 = vmul.f32 %v455, %v904
    %v906 = vmul.f32 %v456, %v904
    %v907 = vstv %s151
    %v908 = vadd.f32 %v905, %v907
    %v909 = vadd.f32 %v906, %v907
    %v910 = vstv %s61
    %v911 = vmul.f32 %v465, %v910
    %v912 = vmul.f32 %v466, %v910
    %v913 = vadd.f32 %v908, %v911
    %v914 = vadd.f32 %v909, %v912
    %v915 = vstv %s71
    %v916 = vmul.f32 %v475, %v915
    %v917 = vmul.f32 %v476, %v915
    %v918 = vadd.f32 %v913, %v916
    %v919 = vadd.f32 %v914, %v917
    %v920 = vstv %s81
    %v921 = vmul.f32 %v485, %v920
    %v922 = vmul.f32 %v486, %v920
    %v923 = vadd.f32 %v918, %v921
    %v924 = vadd.f32 %v919, %v922
    %v925 = vstv %s91
    %v926 = vmul.f32 %v495, %v925
    %v927 = vmul.f32 %v496, %v925
    %v928 = vadd.f32 %v923, %v926
    %v929 = vadd.f32 %v924, %v927
    %v930 = vstv %s101
    %v931 = vmul.f32 %v505, %v930
    %v932 = vmul.f32 %v506, %v930
    %v933 = vadd.f32 %v928, %v931
    %v934 = vadd.f32 %v929, %v932
    %v935 = vstv %s111
    %v936 = vmul.f32 %v515, %v935
    %v937 = vmul.f32 %v516, %v935
    %v938 = vadd.f32 %v933, %v936
    %v939 = vadd.f32 %v934, %v937
    %v940 = vstv %s121
    %v941 = vmul.f32 %v525, %v940
    %v942 = vmul.f32 %v526, %v940
    %v943 = vadd.f32 %v938, %v941
    %v944 = vadd.f32 %v939, %v942
    %v945 = vstv %s131
    %v946 = vmul.f32 %v535, %v945
    %v947 = vmul.f32 %v536, %v945
    %v948 = vadd.f32 %v943, %v946
    %v949 = vadd.f32 %v944, %v947
    %v950 = vstv %s141
    %v951 = vmul.f32 %v545, %v950
    %v952 = vmul.f32 %v546, %v950
    %v953 = vadd.f32 %v948, %v951
    %v954 = vadd.f32 %v949, %v952
    %v955 = vstv %s52
    %v956 = vmul.f32 %v455, %v955
    %v957 = vmul.f32 %v456, %v955
    %v958 = vstv %s152
    %v959 = vadd.f32 %v956, %v958
    %v960 = vadd.f32 %v957, %v958
    %v961 = vstv %s62
    %v962 = vmul.f32 %v465, %v961
    %v963 = vmul.f32 %v466, %v961
    %v964 = vadd.f32 %v959, %v962
    %v965 = vadd.f32 %v960, %v963
    %v966 = vstv %s72
    %v967 = vmul.f32 %v475, %v966
    %v968 = vmul.f32 %v476, %v966
    %v969 = vadd.f32 %v964, %v967
    %v970 = vadd.f32 %v965, %v968
    %v971 = vstv %s82
    %v972 = vmul.f32 %v485, %v971
    %v973 = vmul.f32 %v486, %v971
    %v974 = vadd.f32 %v969, %v972
    %v975 = vadd.f32 %v970, %v973
    %v976 = vstv %s92
    %v977 = vmul.f32 %v495, %v976
    %v978 = vmul.f32 %v496, %v976
    %v979 = vadd.f32 %v974, %v977
    %v980 = vadd.f32 %v975, %v978
    %v981 = vstv %s102
    %v982 = vmul.f32 %v505, %v981
    %v983 = vmul.f32 %v506, %v981
    %v984 = vadd.f32 %v979, %v982
    %v985 = vadd.f32 %v980, %v983
    %v986 = vstv %s112
    %v987 = vmul.f32 %v515, %v986
    %v988 = vmul.f32 %v516, %v986
    %v989 = vadd.f32 %v984, %v987
    %v990 = vadd.f32 %v985, %v988
    %v991 = vstv %s122
    %v992 = vmul.f32 %v525, %v991
    %v993 = vmul.f32 %v526, %v991
    %v994 = vadd.f32 %v989, %v992
    %v995 = vadd.f32 %v990, %v993
    %v996 = vstv %s132
    %v997 = vmul.f32 %v535, %v996
    %v998 = vmul.f32 %v536, %v996
    %v999 = vadd.f32 %v994, %v997
    %v1000 = vadd.f32 %v995, %v998
    %v1001 = vstv %s142
    %v1002 = vmul.f32 %v545, %v1001
    %v1003 = vmul.f32 %v546, %v1001
    %v1004 = vadd.f32 %v999, %v1002
    %v1005 = vadd.f32 %v1000, %v1003
    %v1006 = vstv %s53
    %v1007 = vmul.f32 %v455, %v1006
    %v1008 = vmul.f32 %v456, %v1006
    %v1009 = vstv %s153
    %v1010 = vadd.f32 %v1007, %v1009
    %v1011 = vadd.f32 %v1008, %v1009
    %v1012 = vstv %s63
    %v1013 = vmul.f32 %v465, %v1012
    %v1014 = vmul.f32 %v466, %v1012
    %v1015 = vadd.f32 %v1010, %v1013
    %v1016 = vadd.f32 %v1011, %v1014
    %v1017 = vstv %s73
    %v1018 = vmul.f32 %v475, %v1017
    %v1019 = vmul.f32 %v476, %v1017
    %v1020 = vadd.f32 %v1015, %v1018
    %v1021 = vadd.f32 %v1016, %v1019
    %v1022 = vstv %s83
    %v1023 = vmul.f32 %v485, %v1022
    %v1024 = vmul.f32 %v486, %v1022
    %v1025 = vadd.f32 %v1020, %v1023
    %v1026 = vadd.f32 %v1021, %v1024
    %v1027 = vstv %s93
    %v1028 = vmul.f32 %v495, %v1027
    %v1029 = vmul.f32 %v496, %v1027
    %v1030 = vadd.f32 %v1025, %v1028
    %v1031 = vadd.f32 %v1026, %v1029
    %v1032 = vstv %s103
    %v1033 = vmul.f32 %v505, %v1032
    %v1034 = vmul.f32 %v506, %v1032
    %v1035 = vadd.f32 %v1030, %v1033
    %v1036 = vadd.f32 %v1031, %v1034
    %v1037 = vstv %s113
    %v1038 = vmul.f32 %v515, %v1037
    %v1039 = vmul.f32 %v516, %v1037
    %v1040 = vadd.f32 %v1035, %v1038
    %v1041 = vadd.f32 %v1036, %v1039
    %v1042 = vstv %s123
    %v1043 = vmul.f32 %v525, %v1042
    %v1044 = vmul.f32 %v526, %v1042
    %v1045 = vadd.f32 %v1040, %v1043
    %v1046 = vadd.f32 %v1041, %v1044
    %v1047 = vstv %s133
    %v1048 = vmul.f32 %v535, %v1047
    %v1049 = vmul.f32 %v536, %v1047
    %v1050 = vadd.f32 %v1045, %v1048
    %v1051 = vadd.f32 %v1046, %v1049
    %v1052 = vstv %s143
    %v1053 = vmul.f32 %v545, %v1052
    %v1054 = vmul.f32 %v546, %v1052
    %v1055 = vadd.f32 %v1050, %v1053
    %v1056 = vadd.f32 %v1051, %v1054
    %vm1057 = vcmp.gt.f32.partialorder %v596, 0.0
    %vm1058 = vcmp.gt.f32.partialorder %v597, 0.0
    %v1059 = vmul.f32 %v596, 1.442695
    %v1060 = vpow.pop %v1059
    %v1061 = vmul.f32 %v597, 1.442695
    %v1062 = vpow.pop %v1061
    %v1063 = vsub.f32 %v1060, 1.0
    %v1064 = vsub.f32 %v1062, 1.0
    %v1065 = vsel %vm1057, %v596, %v1063
    %v1066 = vsel %vm1058, %v597, %v1064
    %vm1067 = vcmp.gt.f32.partialorder %v647, 0.0
    %vm1068 = vcmp.gt.f32.partialorder %v648, 0.0
    %v1069 = vmul.f32 %v647, 1.442695
    %v1070 = vpow.pop %v1069
    %v1071 = vmul.f32 %v648, 1.442695
    %v1072 = vpow.pop %v1071
    %v1073 = vsub.f32 %v1070, 1.0
    %v1074 = vsub.f32 %v1072, 1.0
    %v1075 = vsel %vm1067, %v647, %v1073
    %v1076 = vsel %vm1068, %v648, %v1074
    %vm1077 = vcmp.gt.f32.partialorder %v698, 0.0
    %vm1078 = vcmp.gt.f32.partialorder %v699, 0.0
    %v1079 = vmul.f32 %v698, 1.442695
    %v1080 = vpow.pop %v1079
    %v1081 = vmul.f32 %v699, 1.442695
    %v1082 = vpow.pop %v1081
    %v1083 = vsub.f32 %v1080, 1.0
    %v1084 = vsub.f32 %v1082, 1.0
    %v1085 = vsel %vm1077, %v698, %v1083
    %v1086 = vsel %vm1078, %v699, %v1084
    %vm1087 = vcmp.gt.f32.partialorder %v749, 0.0
    %vm1088 = vcmp.gt.f32.partialorder %v750, 0.0
    %v1089 = vmul.f32 %v749, 1.442695
    %v1090 = vpow.pop %v1089
    %v1091 = vmul.f32 %v750, 1.442695
    %v1092 = vpow.pop %v1091
    %v1093 = vsub.f32 %v1090, 1.0
    %v1094 = vsub.f32 %v1092, 1.0
    %v1095 = vsel %vm1087, %v749, %v1093
    %v1096 = vsel %vm1088, %v750, %v1094
    %vm1097 = vcmp.gt.f32.partialorder %v800, 0.0
    %vm1098 = vcmp.gt.f32.partialorder %v801, 0.0
    %v1099 = vmul.f32 %v800, 1.442695
    %v1100 = vpow.pop %v1099
    %v1101 = vmul.f32 %v801, 1.442695
    %v1102 = vpow.pop %v1101
    %v1103 = vsub.f32 %v1100, 1.0
    %v1104 = vsub.f32 %v1102, 1.0
    %v1105 = vsel %vm1097, %v800, %v1103
    %v1106 = vsel %vm1098, %v801, %v1104
    %vm1107 = vcmp.gt.f32.partialorder %v851, 0.0
    %vm1108 = vcmp.gt.f32.partialorder %v852, 0.0
    %v1109 = vmul.f32 %v851, 1.442695
    %v1110 = vpow.pop %v1109
    %v1111 = vmul.f32 %v852, 1.442695
    %v1112 = vpow.pop %v1111
    %v1113 = vsub.f32 %v1110, 1.0
    %v1114 = vsub.f32 %v1112, 1.0
    %v1115 = vsel %vm1107, %v851, %v1113
    %v1116 = vsel %vm1108, %v852, %v1114
    %vm1117 = vcmp.gt.f32.partialorder %v902, 0.0
    %vm1118 = vcmp.gt.f32.partialorder %v903, 0.0
    %v1119 = vmul.f32 %v902, 1.442695
    %v1120 = vpow.pop %v1119
    %v1121 = vmul.f32 %v903, 1.442695
    %v1122 = vpow.pop %v1121
    %v1123 = vsub.f32 %v1120, 1.0
    %v1124 = vsub.f32 %v1122, 1.0
    %v1125 = vsel %vm1117, %v902, %v1123
    %v1126 = vsel %vm1118, %v903, %v1124
    %vm1127 = vcmp.gt.f32.partialorder %v953, 0.0
    %vm1128 = vcmp.gt.f32.partialorder %v954, 0.0
    %v1129 = vmul.f32 %v953, 1.442695
    %v1130 = vpow.pop %v1129
    %v1131 = vmul.f32 %v954, 1.442695
    %v1132 = vpow.pop %v1131
    %v1133 = vsub.f32 %v1130, 1.0
    %v1134 = vsub.f32 %v1132, 1.0
    %v1135 = vsel %vm1127, %v953, %v1133
    %v1136 = vsel %vm1128, %v954, %v1134
    %vm1137 = vcmp.gt.f32.partialorder %v1004, 0.0
    %vm1138 = vcmp.gt.f32.partialorder %v1005, 0.0
    %v1139 = vmul.f32 %v1004, 1.442695
    %v1140 = vpow.pop %v1139
    %v1141 = vmul.f32 %v1005, 1.442695
    %v1142 = vpow.pop %v1141
    %v1143 = vsub.f32 %v1140, 1.0
    %v1144 = vsub.f32 %v1142, 1.0
    %v1145 = vsel %vm1137, %v1004, %v1143
    %v1146 = vsel %vm1138, %v1005, %v1144
    %vm1147 = vcmp.gt.f32.partialorder %v1055, 0.0
    %vm1148 = vcmp.gt.f32.partialorder %v1056, 0.0
    %v1149 = vmul.f32 %v1055, 1.442695
    %v1150 = vpow.pop %v1149
    %v1151 = vmul.f32 %v1056, 1.442695
    %v1152 = vpow.pop %v1151
    %v1153 = vsub.f32 %v1150, 1.0
    %v1154 = vsub.f32 %v1152, 1.0
    %v1155 = vsel %vm1147, %v1055, %v1153
    %v1156 = vsel %vm1148, %v1056, %v1154
    %v1157 = vstv %s154
    %v1158 = vmul.f32 %v1065, %v1157
    %v1159 = vmul.f32 %v1066, %v1157
    %v1160 = vstv %s254
    %v1161 = vadd.f32 %v1158, %v1160
    %v1162 = vadd.f32 %v1159, %v1160
    %v1163 = vstv %s164
    %v1164 = vmul.f32 %v1075, %v1163
    %v1165 = vmul.f32 %v1076, %v1163
    %v1166 = vadd.f32 %v1161, %v1164
    %v1167 = vadd.f32 %v1162, %v1165
    %v1168 = vstv %s174
    %v1169 = vmul.f32 %v1085, %v1168
    %v1170 = vmul.f32 %v1086, %v1168
    %v1171 = vadd.f32 %v1166, %v1169
    %v1172 = vadd.f32 %v1167, %v1170
    %v1173 = vstv %s184
    %v1174 = vmul.f32 %v1095, %v1173
    %v1175 = vmul.f32 %v1096, %v1173
    %v1176 = vadd.f32 %v1171, %v1174
    %v1177 = vadd.f32 %v1172, %v1175
    %v1178 = vstv %s194
    %v1179 = vmul.f32 %v1105, %v1178
    %v1180 = vmul.f32 %v1106, %v1178
    %v1181 = vadd.f32 %v1176, %v1179
    %v1182 = vadd.f32 %v1177, %v1180
    %v1183 = vstv %s204
    %v1184 = vmul.f32 %v1115, %v1183
    %v1185 = vmul.f32 %v1116, %v1183
    %v1186 = vadd.f32 %v1181, %v1184
    %v1187 = vadd.f32 %v1182, %v1185
    %v1188 = vstv %s214
    %v1189 = vmul.f32 %v1125, %v1188
    %v1190 = vmul.f32 %v1126, %v1188
    %v1191 = vadd.f32 %v1186, %v1189
    %v1192 = vadd.f32 %v1187, %v1190
    %v1193 = vstv %s224
    %v1194 = vmul.f32 %v1135, %v1193
    %v1195 = vmul.f32 %v1136, %v1193
    %v1196 = vadd.f32 %v1191, %v1194
    %v1197 = vadd.f32 %v1192, %v1195
    %v1198 = vstv %s234
    %v1199 = vmul.f32 %v1145, %v1198
    %v1200 = vmul.f32 %v1146, %v1198
    %v1201 = vadd.f32 %v1196, %v1199
    %v1202 = vadd.f32 %v1197, %v1200
    %v1203 = vstv %s244
    %v1204 = vmul.f32 %v1155, %v1203
    %v1205 = vmul.f32 %v1156, %v1203
    %v1206 = vadd.f32 %v1201, %v1204
    %v1207 = vadd.f32 %v1202, %v1205
    %v1208 = vstv %s155
    %v1209 = vmul.f32 %v1065, %v1208
    %v1210 = vmul.f32 %v1066, %v1208
    %v1211 = vstv %s255
    %v1212 = vadd.f32 %v1209, %v1211
    %v1213 = vadd.f32 %v1210, %v1211
    %v1214 = vstv %s165
    %v1215 = vmul.f32 %v1075, %v1214
    %v1216 = vmul.f32 %v1076, %v1214
    %v1217 = vadd.f32 %v1212, %v1215
    %v1218 = vadd.f32 %v1213, %v1216
    %v1219 = vstv %s175
    %v1220 = vmul.f32 %v1085, %v1219
    %v1221 = vmul.f32 %v1086, %v1219
    %v1222 = vadd.f32 %v1217, %v1220
    %v1223 = vadd.f32 %v1218, %v1221
    %v1224 = vstv %s185
    %v1225 = vmul.f32 %v1095, %v1224
    %v1226 = vmul.f32 %v1096, %v1224
    %v1227 = vadd.f32 %v1222, %v1225
    %v1228 = vadd.f32 %v1223, %v1226
    %v1229 = vstv %s195
    %v1230 = vmul.f32 %v1105, %v1229
    %v1231 = vmul.f32 %v1106, %v1229
    %v1232 = vadd.f32 %v1227, %v1230
    %v1233 = vadd.f32 %v1228, %v1231
    %v1234 = vstv %s205
    %v1235 = vmul.f32 %v1115, %v1234
    %v1236 = vmul.f32 %v1116, %v1234
    %v1237 = vadd.f32 %v1232, %v1235
    %v1238 = vadd.f32 %v1233, %v1236
    %v1239 = vstv %s215
    %v1240 = vmul.f32 %v1125, %v1239
    %v1241 = vmul.f32 %v1126, %v1239
    %v1242 = vadd.f32 %v1237, %v1240
    %v1243 = vadd.f32 %v1238, %v1241
    %v1244 = vstv %s225
    %v1245 = vmul.f32 %v1135, %v1244
    %v1246 = vmul.f32 %v1136, %v1244
    %v1247 = vadd.f32 %v1242, %v1245
    %v1248 = vadd.f32 %v1243, %v1246
    %v1249 = vstv %s235
    %v1250 = vmul.f32 %v1145, %v1249
    %v1251 = vmul.f32 %v1146, %v1249
    %v1252 = vadd.f32 %v1247, %v1250
    %v1253 = vadd.f32 %v1248, %v1251
    %v1254 = vstv %s245
    %v1255 = vmul.f32 %v1155, %v1254
    %v1256 = vmul.f32 %v1156, %v1254
    %v1257 = vadd.f32 %v1252, %v1255
    %v1258 = vadd.f32 %v1253, %v1256
    %v1259 = vstv %s156
    %v1260 = vmul.f32 %v1065, %v1259
    %v1261 = vmul.f32 %v1066, %v1259
    %v1262 = vstv %s256
    %v1263 = vadd.f32 %v1260, %v1262
    %v1264 = vadd.f32 %v1261, %v1262
    %v1265 = vstv %s166
    %v1266 = vmul.f32 %v1075, %v1265
    %v1267 = vmul.f32 %v1076, %v1265
    %v1268 = vadd.f32 %v1263, %v1266
    %v1269 = vadd.f32 %v1264, %v1267
    %v1270 = vstv %s176
    %v1271 = vmul.f32 %v1085, %v1270
    %v1272 = vmul.f32 %v1086, %v1270
    %v1273 = vadd.f32 %v1268, %v1271
    %v1274 = vadd.f32 %v1269, %v1272
    %v1275 = vstv %s186
    %v1276 = vmul.f32 %v1095, %v1275
    %v1277 = vmul.f32 %v1096, %v1275
    %v1278 = vadd.f32 %v1273, %v1276
    %v1279 = vadd.f32 %v1274, %v1277
    %v1280 = vstv %s196
    %v1281 = vmul.f32 %v1105, %v1280
    %v1282 = vmul.f32 %v1106, %v1280
    %v1283 = vadd.f32 %v1278, %v1281
    %v1284 = vadd.f32 %v1279, %v1282
    %v1285 = vstv %s206
    %v1286 = vmul.f32 %v1115, %v1285
    %v1287 = vmul.f32 %v1116, %v1285
    %v1288 = vadd.f32 %v1283, %v1286
    %v1289 = vadd.f32 %v1284, %v1287
    %v1290 = vstv %s216
    %v1291 = vmul.f32 %v1125, %v1290
    %v1292 = vmul.f32 %v1126, %v1290
    %v1293 = vadd.f32 %v1288, %v1291
    %v1294 = vadd.f32 %v1289, %v1292
    %v1295 = vstv %s226
    %v1296 = vmul.f32 %v1135, %v1295
    %v1297 = vmul.f32 %v1136, %v1295
    %v1298 = vadd.f32 %v1293, %v1296
    %v1299 = vadd.f32 %v1294, %v1297
    %v1300 = vstv %s236
    %v1301 = vmul.f32 %v1145, %v1300
    %v1302 = vmul.f32 %v1146, %v1300
    %v1303 = vadd.f32 %v1298, %v1301
    %v1304 = vadd.f32 %v1299, %v1302
    %v1305 = vstv %s246
    %v1306 = vmul.f32 %v1155, %v1305
    %v1307 = vmul.f32 %v1156, %v1305
    %v1308 = vadd.f32 %v1303, %v1306
    %v1309 = vadd.f32 %v1304, %v1307
    %v1310 = vstv %s157
    %v1311 = vmul.f32 %v1065, %v1310
    %v1312 = vmul.f32 %v1066, %v1310
    %v1313 = vstv %s257
    %v1314 = vadd.f32 %v1311, %v1313
    %v1315 = vadd.f32 %v1312, %v1313
    %v1316 = vstv %s167
    %v1317 = vmul.f32 %v1075, %v1316
    %v1318 = vmul.f32 %v1076, %v1316
    %v1319 = vadd.f32 %v1314, %v1317
    %v1320 = vadd.f32 %v1315, %v1318
    %v1321 = vstv %s177
    %v1322 = vmul.f32 %v1085, %v1321
    %v1323 = vmul.f32 %v1086, %v1321
    %v1324 = vadd.f32 %v1319, %v1322
    %v1325 = vadd.f32 %v1320, %v1323
    %v1326 = vstv %s187
    %v1327 = vmul.f32 %v1095, %v1326
    %v1328 = vmul.f32 %v1096, %v1326
    %v1329 = vadd.f32 %v1324, %v1327
    %v1330 = vadd.f32 %v1325, %v1328
    %v1331 = vstv %s197
    %v1332 = vmul.f32 %v1105, %v1331
    %v1333 = vmul.f32 %v1106, %v1331
    %v1334 = vadd.f32 %v1329, %v1332
    %v1335 = vadd.f32 %v1330, %v1333
    %v1336 = vstv %s207
    %v1337 = vmul.f32 %v1115, %v1336
    %v1338 = vmul.f32 %v1116, %v1336
    %v1339 = vadd.f32 %v1334, %v1337
    %v1340 = vadd.f32 %v1335, %v1338
    %v1341 = vstv %s217
    %v1342 = vmul.f32 %v1125, %v1341
    %v1343 = vmul.f32 %v1126, %v1341
    %v1344 = vadd.f32 %v1339, %v1342
    %v1345 = vadd.f32 %v1340, %v1343
    %v1346 = vstv %s227
    %v1347 = vmul.f32 %v1135, %v1346
    %v1348 = vmul.f32 %v1136, %v1346
    %v1349 = vadd.f32 %v1344, %v1347
    %v1350 = vadd.f32 %v1345, %v1348
    %v1351 = vstv %s237
    %v1352 = vmul.f32 %v1145, %v1351
    %v1353 = vmul.f32 %v1146, %v1351
    %v1354 = vadd.f32 %v1349, %v1352
    %v1355 = vadd.f32 %v1350, %v1353
    %v1356 = vstv %s247
    %v1357 = vmul.f32 %v1155, %v1356
    %v1358 = vmul.f32 %v1156, %v1356
    %v1359 = vadd.f32 %v1354, %v1357
    %v1360 = vadd.f32 %v1355, %v1358
    %v1361 = vstv %s158
    %v1362 = vmul.f32 %v1065, %v1361
    %v1363 = vmul.f32 %v1066, %v1361
    %v1364 = vstv %s258
    %v1365 = vadd.f32 %v1362, %v1364
    %v1366 = vadd.f32 %v1363, %v1364
    %v1367 = vstv %s168
    %v1368 = vmul.f32 %v1075, %v1367
    %v1369 = vmul.f32 %v1076, %v1367
    %v1370 = vadd.f32 %v1365, %v1368
    %v1371 = vadd.f32 %v1366, %v1369
    %v1372 = vstv %s178
    %v1373 = vmul.f32 %v1085, %v1372
    %v1374 = vmul.f32 %v1086, %v1372
    %v1375 = vadd.f32 %v1370, %v1373
    %v1376 = vadd.f32 %v1371, %v1374
    %v1377 = vstv %s188
    %v1378 = vmul.f32 %v1095, %v1377
    %v1379 = vmul.f32 %v1096, %v1377
    %v1380 = vadd.f32 %v1375, %v1378
    %v1381 = vadd.f32 %v1376, %v1379
    %v1382 = vstv %s198
    %v1383 = vmul.f32 %v1105, %v1382
    %v1384 = vmul.f32 %v1106, %v1382
    %v1385 = vadd.f32 %v1380, %v1383
    %v1386 = vadd.f32 %v1381, %v1384
    %v1387 = vstv %s208
    %v1388 = vmul.f32 %v1115, %v1387
    %v1389 = vmul.f32 %v1116, %v1387
    %v1390 = vadd.f32 %v1385, %v1388
    %v1391 = vadd.f32 %v1386, %v1389
    %v1392 = vstv %s218
    %v1393 = vmul.f32 %v1125, %v1392
    %v1394 = vmul.f32 %v1126, %v1392
    %v1395 = vadd.f32 %v1390, %v1393
    %v1396 = vadd.f32 %v1391, %v1394
    %v1397 = vstv %s228
    %v1398 = vmul.f32 %v1135, %v1397
    %v1399 = vmul.f32 %v1136, %v1397
    %v1400 = vadd.f32 %v1395, %v1398
    %v1401 = vadd.f32 %v1396, %v1399
    %v1402 = vstv %s238
    %v1403 = vmul.f32 %v1145, %v1402
    %v1404 = vmul.f32 %v1146, %v1402
    %v1405 = vadd.f32 %v1400, %v1403
    %v1406 = vadd.f32 %v1401, %v1404
    %v1407 = vstv %s248
    %v1408 = vmul.f32 %v1155, %v1407
    %v1409 = vmul.f32 %v1156, %v1407
    %v1410 = vadd.f32 %v1405, %v1408
    %v1411 = vadd.f32 %v1406, %v1409
    %v1412 = vstv %s159
    %v1413 = vmul.f32 %v1065, %v1412
    %v1414 = vmul.f32 %v1066, %v1412
    %v1415 = vstv %s259
    %v1416 = vadd.f32 %v1413, %v1415
    %v1417 = vadd.f32 %v1414, %v1415
    %v1418 = vstv %s169
    %v1419 = vmul.f32 %v1075, %v1418
    %v1420 = vmul.f32 %v1076, %v1418
    %v1421 = vadd.f32 %v1416, %v1419
    %v1422 = vadd.f32 %v1417, %v1420
    %v1423 = vstv %s179
    %v1424 = vmul.f32 %v1085, %v1423
    %v1425 = vmul.f32 %v1086, %v1423
    %v1426 = vadd.f32 %v1421, %v1424
    %v1427 = vadd.f32 %v1422, %v1425
    %v1428 = vstv %s189
    %v1429 = vmul.f32 %v1095, %v1428
    %v1430 = vmul.f32 %v1096, %v1428
    %v1431 = vadd.f32 %v1426, %v1429
    %v1432 = vadd.f32 %v1427, %v1430
    %v1433 = vstv %s199
    %v1434 = vmul.f32 %v1105, %v1433
    %v1435 = vmul.f32 %v1106, %v1433
    %v1436 = vadd.f32 %v1431, %v1434
    %v1437 = vadd.f32 %v1432, %v1435
    %v1438 = vstv %s209
    %v1439 = vmul.f32 %v1115, %v1438
    %v1440 = vmul.f32 %v1116, %v1438
    %v1441 = vadd.f32 %v1436, %v1439
    %v1442 = vadd.f32 %v1437, %v1440
    %v1443 = vstv %s219
    %v1444 = vmul.f32 %v1125, %v1443
    %v1445 = vmul.f32 %v1126, %v1443
    %v1446 = vadd.f32 %v1441, %v1444
    %v1447 = vadd.f32 %v1442, %v1445
    %v1448 = vstv %s229
    %v1449 = vmul.f32 %v1135, %v1448
    %v1450 = vmul.f32 %v1136, %v1448
    %v1451 = vadd.f32 %v1446, %v1449
    %v1452 = vadd.f32 %v1447, %v1450
    %v1453 = vstv %s239
    %v1454 = vmul.f32 %v1145, %v1453
    %v1455 = vmul.f32 %v1146, %v1453
    %v1456 = vadd.f32 %v1451, %v1454
    %v1457 = vadd.f32 %v1452, %v1455
    %v1458 = vstv %s249
    %v1459 = vmul.f32 %v1155, %v1458
    %v1460 = vmul.f32 %v1156, %v1458
    %v1461 = vadd.f32 %v1456, %v1459
    %v1462 = vadd.f32 %v1457, %v1460
    %v1463 = vstv %s160
    %v1464 = vmul.f32 %v1065, %v1463
    %v1465 = vmul.f32 %v1066, %v1463
    %v1466 = vstv %s260
    %v1467 = vadd.f32 %v1464, %v1466
    %v1468 = vadd.f32 %v1465, %v1466
    %v1469 = vstv %s170
    %v1470 = vmul.f32 %v1075, %v1469
    %v1471 = vmul.f32 %v1076, %v1469
    %v1472 = vadd.f32 %v1467, %v1470
    %v1473 = vadd.f32 %v1468, %v1471
    %v1474 = vstv %s180
    %v1475 = vmul.f32 %v1085, %v1474
    %v1476 = vmul.f32 %v1086, %v1474
    %v1477 = vadd.f32 %v1472, %v1475
    %v1478 = vadd.f32 %v1473, %v1476
    %v1479 = vstv %s190
    %v1480 = vmul.f32 %v1095, %v1479
    %v1481 = vmul.f32 %v1096, %v1479
    %v1482 = vadd.f32 %v1477, %v1480
    %v1483 = vadd.f32 %v1478, %v1481
    %v1484 = vstv %s200
    %v1485 = vmul.f32 %v1105, %v1484
    %v1486 = vmul.f32 %v1106, %v1484
    %v1487 = vadd.f32 %v1482, %v1485
    %v1488 = vadd.f32 %v1483, %v1486
    %v1489 = vstv %s210
    %v1490 = vmul.f32 %v1115, %v1489
    %v1491 = vmul.f32 %v1116, %v1489
    %v1492 = vadd.f32 %v1487, %v1490
    %v1493 = vadd.f32 %v1488, %v1491
    %v1494 = vstv %s220
    %v1495 = vmul.f32 %v1125, %v1494
    %v1496 = vmul.f32 %v1126, %v1494
    %v1497 = vadd.f32 %v1492, %v1495
    %v1498 = vadd.f32 %v1493, %v1496
    %v1499 = vstv %s230
    %v1500 = vmul.f32 %v1135, %v1499
    %v1501 = vmul.f32 %v1136, %v1499
    %v1502 = vadd.f32 %v1497, %v1500
    %v1503 = vadd.f32 %v1498, %v1501
    %v1504 = vstv %s240
    %v1505 = vmul.f32 %v1145, %v1504
    %v1506 = vmul.f32 %v1146, %v1504
    %v1507 = vadd.f32 %v1502, %v1505
    %v1508 = vadd.f32 %v1503, %v1506
    %v1509 = vstv %s250
    %v1510 = vmul.f32 %v1155, %v1509
    %v1511 = vmul.f32 %v1156, %v1509
    %v1512 = vadd.f32 %v1507, %v1510
    %v1513 = vadd.f32 %v1508, %v1511
    %v1514 = vstv %s161
    %v1515 = vmul.f32 %v1065, %v1514
    %v1516 = vmul.f32 %v1066, %v1514
    %v1517 = vstv %s261
    %v1518 = vadd.f32 %v1515, %v1517
    %v1519 = vadd.f32 %v1516, %v1517
    %v1520 = vstv %s171
    %v1521 = vmul.f32 %v1075, %v1520
    %v1522 = vmul.f32 %v1076, %v1520
    %v1523 = vadd.f32 %v1518, %v1521
    %v1524 = vadd.f32 %v1519, %v1522
    %v1525 = vstv %s181
    %v1526 = vmul.f32 %v1085, %v1525
    %v1527 = vmul.f32 %v1086, %v1525
    %v1528 = vadd.f32 %v1523, %v1526
    %v1529 = vadd.f32 %v1524, %v1527
    %v1530 = vstv %s191
    %v1531 = vmul.f32 %v1095, %v1530
    %v1532 = vmul.f32 %v1096, %v1530
    %v1533 = vadd.f32 %v1528, %v1531
    %v1534 = vadd.f32 %v1529, %v1532
    %v1535 = vstv %s201
    %v1536 = vmul.f32 %v1105, %v1535
    %v1537 = vmul.f32 %v1106, %v1535
    %v1538 = vadd.f32 %v1533, %v1536
    %v1539 = vadd.f32 %v1534, %v1537
    %v1540 = vstv %s211
    %v1541 = vmul.f32 %v1115, %v1540
    %v1542 = vmul.f32 %v1116, %v1540
    %v1543 = vadd.f32 %v1538, %v1541
    %v1544 = vadd.f32 %v1539, %v1542
    %v1545 = vstv %s221
    %v1546 = vmul.f32 %v1125, %v1545
    %v1547 = vmul.f32 %v1126, %v1545
    %v1548 = vadd.f32 %v1543, %v1546
    %v1549 = vadd.f32 %v1544, %v1547
    %v1550 = vstv %s231
    %v1551 = vmul.f32 %v1135, %v1550
    %v1552 = vmul.f32 %v1136, %v1550
    %v1553 = vadd.f32 %v1548, %v1551
    %v1554 = vadd.f32 %v1549, %v1552
    %v1555 = vstv %s241
    %v1556 = vmul.f32 %v1145, %v1555
    %v1557 = vmul.f32 %v1146, %v1555
    %v1558 = vadd.f32 %v1553, %v1556
    %v1559 = vadd.f32 %v1554, %v1557
    %v1560 = vstv %s251
    %v1561 = vmul.f32 %v1155, %v1560
    %v1562 = vmul.f32 %v1156, %v1560
    %v1563 = vadd.f32 %v1558, %v1561
    %v1564 = vadd.f32 %v1559, %v1562
    %v1565 = vstv %s162
    %v1566 = vmul.f32 %v1065, %v1565
    %v1567 = vmul.f32 %v1066, %v1565
    %v1568 = vstv %s262
    %v1569 = vadd.f32 %v1566, %v1568
    %v1570 = vadd.f32 %v1567, %v1568
    %v1571 = vstv %s172
    %v1572 = vmul.f32 %v1075, %v1571
    %v1573 = vmul.f32 %v1076, %v1571
    %v1574 = vadd.f32 %v1569, %v1572
    %v1575 = vadd.f32 %v1570, %v1573
    %v1576 = vstv %s182
    %v1577 = vmul.f32 %v1085, %v1576
    %v1578 = vmul.f32 %v1086, %v1576
    %v1579 = vadd.f32 %v1574, %v1577
    %v1580 = vadd.f32 %v1575, %v1578
    %v1581 = vstv %s192
    %v1582 = vmul.f32 %v1095, %v1581
    %v1583 = vmul.f32 %v1096, %v1581
    %v1584 = vadd.f32 %v1579, %v1582
    %v1585 = vadd.f32 %v1580, %v1583
    %v1586 = vstv %s202
    %v1587 = vmul.f32 %v1105, %v1586
    %v1588 = vmul.f32 %v1106, %v1586
    %v1589 = vadd.f32 %v1584, %v1587
    %v1590 = vadd.f32 %v1585, %v1588
    %v1591 = vstv %s212
    %v1592 = vmul.f32 %v1115, %v1591
    %v1593 = vmul.f32 %v1116, %v1591
    %v1594 = vadd.f32 %v1589, %v1592
    %v1595 = vadd.f32 %v1590, %v1593
    %v1596 = vstv %s222
    %v1597 = vmul.f32 %v1125, %v1596
    %v1598 = vmul.f32 %v1126, %v1596
    %v1599 = vadd.f32 %v1594, %v1597
    %v1600 = vadd.f32 %v1595, %v1598
    %v1601 = vstv %s232
    %v1602 = vmul.f32 %v1135, %v1601
    %v1603 = vmul.f32 %v1136, %v1601
    %v1604 = vadd.f32 %v1599, %v1602
    %v1605 = vadd.f32 %v1600, %v1603
    %v1606 = vstv %s242
    %v1607 = vmul.f32 %v1145, %v1606
    %v1608 = vmul.f32 %v1146, %v1606
    %v1609 = vadd.f32 %v1604, %v1607
    %v1610 = vadd.f32 %v1605, %v1608
    %v1611 = vstv %s252
    %v1612 = vmul.f32 %v1155, %v1611
    %v1613 = vmul.f32 %v1156, %v1611
    %v1614 = vadd.f32 %v1609, %v1612
    %v1615 = vadd.f32 %v1610, %v1613
    %v1616 = vstv %s163
    %v1617 = vmul.f32 %v1065, %v1616
    %v1618 = vmul.f32 %v1066, %v1616
    %v1619 = vstv %s263
    %v1620 = vadd.f32 %v1617, %v1619
    %v1621 = vadd.f32 %v1618, %v1619
    %v1622 = vstv %s173
    %v1623 = vmul.f32 %v1075, %v1622
    %v1624 = vmul.f32 %v1076, %v1622
    %v1625 = vadd.f32 %v1620, %v1623
    %v1626 = vadd.f32 %v1621, %v1624
    %v1627 = vstv %s183
    %v1628 = vmul.f32 %v1085, %v1627
    %v1629 = vmul.f32 %v1086, %v1627
    %v1630 = vadd.f32 %v1625, %v1628
    %v1631 = vadd.f32 %v1626, %v1629
    %v1632 = vstv %s193
    %v1633 = vmul.f32 %v1095, %v1632
    %v1634 = vmul.f32 %v1096, %v1632
    %v1635 = vadd.f32 %v1630, %v1633
    %v1636 = vadd.f32 %v1631, %v1634
    %v1637 = vstv %s203
    %v1638 = vmul.f32 %v1105, %v1637
    %v1639 = vmul.f32 %v1106, %v1637
    %v1640 = vadd.f32 %v1635, %v1638
    %v1641 = vadd.f32 %v1636, %v1639
    %v1642 = vstv %s213
    %v1643 = vmul.f32 %v1115, %v1642
    %v1644 = vmul.f32 %v1116, %v1642
    %v1645 = vadd.f32 %v1640, %v1643
    %v1646 = vadd.f32 %v1641, %v1644
    %v1647 = vstv %s223
    %v1648 = vmul.f32 %v1125, %v1647
    %v1649 = vmul.f32 %v1126, %v1647
    %v1650 = vadd.f32 %v1645, %v1648
    %v1651 = vadd.f32 %v1646, %v1649
    %v1652 = vstv %s233
    %v1653 = vmul.f32 %v1135, %v1652
    %v1654 = vmul.f32 %v1136, %v1652
    %v1655 = vadd.f32 %v1650, %v1653
    %v1656 = vadd.f32 %v1651, %v1654
    %v1657 = vstv %s243
    %v1658 = vmul.f32 %v1145, %v1657
    %v1659 = vmul.f32 %v1146, %v1657
    %v1660 = vadd.f32 %v1655, %v1658
    %v1661 = vadd.f32 %v1656, %v1659
    %v1662 = vstv %s253
    %v1663 = vmul.f32 %v1155, %v1662
    %v1664 = vmul.f32 %v1156, %v1662
    %v1665 = vadd.f32 %v1660, %v1663
    %v1666 = vadd.f32 %v1661, %v1664
    %vm1667 = vcmp.gt.f32.partialorder %v1206, 0.0
    %vm1668 = vcmp.gt.f32.partialorder %v1207, 0.0
    %v1669 = vmul.f32 %v1206, 1.442695
    %v1670 = vpow.pop %v1669
    %v1671 = vmul.f32 %v1207, 1.442695
    %v1672 = vpow.pop %v1671
    %v1673 = vsub.f32 %v1670, 1.0
    %v1674 = vsub.f32 %v1672, 1.0
    %v1675 = vsel %vm1667, %v1206, %v1673
    %v1676 = vsel %vm1668, %v1207, %v1674
    %vm1677 = vcmp.gt.f32.partialorder %v1257, 0.0
    %vm1678 = vcmp.gt.f32.partialorder %v1258, 0.0
    %v1679 = vmul.f32 %v1257, 1.442695
    %v1680 = vpow.pop %v1679
    %v1681 = vmul.f32 %v1258, 1.442695
    %v1682 = vpow.pop %v1681
    %v1683 = vsub.f32 %v1680, 1.0
    %v1684 = vsub.f32 %v1682, 1.0
    %v1685 = vsel %vm1677, %v1257, %v1683
    %v1686 = vsel %vm1678, %v1258, %v1684
    %vm1687 = vcmp.gt.f32.partialorder %v1308, 0.0
    %vm1688 = vcmp.gt.f32.partialorder %v1309, 0.0
    %v1689 = vmul.f32 %v1308, 1.442695
    %v1690 = vpow.pop %v1689
    %v1691 = vmul.f32 %v1309, 1.442695
    %v1692 = vpow.pop %v1691
    %v1693 = vsub.f32 %v1690, 1.0
    %v1694 = vsub.f32 %v1692, 1.0
    %v1695 = vsel %vm1687, %v1308, %v1693
    %v1696 = vsel %vm1688, %v1309, %v1694
    %vm1697 = vcmp.gt.f32.partialorder %v1359, 0.0
    %vm1698 = vcmp.gt.f32.partialorder %v1360, 0.0
    %v1699 = vmul.f32 %v1359, 1.442695
    %v1700 = vpow.pop %v1699
    %v1701 = vmul.f32 %v1360, 1.442695
    %v1702 = vpow.pop %v1701
    %v1703 = vsub.f32 %v1700, 1.0
    %v1704 = vsub.f32 %v1702, 1.0
    %v1705 = vsel %vm1697, %v1359, %v1703
    %v1706 = vsel %vm1698, %v1360, %v1704
    %vm1707 = vcmp.gt.f32.partialorder %v1410, 0.0
    %vm1708 = vcmp.gt.f32.partialorder %v1411, 0.0
    %v1709 = vmul.f32 %v1410, 1.442695
    %v1710 = vpow.pop %v1709
    %v1711 = vmul.f32 %v1411, 1.442695
    %v1712 = vpow.pop %v1711
    %v1713 = vsub.f32 %v1710, 1.0
    %v1714 = vsub.f32 %v1712, 1.0
    %v1715 = vsel %vm1707, %v1410, %v1713
    %v1716 = vsel %vm1708, %v1411, %v1714
    %vm1717 = vcmp.gt.f32.partialorder %v1461, 0.0
    %vm1718 = vcmp.gt.f32.partialorder %v1462, 0.0
    %v1719 = vmul.f32 %v1461, 1.442695
    %v1720 = vpow.pop %v1719
    %v1721 = vmul.f32 %v1462, 1.442695
    %v1722 = vpow.pop %v1721
    %v1723 = vsub.f32 %v1720, 1.0
    %v1724 = vsub.f32 %v1722, 1.0
    %v1725 = vsel %vm1717, %v1461, %v1723
    %v1726 = vsel %vm1718, %v1462, %v1724
    %vm1727 = vcmp.gt.f32.partialorder %v1512, 0.0
    %vm1728 = vcmp.gt.f32.partialorder %v1513, 0.0
    %v1729 = vmul.f32 %v1512, 1.442695
    %v1730 = vpow.pop %v1729
    %v1731 = vmul.f32 %v1513, 1.442695
    %v1732 = vpow.pop %v1731
    %v1733 = vsub.f32 %v1730, 1.0
    %v1734 = vsub.f32 %v1732, 1.0
    %v1735 = vsel %vm1727, %v1512, %v1733
    %v1736 = vsel %vm1728, %v1513, %v1734
    %vm1737 = vcmp.gt.f32.partialorder %v1563, 0.0
    %vm1738 = vcmp.gt.f32.partialorder %v1564, 0.0
    %v1739 = vmul.f32 %v1563, 1.442695
    %v1740 = vpow.pop %v1739
    %v1741 = vmul.f32 %v1564, 1.442695
    %v1742 = vpow.pop %v1741
    %v1743 = vsub.f32 %v1740, 1.0
    %v1744 = vsub.f32 %v1742, 1.0
    %v1745 = vsel %vm1737, %v1563, %v1743
    %v1746 = vsel %vm1738, %v1564, %v1744
    %vm1747 = vcmp.gt.f32.partialorder %v1614, 0.0
    %vm1748 = vcmp.gt.f32.partialorder %v1615, 0.0
    %v1749 = vmul.f32 %v1614, 1.442695
    %v1750 = vpow.pop %v1749
    %v1751 = vmul.f32 %v1615, 1.442695
    %v1752 = vpow.pop %v1751
    %v1753 = vsub.f32 %v1750, 1.0
    %v1754 = vsub.f32 %v1752, 1.0
    %v1755 = vsel %vm1747, %v1614, %v1753
    %v1756 = vsel %vm1748, %v1615, %v1754
    %vm1757 = vcmp.gt.f32.partialorder %v1665, 0.0
    %vm1758 = vcmp.gt.f32.partialorder %v1666, 0.0
    %v1759 = vmul.f32 %v1665, 1.442695
    %v1760 = vpow.pop %v1759
    %v1761 = vmul.f32 %v1666, 1.442695
    %v1762 = vpow.pop %v1761
    %v1763 = vsub.f32 %v1760, 1.0
    %v1764 = vsub.f32 %v1762, 1.0
    %v1765 = vsel %vm1757, %v1665, %v1763
    %v1766 = vsel %vm1758, %v1666, %v1764
    %v1767 = vstv %s264
    %v1768 = vmul.f32 %v1675, %v1767
    %v1769 = vmul.f32 %v1676, %v1767
    %v1770 = vstv %s364
    %v1771 = vadd.f32 %v1768, %v1770
    %v1772 = vadd.f32 %v1769, %v1770
    %v1773 = vstv %s274
    %v1774 = vmul.f32 %v1685, %v1773
    %v1775 = vmul.f32 %v1686, %v1773
    %v1776 = vadd.f32 %v1771, %v1774
    %v1777 = vadd.f32 %v1772, %v1775
    %v1778 = vstv %s284
    %v1779 = vmul.f32 %v1695, %v1778
    %v1780 = vmul.f32 %v1696, %v1778
    %v1781 = vadd.f32 %v1776, %v1779
    %v1782 = vadd.f32 %v1777, %v1780
    %v1783 = vstv %s294
    %v1784 = vmul.f32 %v1705, %v1783
    %v1785 = vmul.f32 %v1706, %v1783
    %v1786 = vadd.f32 %v1781, %v1784
    %v1787 = vadd.f32 %v1782, %v1785
    %v1788 = vstv %s304
    %v1789 = vmul.f32 %v1715, %v1788
    %v1790 = vmul.f32 %v1716, %v1788
    %v1791 = vadd.f32 %v1786, %v1789
    %v1792 = vadd.f32 %v1787, %v1790
    %v1793 = vstv %s314
    %v1794 = vmul.f32 %v1725, %v1793
    %v1795 = vmul.f32 %v1726, %v1793
    %v1796 = vadd.f32 %v1791, %v1794
    %v1797 = vadd.f32 %v1792, %v1795
    %v1798 = vstv %s324
    %v1799 = vmul.f32 %v1735, %v1798
    %v1800 = vmul.f32 %v1736, %v1798
    %v1801 = vadd.f32 %v1796, %v1799
    %v1802 = vadd.f32 %v1797, %v1800
    %v1803 = vstv %s334
    %v1804 = vmul.f32 %v1745, %v1803
    %v1805 = vmul.f32 %v1746, %v1803
    %v1806 = vadd.f32 %v1801, %v1804
    %v1807 = vadd.f32 %v1802, %v1805
    %v1808 = vstv %s344
    %v1809 = vmul.f32 %v1755, %v1808
    %v1810 = vmul.f32 %v1756, %v1808
    %v1811 = vadd.f32 %v1806, %v1809
    %v1812 = vadd.f32 %v1807, %v1810
    %v1813 = vstv %s354
    %v1814 = vmul.f32 %v1765, %v1813
    %v1815 = vmul.f32 %v1766, %v1813
    %v1816 = vadd.f32 %v1811, %v1814
    %v1817 = vadd.f32 %v1812, %v1815
    %v1818 = vstv %s265
    %v1819 = vmul.f32 %v1675, %v1818
    %v1820 = vmul.f32 %v1676, %v1818
    %v1821 = vstv %s365
    %v1822 = vadd.f32 %v1819, %v1821
    %v1823 = vadd.f32 %v1820, %v1821
    %v1824 = vstv %s275
    %v1825 = vmul.f32 %v1685, %v1824
    %v1826 = vmul.f32 %v1686, %v1824
    %v1827 = vadd.f32 %v1822, %v1825
    %v1828 = vadd.f32 %v1823, %v1826
    %v1829 = vstv %s285
    %v1830 = vmul.f32 %v1695, %v1829
    %v1831 = vmul.f32 %v1696, %v1829
    %v1832 = vadd.f32 %v1827, %v1830
    %v1833 = vadd.f32 %v1828, %v1831
    %v1834 = vstv %s295
    %v1835 = vmul.f32 %v1705, %v1834
    %v1836 = vmul.f32 %v1706, %v1834
    %v1837 = vadd.f32 %v1832, %v1835
    %v1838 = vadd.f32 %v1833, %v1836
    %v1839 = vstv %s305
    %v1840 = vmul.f32 %v1715, %v1839
    %v1841 = vmul.f32 %v1716, %v1839
    %v1842 = vadd.f32 %v1837, %v1840
    %v1843 = vadd.f32 %v1838, %v1841
    %v1844 = vstv %s315
    %v1845 = vmul.f32 %v1725, %v1844
    %v1846 = vmul.f32 %v1726, %v1844
    %v1847 = vadd.f32 %v1842, %v1845
    %v1848 = vadd.f32 %v1843, %v1846
    %v1849 = vstv %s325
    %v1850 = vmul.f32 %v1735, %v1849
    %v1851 = vmul.f32 %v1736, %v1849
    %v1852 = vadd.f32 %v1847, %v1850
    %v1853 = vadd.f32 %v1848, %v1851
    %v1854 = vstv %s335
    %v1855 = vmul.f32 %v1745, %v1854
    %v1856 = vmul.f32 %v1746, %v1854
    %v1857 = vadd.f32 %v1852, %v1855
    %v1858 = vadd.f32 %v1853, %v1856
    %v1859 = vstv %s345
    %v1860 = vmul.f32 %v1755, %v1859
    %v1861 = vmul.f32 %v1756, %v1859
    %v1862 = vadd.f32 %v1857, %v1860
    %v1863 = vadd.f32 %v1858, %v1861
    %v1864 = vstv %s355
    %v1865 = vmul.f32 %v1765, %v1864
    %v1866 = vmul.f32 %v1766, %v1864
    %v1867 = vadd.f32 %v1862, %v1865
    %v1868 = vadd.f32 %v1863, %v1866
    %v1869 = vstv %s266
    %v1870 = vmul.f32 %v1675, %v1869
    %v1871 = vmul.f32 %v1676, %v1869
    %v1872 = vstv %s366
    %v1873 = vadd.f32 %v1870, %v1872
    %v1874 = vadd.f32 %v1871, %v1872
    %v1875 = vstv %s276
    %v1876 = vmul.f32 %v1685, %v1875
    %v1877 = vmul.f32 %v1686, %v1875
    %v1878 = vadd.f32 %v1873, %v1876
    %v1879 = vadd.f32 %v1874, %v1877
    %v1880 = vstv %s286
    %v1881 = vmul.f32 %v1695, %v1880
    %v1882 = vmul.f32 %v1696, %v1880
    %v1883 = vadd.f32 %v1878, %v1881
    %v1884 = vadd.f32 %v1879, %v1882
    %v1885 = vstv %s296
    %v1886 = vmul.f32 %v1705, %v1885
    %v1887 = vmul.f32 %v1706, %v1885
    %v1888 = vadd.f32 %v1883, %v1886
    %v1889 = vadd.f32 %v1884, %v1887
    %v1890 = vstv %s306
    %v1891 = vmul.f32 %v1715, %v1890
    %v1892 = vmul.f32 %v1716, %v1890
    %v1893 = vadd.f32 %v1888, %v1891
    %v1894 = vadd.f32 %v1889, %v1892
    %v1895 = vstv %s316
    %v1896 = vmul.f32 %v1725, %v1895
    %v1897 = vmul.f32 %v1726, %v1895
    %v1898 = vadd.f32 %v1893, %v1896
    %v1899 = vadd.f32 %v1894, %v1897
    %v1900 = vstv %s326
    %v1901 = vmul.f32 %v1735, %v1900
    %v1902 = vmul.f32 %v1736, %v1900
    %v1903 = vadd.f32 %v1898, %v1901
    %v1904 = vadd.f32 %v1899, %v1902
    %v1905 = vstv %s336
    %v1906 = vmul.f32 %v1745, %v1905
    %v1907 = vmul.f32 %v1746, %v1905
    %v1908 = vadd.f32 %v1903, %v1906
    %v1909 = vadd.f32 %v1904, %v1907
    %v1910 = vstv %s346
    %v1911 = vmul.f32 %v1755, %v1910
    %v1912 = vmul.f32 %v1756, %v1910
    %v1913 = vadd.f32 %v1908, %v1911
    %v1914 = vadd.f32 %v1909, %v1912
    %v1915 = vstv %s356
    %v1916 = vmul.f32 %v1765, %v1915
    %v1917 = vmul.f32 %v1766, %v1915
    %v1918 = vadd.f32 %v1913, %v1916
    %v1919 = vadd.f32 %v1914, %v1917
    %v1920 = vstv %s267
    %v1921 = vmul.f32 %v1675, %v1920
    %v1922 = vmul.f32 %v1676, %v1920
    %v1923 = vstv %s367
    %v1924 = vadd.f32 %v1921, %v1923
    %v1925 = vadd.f32 %v1922, %v1923
    %v1926 = vstv %s277
    %v1927 = vmul.f32 %v1685, %v1926
    %v1928 = vmul.f32 %v1686, %v1926
    %v1929 = vadd.f32 %v1924, %v1927
    %v1930 = vadd.f32 %v1925, %v1928
    %v1931 = vstv %s287
    %v1932 = vmul.f32 %v1695, %v1931
    %v1933 = vmul.f32 %v1696, %v1931
    %v1934 = vadd.f32 %v1929, %v1932
    %v1935 = vadd.f32 %v1930, %v1933
    %v1936 = vstv %s297
    %v1937 = vmul.f32 %v1705, %v1936
    %v1938 = vmul.f32 %v1706, %v1936
    %v1939 = vadd.f32 %v1934, %v1937
    %v1940 = vadd.f32 %v1935, %v1938
    %v1941 = vstv %s307
    %v1942 = vmul.f32 %v1715, %v1941
    %v1943 = vmul.f32 %v1716, %v1941
    %v1944 = vadd.f32 %v1939, %v1942
    %v1945 = vadd.f32 %v1940, %v1943
    %v1946 = vstv %s317
    %v1947 = vmul.f32 %v1725, %v1946
    %v1948 = vmul.f32 %v1726, %v1946
    %v1949 = vadd.f32 %v1944, %v1947
    %v1950 = vadd.f32 %v1945, %v1948
    %v1951 = vstv %s327
    %v1952 = vmul.f32 %v1735, %v1951
    %v1953 = vmul.f32 %v1736, %v1951
    %v1954 = vadd.f32 %v1949, %v1952
    %v1955 = vadd.f32 %v1950, %v1953
    %v1956 = vstv %s337
    %v1957 = vmul.f32 %v1745, %v1956
    %v1958 = vmul.f32 %v1746, %v1956
    %v1959 = vadd.f32 %v1954, %v1957
    %v1960 = vadd.f32 %v1955, %v1958
    %v1961 = vstv %s347
    %v1962 = vmul.f32 %v1755, %v1961
    %v1963 = vmul.f32 %v1756, %v1961
    %v1964 = vadd.f32 %v1959, %v1962
    %v1965 = vadd.f32 %v1960, %v1963
    %v1966 = vstv %s357
    %v1967 = vmul.f32 %v1765, %v1966
    %v1968 = vmul.f32 %v1766, %v1966
    %v1969 = vadd.f32 %v1964, %v1967
    %v1970 = vadd.f32 %v1965, %v1968
    %v1971 = vstv %s268
    %v1972 = vmul.f32 %v1675, %v1971
    %v1973 = vmul.f32 %v1676, %v1971
    %v1974 = vstv %s368
    %v1975 = vadd.f32 %v1972, %v1974
    %v1976 = vadd.f32 %v1973, %v1974
    %v1977 = vstv %s278
    %v1978 = vmul.f32 %v1685, %v1977
    %v1979 = vmul.f32 %v1686, %v1977
    %v1980 = vadd.f32 %v1975, %v1978
    %v1981 = vadd.f32 %v1976, %v1979
    %v1982 = vstv %s288
    %v1983 = vmul.f32 %v1695, %v1982
    %v1984 = vmul.f32 %v1696, %v1982
    %v1985 = vadd.f32 %v1980, %v1983
    %v1986 = vadd.f32 %v1981, %v1984
    %v1987 = vstv %s298
    %v1988 = vmul.f32 %v1705, %v1987
    %v1989 = vmul.f32 %v1706, %v1987
    %v1990 = vadd.f32 %v1985, %v1988
    %v1991 = vadd.f32 %v1986, %v1989
    %v1992 = vstv %s308
    %v1993 = vmul.f32 %v1715, %v1992
    %v1994 = vmul.f32 %v1716, %v1992
    %v1995 = vadd.f32 %v1990, %v1993
    %v1996 = vadd.f32 %v1991, %v1994
    %v1997 = vstv %s318
    %v1998 = vmul.f32 %v1725, %v1997
    %v1999 = vmul.f32 %v1726, %v1997
    %v2000 = vadd.f32 %v1995, %v1998
    %v2001 = vadd.f32 %v1996, %v1999
    %v2002 = vstv %s328
    %v2003 = vmul.f32 %v1735, %v2002
    %v2004 = vmul.f32 %v1736, %v2002
    %v2005 = vadd.f32 %v2000, %v2003
    %v2006 = vadd.f32 %v2001, %v2004
    %v2007 = vstv %s338
    %v2008 = vmul.f32 %v1745, %v2007
    %v2009 = vmul.f32 %v1746, %v2007
    %v2010 = vadd.f32 %v2005, %v2008
    %v2011 = vadd.f32 %v2006, %v2009
    %v2012 = vstv %s348
    %v2013 = vmul.f32 %v1755, %v2012
    %v2014 = vmul.f32 %v1756, %v2012
    %v2015 = vadd.f32 %v2010, %v2013
    %v2016 = vadd.f32 %v2011, %v2014
    %v2017 = vstv %s358
    %v2018 = vmul.f32 %v1765, %v2017
    %v2019 = vmul.f32 %v1766, %v2017
    %v2020 = vadd.f32 %v2015, %v2018
    %v2021 = vadd.f32 %v2016, %v2019
    %v2022 = vstv %s269
    %v2023 = vmul.f32 %v1675, %v2022
    %v2024 = vmul.f32 %v1676, %v2022
    %v2025 = vstv %s369
    %v2026 = vadd.f32 %v2023, %v2025
    %v2027 = vadd.f32 %v2024, %v2025
    %v2028 = vstv %s279
    %v2029 = vmul.f32 %v1685, %v2028
    %v2030 = vmul.f32 %v1686, %v2028
    %v2031 = vadd.f32 %v2026, %v2029
    %v2032 = vadd.f32 %v2027, %v2030
    %v2033 = vstv %s289
    %v2034 = vmul.f32 %v1695, %v2033
    %v2035 = vmul.f32 %v1696, %v2033
    %v2036 = vadd.f32 %v2031, %v2034
    %v2037 = vadd.f32 %v2032, %v2035
    %v2038 = vstv %s299
    %v2039 = vmul.f32 %v1705, %v2038
    %v2040 = vmul.f32 %v1706, %v2038
    %v2041 = vadd.f32 %v2036, %v2039
    %v2042 = vadd.f32 %v2037, %v2040
    %v2043 = vstv %s309
    %v2044 = vmul.f32 %v1715, %v2043
    %v2045 = vmul.f32 %v1716, %v2043
    %v2046 = vadd.f32 %v2041, %v2044
    %v2047 = vadd.f32 %v2042, %v2045
    %v2048 = vstv %s319
    %v2049 = vmul.f32 %v1725, %v2048
    %v2050 = vmul.f32 %v1726, %v2048
    %v2051 = vadd.f32 %v2046, %v2049
    %v2052 = vadd.f32 %v2047, %v2050
    %v2053 = vstv %s329
    %v2054 = vmul.f32 %v1735, %v2053
    %v2055 = vmul.f32 %v1736, %v2053
    %v2056 = vadd.f32 %v2051, %v2054
    %v2057 = vadd.f32 %v2052, %v2055
    %v2058 = vstv %s339
    %v2059 = vmul.f32 %v1745, %v2058
    %v2060 = vmul.f32 %v1746, %v2058
    %v2061 = vadd.f32 %v2056, %v2059
    %v2062 = vadd.f32 %v2057, %v2060
    %v2063 = vstv %s349
    %v2064 = vmul.f32 %v1755, %v2063
    %v2065 = vmul.f32 %v1756, %v2063
    %v2066 = vadd.f32 %v2061, %v2064
    %v2067 = vadd.f32 %v2062, %v2065
    %v2068 = vstv %s359
    %v2069 = vmul.f32 %v1765, %v2068
    %v2070 = vmul.f32 %v1766, %v2068
    %v2071 = vadd.f32 %v2066, %v2069
    %v2072 = vadd.f32 %v2067, %v2070
    %v2073 = vstv %s270
    %v2074 = vmul.f32 %v1675, %v2073
    %v2075 = vmul.f32 %v1676, %v2073
    %v2076 = vstv %s370
    %v2077 = vadd.f32 %v2074, %v2076
    %v2078 = vadd.f32 %v2075, %v2076
    %v2079 = vstv %s280
    %v2080 = vmul.f32 %v1685, %v2079
    %v2081 = vmul.f32 %v1686, %v2079
    %v2082 = vadd.f32 %v2077, %v2080
    %v2083 = vadd.f32 %v2078, %v2081
    %v2084 = vstv %s290
    %v2085 = vmul.f32 %v1695, %v2084
    %v2086 = vmul.f32 %v1696, %v2084
    %v2087 = vadd.f32 %v2082, %v2085
    %v2088 = vadd.f32 %v2083, %v2086
    %v2089 = vstv %s300
    %v2090 = vmul.f32 %v1705, %v2089
    %v2091 = vmul.f32 %v1706, %v2089
    %v2092 = vadd.f32 %v2087, %v2090
    %v2093 = vadd.f32 %v2088, %v2091
    %v2094 = vstv %s310
    %v2095 = vmul.f32 %v1715, %v2094
    %v2096 = vmul.f32 %v1716, %v2094
    %v2097 = vadd.f32 %v2092, %v2095
    %v2098 = vadd.f32 %v2093, %v2096
    %v2099 = vstv %s320
    %v2100 = vmul.f32 %v1725, %v2099
    %v2101 = vmul.f32 %v1726, %v2099
    %v2102 = vadd.f32 %v2097, %v2100
    %v2103 = vadd.f32 %v2098, %v2101
    %v2104 = vstv %s330
    %v2105 = vmul.f32 %v1735, %v2104
    %v2106 = vmul.f32 %v1736, %v2104
    %v2107 = vadd.f32 %v2102, %v2105
    %v2108 = vadd.f32 %v2103, %v2106
    %v2109 = vstv %s340
    %v2110 = vmul.f32 %v1745, %v2109
    %v2111 = vmul.f32 %v1746, %v2109
    %v2112 = vadd.f32 %v2107, %v2110
    %v2113 = vadd.f32 %v2108, %v2111
    %v2114 = vstv %s350
    %v2115 = vmul.f32 %v1755, %v2114
    %v2116 = vmul.f32 %v1756, %v2114
    %v2117 = vadd.f32 %v2112, %v2115
    %v2118 = vadd.f32 %v2113, %v2116
    %v2119 = vstv %s360
    %v2120 = vmul.f32 %v1765, %v2119
    %v2121 = vmul.f32 %v1766, %v2119
    %v2122 = vadd.f32 %v2117, %v2120
    %v2123 = vadd.f32 %v2118, %v2121
    %v2124 = vstv %s271
    %v2125 = vmul.f32 %v1675, %v2124
    %v2126 = vmul.f32 %v1676, %v2124
    %v2127 = vstv %s371
    %v2128 = vadd.f32 %v2125, %v2127
    %v2129 = vadd.f32 %v2126, %v2127
    %v2130 = vstv %s281
    %v2131 = vmul.f32 %v1685, %v2130
    %v2132 = vmul.f32 %v1686, %v2130
    %v2133 = vadd.f32 %v2128, %v2131
    %v2134 = vadd.f32 %v2129, %v2132
    %v2135 = vstv %s291
    %v2136 = vmul.f32 %v1695, %v2135
    %v2137 = vmul.f32 %v1696, %v2135
    %v2138 = vadd.f32 %v2133, %v2136
    %v2139 = vadd.f32 %v2134, %v2137
    %v2140 = vstv %s301
    %v2141 = vmul.f32 %v1705, %v2140
    %v2142 = vmul.f32 %v1706, %v2140
    %v2143 = vadd.f32 %v2138, %v2141
    %v2144 = vadd.f32 %v2139, %v2142
    %v2145 = vstv %s311
    %v2146 = vmul.f32 %v1715, %v2145
    %v2147 = vmul.f32 %v1716, %v2145
    %v2148 = vadd.f32 %v2143, %v2146
    %v2149 = vadd.f32 %v2144, %v2147
    %v2150 = vstv %s321
    %v2151 = vmul.f32 %v1725, %v2150
    %v2152 = vmul.f32 %v1726, %v2150
    %v2153 = vadd.f32 %v2148, %v2151
    %v2154 = vadd.f32 %v2149, %v2152
    %v2155 = vstv %s331
    %v2156 = vmul.f32 %v1735, %v2155
    %v2157 = vmul.f32 %v1736, %v2155
    %v2158 = vadd.f32 %v2153, %v2156
    %v2159 = vadd.f32 %v2154, %v2157
    %v2160 = vstv %s341
    %v2161 = vmul.f32 %v1745, %v2160
    %v2162 = vmul.f32 %v1746, %v2160
    %v2163 = vadd.f32 %v2158, %v2161
    %v2164 = vadd.f32 %v2159, %v2162
    %v2165 = vstv %s351
    %v2166 = vmul.f32 %v1755, %v2165
    %v2167 = vmul.f32 %v1756, %v2165
    %v2168 = vadd.f32 %v2163, %v2166
    %v2169 = vadd.f32 %v2164, %v2167
    %v2170 = vstv %s361
    %v2171 = vmul.f32 %v1765, %v2170
    %v2172 = vmul.f32 %v1766, %v2170
    %v2173 = vadd.f32 %v2168, %v2171
    %v2174 = vadd.f32 %v2169, %v2172
    %v2175 = vstv %s272
    %v2176 = vmul.f32 %v1675, %v2175
    %v2177 = vmul.f32 %v1676, %v2175
    %v2178 = vstv %s372
    %v2179 = vadd.f32 %v2176, %v2178
    %v2180 = vadd.f32 %v2177, %v2178
    %v2181 = vstv %s282
    %v2182 = vmul.f32 %v1685, %v2181
    %v2183 = vmul.f32 %v1686, %v2181
    %v2184 = vadd.f32 %v2179, %v2182
    %v2185 = vadd.f32 %v2180, %v2183
    %v2186 = vstv %s292
    %v2187 = vmul.f32 %v1695, %v2186
    %v2188 = vmul.f32 %v1696, %v2186
    %v2189 = vadd.f32 %v2184, %v2187
    %v2190 = vadd.f32 %v2185, %v2188
    %v2191 = vstv %s302
    %v2192 = vmul.f32 %v1705, %v2191
    %v2193 = vmul.f32 %v1706, %v2191
    %v2194 = vadd.f32 %v2189, %v2192
    %v2195 = vadd.f32 %v2190, %v2193
    %v2196 = vstv %s312
    %v2197 = vmul.f32 %v1715, %v2196
    %v2198 = vmul.f32 %v1716, %v2196
    %v2199 = vadd.f32 %v2194, %v2197
    %v2200 = vadd.f32 %v2195, %v2198
    %v2201 = vstv %s322
    %v2202 = vmul.f32 %v1725, %v2201
    %v2203 = vmul.f32 %v1726, %v2201
    %v2204 = vadd.f32 %v2199, %v2202
    %v2205 = vadd.f32 %v2200, %v2203
    %v2206 = vstv %s332
    %v2207 = vmul.f32 %v1735, %v2206
    %v2208 = vmul.f32 %v1736, %v2206
    %v2209 = vadd.f32 %v2204, %v2207
    %v2210 = vadd.f32 %v2205, %v2208
    %v2211 = vstv %s342
    %v2212 = vmul.f32 %v1745, %v2211
    %v2213 = vmul.f32 %v1746, %v2211
    %v2214 = vadd.f32 %v2209, %v2212
    %v2215 = vadd.f32 %v2210, %v2213
    %v2216 = vstv %s352
    %v2217 = vmul.f32 %v1755, %v2216
    %v2218 = vmul.f32 %v1756, %v2216
    %v2219 = vadd.f32 %v2214, %v2217
    %v2220 = vadd.f32 %v2215, %v2218
    %v2221 = vstv %s362
    %v2222 = vmul.f32 %v1765, %v2221
    %v2223 = vmul.f32 %v1766, %v2221
    %v2224 = vadd.f32 %v2219, %v2222
    %v2225 = vadd.f32 %v2220, %v2223
    %v2226 = vstv %s273
    %v2227 = vmul.f32 %v1675, %v2226
    %v2228 = vmul.f32 %v1676, %v2226
    %v2229 = vstv %s373
    %v2230 = vadd.f32 %v2227, %v2229
    %v2231 = vadd.f32 %v2228, %v2229
    %v2232 = vstv %s283
    %v2233 = vmul.f32 %v1685, %v2232
    %v2234 = vmul.f32 %v1686, %v2232
    %v2235 = vadd.f32 %v2230, %v2233
    %v2236 = vadd.f32 %v2231, %v2234
    %v2237 = vstv %s293
    %v2238 = vmul.f32 %v1695, %v2237
    %v2239 = vmul.f32 %v1696, %v2237
    %v2240 = vadd.f32 %v2235, %v2238
    %v2241 = vadd.f32 %v2236, %v2239
    %v2242 = vstv %s303
    %v2243 = vmul.f32 %v1705, %v2242
    %v2244 = vmul.f32 %v1706, %v2242
    %v2245 = vadd.f32 %v2240, %v2243
    %v2246 = vadd.f32 %v2241, %v2244
    %v2247 = vstv %s313
    %v2248 = vmul.f32 %v1715, %v2247
    %v2249 = vmul.f32 %v1716, %v2247
    %v2250 = vadd.f32 %v2245, %v2248
    %v2251 = vadd.f32 %v2246, %v2249
    %v2252 = vstv %s323
    %v2253 = vmul.f32 %v1725, %v2252
    %v2254 = vmul.f32 %v1726, %v2252
    %v2255 = vadd.f32 %v2250, %v2253
    %v2256 = vadd.f32 %v2251, %v2254
    %v2257 = vstv %s333
    %v2258 = vmul.f32 %v1735, %v2257
    %v2259 = vmul.f32 %v1736, %v2257
    %v2260 = vadd.f32 %v2255, %v2258
    %v2261 = vadd.f32 %v2256, %v2259
    %v2262 = vstv %s343
    %v2263 = vmul.f32 %v1745, %v2262
    %v2264 = vmul.f32 %v1746, %v2262
    %v2265 = vadd.f32 %v2260, %v2263
    %v2266 = vadd.f32 %v2261, %v2264
    %v2267 = vstv %s353
    %v2268 = vmul.f32 %v1755, %v2267
    %v2269 = vmul.f32 %v1756, %v2267
    %v2270 = vadd.f32 %v2265, %v2268
    %v2271 = vadd.f32 %v2266, %v2269
    %v2272 = vstv %s363
    %v2273 = vmul.f32 %v1765, %v2272
    %v2274 = vmul.f32 %v1766, %v2272
    %v2275 = vadd.f32 %v2270, %v2273
    %v2276 = vadd.f32 %v2271, %v2274
    %vm2277 = vcmp.gt.f32.partialorder %v1816, 0.0
    %vm2278 = vcmp.gt.f32.partialorder %v1817, 0.0
    %v2279 = vmul.f32 %v1816, 1.442695
    %v2280 = vpow.pop %v2279
    %v2281 = vmul.f32 %v1817, 1.442695
    %v2282 = vpow.pop %v2281
    %v2283 = vsub.f32 %v2280, 1.0
    %v2284 = vsub.f32 %v2282, 1.0
    %v2285 = vsel %vm2277, %v1816, %v2283
    %v2286 = vsel %vm2278, %v1817, %v2284
    %vm2287 = vcmp.gt.f32.partialorder %v1867, 0.0
    %vm2288 = vcmp.gt.f32.partialorder %v1868, 0.0
    %v2289 = vmul.f32 %v1867, 1.442695
    %v2290 = vpow.pop %v2289
    %v2291 = vmul.f32 %v1868, 1.442695
    %v2292 = vpow.pop %v2291
    %v2293 = vsub.f32 %v2290, 1.0
    %v2294 = vsub.f32 %v2292, 1.0
    %v2295 = vsel %vm2287, %v1867, %v2293
    %v2296 = vsel %vm2288, %v1868, %v2294
    %vm2297 = vcmp.gt.f32.partialorder %v1918, 0.0
    %vm2298 = vcmp.gt.f32.partialorder %v1919, 0.0
    %v2299 = vmul.f32 %v1918, 1.442695
    %v2300 = vpow.pop %v2299
    %v2301 = vmul.f32 %v1919, 1.442695
    %v2302 = vpow.pop %v2301
    %v2303 = vsub.f32 %v2300, 1.0
    %v2304 = vsub.f32 %v2302, 1.0
    %v2305 = vsel %vm2297, %v1918, %v2303
    %v2306 = vsel %vm2298, %v1919, %v2304
    %vm2307 = vcmp.gt.f32.partialorder %v1969, 0.0
    %vm2308 = vcmp.gt.f32.partialorder %v1970, 0.0
    %v2309 = vmul.f32 %v1969, 1.442695
    %v2310 = vpow.pop %v2309
    %v2311 = vmul.f32 %v1970, 1.442695
    %v2312 = vpow.pop %v2311
    %v2313 = vsub.f32 %v2310, 1.0
    %v2314 = vsub.f32 %v2312, 1.0
    %v2315 = vsel %vm2307, %v1969, %v2313
    %v2316 = vsel %vm2308, %v1970, %v2314
    %vm2317 = vcmp.gt.f32.partialorder %v2020, 0.0
    %vm2318 = vcmp.gt.f32.partialorder %v2021, 0.0
    %v2319 = vmul.f32 %v2020, 1.442695
    %v2320 = vpow.pop %v2319
    %v2321 = vmul.f32 %v2021, 1.442695
    %v2322 = vpow.pop %v2321
    %v2323 = vsub.f32 %v2320, 1.0
    %v2324 = vsub.f32 %v2322, 1.0
    %v2325 = vsel %vm2317, %v2020, %v2323
    %v2326 = vsel %vm2318, %v2021, %v2324
    %vm2327 = vcmp.gt.f32.partialorder %v2071, 0.0
    %vm2328 = vcmp.gt.f32.partialorder %v2072, 0.0
    %v2329 = vmul.f32 %v2071, 1.442695
    %v2330 = vpow.pop %v2329
    %v2331 = vmul.f32 %v2072, 1.442695
    %v2332 = vpow.pop %v2331
    %v2333 = vsub.f32 %v2330, 1.0
    %v2334 = vsub.f32 %v2332, 1.0
    %v2335 = vsel %vm2327, %v2071, %v2333
    %v2336 = vsel %vm2328, %v2072, %v2334
    %vm2337 = vcmp.gt.f32.partialorder %v2122, 0.0
    %vm2338 = vcmp.gt.f32.partialorder %v2123, 0.0
    %v2339 = vmul.f32 %v2122, 1.442695
    %v2340 = vpow.pop %v2339
    %v2341 = vmul.f32 %v2123, 1.442695
    %v2342 = vpow.pop %v2341
    %v2343 = vsub.f32 %v2340, 1.0
    %v2344 = vsub.f32 %v2342, 1.0
    %v2345 = vsel %vm2337, %v2122, %v2343
    %v2346 = vsel %vm2338, %v2123, %v2344
    %vm2347 = vcmp.gt.f32.partialorder %v2173, 0.0
    %vm2348 = vcmp.gt.f32.partialorder %v2174, 0.0
    %v2349 = vmul.f32 %v2173, 1.442695
    %v2350 = vpow.pop %v2349
    %v2351 = vmul.f32 %v2174, 1.442695
    %v2352 = vpow.pop %v2351
    %v2353 = vsub.f32 %v2350, 1.0
    %v2354 = vsub.f32 %v2352, 1.0
    %v2355 = vsel %vm2347, %v2173, %v2353
    %v2356 = vsel %vm2348, %v2174, %v2354
    %vm2357 = vcmp.gt.f32.partialorder %v2224, 0.0
    %vm2358 = vcmp.gt.f32.partialorder %v2225, 0.0
    %v2359 = vmul.f32 %v2224, 1.442695
    %v2360 = vpow.pop %v2359
    %v2361 = vmul.f32 %v2225, 1.442695
    %v2362 = vpow.pop %v2361
    %v2363 = vsub.f32 %v2360, 1.0
    %v2364 = vsub.f32 %v2362, 1.0
    %v2365 = vsel %vm2357, %v2224, %v2363
    %v2366 = vsel %vm2358, %v2225, %v2364
    %vm2367 = vcmp.gt.f32.partialorder %v2275, 0.0
    %vm2368 = vcmp.gt.f32.partialorder %v2276, 0.0
    %v2369 = vmul.f32 %v2275, 1.442695
    %v2370 = vpow.pop %v2369
    %v2371 = vmul.f32 %v2276, 1.442695
    %v2372 = vpow.pop %v2371
    %v2373 = vsub.f32 %v2370, 1.0
    %v2374 = vsub.f32 %v2372, 1.0
    %v2375 = vsel %vm2367, %v2275, %v2373
    %v2376 = vsel %vm2368, %v2276, %v2374
    %v2377 = vstv %s374
    %v2378 = vmul.f32 %v2285, %v2377
    %v2379 = vmul.f32 %v2286, %v2377
    %v2380 = vstv %s384
    %v2381 = vadd.f32 %v2378, %v2380
    %v2382 = vadd.f32 %v2379, %v2380
    %v2383 = vstv %s375
    %v2384 = vmul.f32 %v2295, %v2383
    %v2385 = vmul.f32 %v2296, %v2383
    %v2386 = vadd.f32 %v2381, %v2384
    %v2387 = vadd.f32 %v2382, %v2385
    %v2388 = vstv %s376
    %v2389 = vmul.f32 %v2305, %v2388
    %v2390 = vmul.f32 %v2306, %v2388
    %v2391 = vadd.f32 %v2386, %v2389
    %v2392 = vadd.f32 %v2387, %v2390
    %v2393 = vstv %s377
    %v2394 = vmul.f32 %v2315, %v2393
    %v2395 = vmul.f32 %v2316, %v2393
    %v2396 = vadd.f32 %v2391, %v2394
    %v2397 = vadd.f32 %v2392, %v2395
    %v2398 = vstv %s378
    %v2399 = vmul.f32 %v2325, %v2398
    %v2400 = vmul.f32 %v2326, %v2398
    %v2401 = vadd.f32 %v2396, %v2399
    %v2402 = vadd.f32 %v2397, %v2400
    %v2403 = vstv %s379
    %v2404 = vmul.f32 %v2335, %v2403
    %v2405 = vmul.f32 %v2336, %v2403
    %v2406 = vadd.f32 %v2401, %v2404
    %v2407 = vadd.f32 %v2402, %v2405
    %v2408 = vstv %s380
    %v2409 = vmul.f32 %v2345, %v2408
    %v2410 = vmul.f32 %v2346, %v2408
    %v2411 = vadd.f32 %v2406, %v2409
    %v2412 = vadd.f32 %v2407, %v2410
    %v2413 = vstv %s381
    %v2414 = vmul.f32 %v2355, %v2413
    %v2415 = vmul.f32 %v2356, %v2413
    %v2416 = vadd.f32 %v2411, %v2414
    %v2417 = vadd.f32 %v2412, %v2415
    %v2418 = vstv %s382
    %v2419 = vmul.f32 %v2365, %v2418
    %v2420 = vmul.f32 %v2366, %v2418
    %v2421 = vadd.f32 %v2416, %v2419
    %v2422 = vadd.f32 %v2417, %v2420
    %v2423 = vstv %s383
    %v2424 = vmul.f32 %v2375, %v2423
    %v2425 = vmul.f32 %v2376, %v2423
    %v2426 = vadd.f32 %v2421, %v2424
    %v2427 = vadd.f32 %v2422, %v2425
    %2428 = vst [vmem:[%s2] sm:$0xff] %v2426
    %2429 = vst [vmem:[%s2 + $0x8] sm:$0xff] %v2427
    // Predicated region
    $region14: #{mean_transform.1} parent=1 // pred_check
      _
    $region15: #{mean_transform.1} parent=1 // pred_check_branch
      %2431 = sbr.rel (0) target = $region17
    $region16: #{mean_transform.1} parent=1 // pred_region
      _
    $region17: #{mean_transform.1} parent=1 // pred_fallthru
      _
    // Predicated region
    $region18: #{mean_transform.1} parent=1 // pred_check
      _
    $region19: #{mean_transform.1} parent=1 // pred_check_branch
      %2433 = sbr.rel (0) target = $region21
    $region20: #{mean_transform.1} parent=1 // pred_region
      _
    $region21: #{mean_transform.1} parent=1 // pred_fallthru
      _
    %2434 = vsyncpa [#allocation3], 1

</llo_original>
